<compile_context>
chip_gen: v7x
topology: tpu7x:2x2x1
jax: 0.10.0
libtpu: 0.0.40
codegen_flags: <defaults>
</compile_context>

<pallas_src>
import functools

import jax
import jax.numpy as jnp
from jax import lax
from jax.experimental import pallas as pl
from jax.experimental.pallas import tpu as pltpu

EPS = 1e-5        # SwitchNorm2d default eps
SLOPE = 0.01      # nn.LeakyReLU default negative_slope


def _vmem_limit_bytes():
    """Per-generation scoped-VMEM budget (review: don't hard-code a v7x-sized cap
    on v5e/v6e). 3/4 of physical: ~96 MiB on v5e/v6e, ~48 MiB on v7x."""
    try:
        return int(pltpu.get_tpu_info().vmem_capacity_bytes) * 3 // 4
    except Exception:
        return 48 * 1024 * 1024


_VMEM_LIMIT = _vmem_limit_bytes()


def _leaky(x):
    return jnp.where(x > 0, x, SLOPE * x)


def _subrow_factor(c, hw):
    """Split factor k so (C, HW) is viewed as (C*k, HW/k): fills the 8 sublanes
    of each (8,128) tile when C < 8 (fixes the C=4 sublane underfill)."""
    k = 1
    while c * k < 8 and hw % (2 * k) == 0 and (hw // (2 * k)) % 128 == 0:
        k *= 2
    return k


def _lane_tile(length, sublanes):
    """Largest lane tile that is a multiple of 128, divides `length`, and keeps a
    block at ~1/16 of the VMEM budget (2048-lane tiles were overhead-bound)."""
    target = max(128, (_VMEM_LIMIT // 16) // (max(sublanes, 8) * 4))
    if length <= target:
        return length
    t = (target // 128) * 128
    while t >= 128:
        if length % t == 0:
            return t
        t -= 128
    # TODO(synk): mask a ragged final tile instead of falling back to the full
    # length (can overshoot VMEM for awkward spatial sizes).
    return length


# ----------------------------- Pallas kernels ------------------------------ #

def _stats_kernel(x_ref, sum_ref, ssq_ref, acc_s, acc_q):
    """SwitchNorm pass 1: per-(n, sub-row) sum / sum-of-squares.

    Elementwise accumulation into VMEM scratch per lane tile; the cross-lane
    reduce and the tiny store happen once, in the last-tile epilogue."""
    @pl.when(pl.program_id(1) == 0)
    def _():
        acc_s[...] = jnp.zeros_like(acc_s)
        acc_q[...] = jnp.zeros_like(acc_q)

    x = x_ref[0]                                             # (Csub, TL)
    acc_s[...] += x
    acc_q[...] += x * x

    @pl.when(pl.program_id(1) == pl.num_programs(1) - 1)
    def _():
        sum_ref[...] = jnp.sum(acc_s[...], axis=-1)[None, None]
        ssq_ref[...] = jnp.sum(acc_q[...], axis=-1)[None, None]


def _conv3x3_replpad(x, w_ref, b, W):
    """ReplicationPad2d(1) + Conv2d(3x3) on the compact flat layout.

    x:     (Cin, H*W)      input (already normalized / activated if needed)
    w_ref: (9, Cout, Cin)  Ref, tap index k = kh*3 + kw
    b:     (Cout, 1)
    Padding is done in-register: 2 lane rolls build the column taps (with
    edge-clamp selects), 9 small MXU dots accumulate into 3 per-kernel-row
    partial sums, then 2 lane rolls of those partials build the row taps.
    No padded HBM copy, compact output, 4 rolls instead of 9 misaligned slices.
    """
    cin, hw = x.shape
    idx = lax.broadcasted_iota(jnp.int32, (cin, hw), 1)
    col = idx % W
    x_m = jnp.where(col == 0, x, pltpu.roll(x, 1, axis=1))            # x[., clamp(w-1)]
    x_p = jnp.where(col == W - 1, x, pltpu.roll(x, hw - 1, axis=1))   # x[., clamp(w+1)]
    cols = (x_m, x, x_p)

    z = []                                                   # per-kernel-row partials
    for kh in range(3):
        acc = None
        for kw in range(3):
            part = jnp.dot(w_ref[kh * 3 + kw], cols[kw],
                           preferred_element_type=jnp.float32)
            acc = part if acc is None else acc + part
        z.append(acc)

    cout = z[0].shape[0]
    oidx = lax.broadcasted_iota(jnp.int32, (cout, hw), 1)
    first_row = oidx < W
    last_row = oidx >= hw - W
    y = z[1]
    y = y + jnp.where(first_row, z[0], pltpu.roll(z[0], W, axis=1))       # row h-1 (clamped)
    y = y + jnp.where(last_row, z[2], pltpu.roll(z[2], hw - W, axis=1))   # row h+1 (clamped)
    return y + b


def _conv3x3_kernel(x_ref, w_ref, b_ref, o_ref, *, W):
    """Transform branch: ReplicationPad(1) + Conv3x3."""
    o_ref[...] = _conv3x3_replpad(x_ref[0], w_ref, b_ref[...], W)[None]


def _conv3x3_sn_kernel(x_ref, sc_ref, sh_ref, w_ref, b_ref,
                       o_ref, sum_ref, ssq_ref, *, W):
    """Residual branch: SwitchNorm affine + LeakyReLU -> pad+Conv3x3 -> stats
    (sum / sum-of-squares per (n, cout)) for the *next* SwitchNorm, one pass."""
    xn = _leaky(x_ref[0] * sc_ref[0] + sh_ref[0])            # sc/sh: (Cin, 1)
    y = _conv3x3_replpad(xn, w_ref, b_ref[...], W)
    o_ref[...] = y[None]
    sum_ref[...] = jnp.sum(y, axis=-1)[None, None]
    ssq_ref[...] = jnp.sum(y * y, axis=-1)[None, None]


def _conv1x1_leaky_kernel(x_ref, w_ref, b_ref, o_ref):
    """Transform branch: 1x1 conv + fused trailing LeakyReLU (sub-row layout)."""
    y = jnp.dot(w_ref[...], x_ref[0], preferred_element_type=jnp.float32) + b_ref[...]
    o_ref[...] = _leaky(y)[None]


def _conv1x1_sn_res_kernel(x_ref, sc_ref, sh_ref, w_ref, b_ref, res_ref, o_ref):
    """Residual branch: SwitchNorm affine + LeakyReLU -> 1x1 conv -> +lateral."""
    xn = _leaky(x_ref[0] * sc_ref[0] + sh_ref[0])
    y = jnp.dot(w_ref[...], xn, preferred_element_type=jnp.float32) + b_ref[...]
    o_ref[...] = (y + res_ref[0])[None]


# ------------------------------ JAX wrappers ------------------------------- #

def switchnorm_stats(x3):
    """SwitchNorm pass 1 on (N, C, HW): per-(n, c) sum and sum of squares."""
    n, c, hw = x3.shape
    k = _subrow_factor(c, hw)
    cs, hws = c * k, hw // k
    xs = x3.reshape(n, cs, hws)                              # free reshape
    tl = _lane_tile(hws, cs)
    s, sq = pl.pallas_call(
        _stats_kernel,
        grid=(n, hws // tl),
        in_specs=[pl.BlockSpec((1, cs, tl), lambda i, l: (i, 0, l))],
        out_specs=[pl.BlockSpec((1, 1, cs), lambda i, l: (i, 0, 0)),
                   pl.BlockSpec((1, 1, cs), lambda i, l: (i, 0, 0))],
        out_shape=[jax.ShapeDtypeStruct((n, 1, cs), jnp.float32),
                   jax.ShapeDtypeStruct((n, 1, cs), jnp.float32)],
        scratch_shapes=[pltpu.VMEM((cs, tl), jnp.float32),
                        pltpu.VMEM((cs, tl), jnp.float32)],
        compiler_params=pltpu.CompilerParams(
            dimension_semantics=("parallel", "arbitrary"),
            vmem_limit_bytes=_VMEM_LIMIT),
    )(xs)
    # collapse sub-rows back to channels (tiny, O(N*C) glue)
    s = s[:, 0, :].reshape(n, c, k).sum(-1)
    sq = sq[:, 0, :].reshape(n, c, k).sum(-1)
    return s, sq


def _sn_scale_shift(s, sq, hw, gamma, beta, mean_w, var_w):
    """SwitchNorm mixing (O(N*C) parameter-scale glue): sums -> scale / shift."""
    mean_in = s / hw
    # TODO(synk): E[x^2]-E[x]^2 can cancel for large-mean activations; a shifted
    # two-pass formulation would cost another full read of the activation.
    var_in = (sq / hw - mean_in * mean_in) * (hw / max(hw - 1.0, 1.0))
    temp = var_in + mean_in * mean_in
    mean_ln = jnp.mean(mean_in, axis=1, keepdims=True)
    var_ln = jnp.mean(temp, axis=1, keepdims=True) - mean_ln * mean_ln
    mean_bn = jnp.mean(mean_in, axis=0, keepdims=True)       # training-mode BN stats
    var_bn = jnp.mean(temp, axis=0, keepdims=True) - mean_bn * mean_bn
    mw = jax.nn.softmax(mean_w)
    vw = jax.nn.softmax(var_w)
    mean = mw[0] * mean_in + mw[1] * mean_ln + mw[2] * mean_bn
    var = vw[0] * var_in + vw[1] * var_ln + vw[2] * var_bn
    inv = lax.rsqrt(var + EPS)                                # EUP rsqrt, no VALU divide
    scale = gamma[None, :] * inv
    shift = beta[None, :] - mean * scale
    return scale, shift                                       # (N, C) each


def conv3x3(x, w_oihw, b, *, H, W, scale=None, shift=None, want_stats=False):
    """ReplicationPad2d(1) + Conv2d(3x3) on (N, Cin, H*W) -> (N, Cout, H*W).

    Optional fused prologue (SwitchNorm affine + LeakyReLU) and epilogue
    (sum / sumsq per (n, cout) for the next SwitchNorm)."""
    n, cin, hw = x.shape
    assert hw == H * W
    cout = w_oihw.shape[0]
    w9 = jnp.transpose(w_oihw, (2, 3, 0, 1)).reshape(9, cout, cin)
    bb = b.reshape(cout, 1)

    xspec = pl.BlockSpec((1, cin, hw), lambda i: (i, 0, 0))
    wspec = pl.BlockSpec((9, cout, cin), lambda i: (0, 0, 0))
    bspec = pl.BlockSpec((cout, 1), lambda i: (0, 0))
    ospec = pl.BlockSpec((1, cout, hw), lambda i: (i, 0, 0))
    # TODO(synk): halo row-band tiling (grid (n, H//TH)) so very large images do
    # not need a whole image per grid step and the grid is long enough for both
    # v7x TensorCores when N == 1.
    cp = pltpu.CompilerParams(dimension_semantics=("parallel",),
                              vmem_limit_bytes=_VMEM_LIMIT)

    if scale is None and not want_stats:
        return pl.pallas_call(
            functools.partial(_conv3x3_kernel, W=W),
            grid=(n,),
            in_specs=[xspec, wspec, bspec],
            out_specs=ospec,
            out_shape=jax.ShapeDtypeStruct((n, cout, hw), jnp.float32),
            compiler_params=cp,
        )(x, w9, bb)

    sspec = pl.BlockSpec((1, cin, 1), lambda i: (i, 0, 0))
    stat_spec = pl.BlockSpec((1, 1, cout), lambda i: (i, 0, 0))
    out, s, sq = pl.pallas_call(
        functools.partial(_conv3x3_sn_kernel, W=W),
        grid=(n,),
        in_specs=[xspec, sspec, sspec, wspec, bspec],
        out_specs=[ospec, stat_spec, stat_spec],
        out_shape=[jax.ShapeDtypeStruct((n, cout, hw), jnp.float32),
                   jax.ShapeDtypeStruct((n, 1, cout), jnp.float32),
                   jax.ShapeDtypeStruct((n, 1, cout), jnp.float32)],
        compiler_params=cp,
    )(x, scale.reshape(n, cin, 1), shift.reshape(n, cin, 1), w9, bb)
    return out, s[:, 0, :], sq[:, 0, :]


def conv1x1(x, w_oi11, b, *, scale=None, shift=None, residual=None):
    """1x1 conv on (N, Cin, HW) -> (N, Cout, HW), run in the sublane-filled
    (N, Cin*k, HW/k) view with kron(W, I_k) weights (all reshapes are free).

    residual is None  -> transform branch: conv + fused LeakyReLU.
    residual given    -> residual branch: fused SwitchNorm affine + LeakyReLU
                         prologue, conv, fused residual add."""
    n, cin, hw = x.shape
    cout = w_oi11.shape[0]
    k = _subrow_factor(cin, hw)
    cs, cos, hws = cin * k, cout * k, hw // k
    xs = x.reshape(n, cs, hws)
    wk = jnp.kron(w_oi11.reshape(cout, cin), jnp.eye(k, dtype=jnp.float32))
    bk = jnp.repeat(b, k).reshape(cos, 1)

    tl = _lane_tile(hws, max(cs, cos))
    grid = (n, hws // tl)
    xspec = pl.BlockSpec((1, cs, tl), lambda i, l: (i, 0, l))
    ospec = pl.BlockSpec((1, cos, tl), lambda i, l: (i, 0, l))
    wspec = pl.BlockSpec((cos, cs), lambda i, l: (0, 0))
    bspec = pl.BlockSpec((cos, 1), lambda i, l: (0, 0))
    cp = pltpu.CompilerParams(dimension_semantics=("parallel", "parallel"),
                              vmem_limit_bytes=_VMEM_LIMIT)

    if residual is None:
        out = pl.pallas_call(
            _conv1x1_leaky_kernel, grid=grid,
            in_specs=[xspec, wspec, bspec], out_specs=ospec,
            out_shape=jax.ShapeDtypeStruct((n, cos, hws), jnp.float32),
            compiler_params=cp,
        )(xs, wk, bk)
    else:
        sc = jnp.repeat(scale, k, axis=1).reshape(n, cs, 1)
        sh = jnp.repeat(shift, k, axis=1).reshape(n, cs, 1)
        sspec = pl.BlockSpec((1, cs, 1), lambda i, l: (i, 0, 0))
        res = residual.reshape(n, cos, hws)
        out = pl.pallas_call(
            _conv1x1_sn_res_kernel, grid=grid,
            in_specs=[xspec, sspec, sspec, wspec, bspec, ospec],
            out_specs=ospec,
            out_shape=jax.ShapeDtypeStruct((n, cos, hws), jnp.float32),
            compiler_params=cp,
        )(xs, sc, sh, wk, bk, res)
    return out.reshape(n, cout, hw)


def residual_block_with_switchnorm(x0, x1, p):
    """Forward of ResidulBlockWtihSwitchNorm (sampling=None).

    inputs = (x0, x1), both NCHW.  Returns (lateral, trunk + lateral)."""
    n, in_c, H, W = x1.shape
    hw = H * W
    x0f = x0.reshape(n, in_c, hw)              # NCHW -> (N, C, HW): free reshape
    x1f = x1.reshape(n, in_c, hw)
    out_c = p["res_w1"].shape[0]

    # ---- transform branch: Conv3x3(repl pad) -> Conv1x1 -> LeakyReLU (fused) ----
    t = conv3x3(x0f, p["tr_w3"], p["tr_b3"], H=H, W=W)
    lateral = conv1x1(t, p["tr_w1"], p["tr_b1"])

    # ---- residual branch: SN -> LReLU -> Conv3x3 -> SN -> LReLU -> Conv1x1 (+lateral) ----
    s1, sq1 = switchnorm_stats(x1f)
    scale1, shift1 = _sn_scale_shift(s1, sq1, float(hw), p["sn1_g"], p["sn1_b"],
                                     p["sn1_mw"], p["sn1_vw"])
    r, s2, sq2 = conv3x3(x1f, p["res_w3"], p["res_b3"], H=H, W=W,
                         scale=scale1, shift=shift1, want_stats=True)
    scale2, shift2 = _sn_scale_shift(s2, sq2, float(hw), p["sn2_g"], p["sn2_b"],
                                     p["sn2_mw"], p["sn2_vw"])
    out = conv1x1(r, p["res_w1"], p["res_b1"],
                  scale=scale2, shift=shift2, residual=lateral)

    return lateral.reshape(n, out_c, H, W), out.reshape(n, out_c, H, W)


# ----------------------------- parameter init ------------------------------ #

def init_params(key, in_c, out_c):
    ch = min(in_c, out_c)
    ks = jax.random.split(key, 8)
    f32 = jnp.float32
    return {
        "sn1_g": jnp.ones((in_c,), f32), "sn1_b": jnp.zeros((in_c,), f32),
        "sn1_mw": jnp.ones((3,), f32), "sn1_vw": jnp.ones((3,), f32),
        "res_w3": 0.1 * jax.random.normal(ks[0], (ch, in_c, 3, 3), f32),
        "res_b3": 0.1 * jax.random.normal(ks[1], (ch,), f32),
        "sn2_g": jnp.ones((ch,), f32), "sn2_b": jnp.zeros((ch,), f32),
        "sn2_mw": jnp.ones((3,), f32), "sn2_vw": jnp.ones((3,), f32),
        "res_w1": 0.1 * jax.random.normal(ks[2], (out_c, ch, 1, 1), f32),
        "res_b1": 0.1 * jax.random.normal(ks[3], (out_c,), f32),
        "tr_w3": 0.1 * jax.random.normal(ks[4], (ch, in_c, 3, 3), f32),
        "tr_b3": 0.1 * jax.random.normal(ks[5], (ch,), f32),
        "tr_w1": 0.1 * jax.random.normal(ks[6], (out_c, ch, 1, 1), f32),
        "tr_b1": 0.1 * jax.random.normal(ks[7], (out_c,), f32),
    }


# ------------------------- pure-JAX reference check ------------------------ #

def _ref_sn_leaky(x, g, b, mw, vw):
    n, c, h, w = x.shape
    xr = x.reshape(n, c, -1)
    mean_in = xr.mean(-1, keepdims=True)
    var_in = xr.var(-1, ddof=1, keepdims=True)
    mean_ln = mean_in.mean(1, keepdims=True)
    temp = var_in + mean_in ** 2
    var_ln = temp.mean(1, keepdims=True) - mean_ln ** 2
    mean_bn = mean_in.mean(0, keepdims=True)
    var_bn = temp.mean(0, keepdims=True) - mean_bn ** 2
    mws, vws = jax.nn.softmax(mw), jax.nn.softmax(vw)
    mean = mws[0] * mean_in + mws[1] * mean_ln + mws[2] * mean_bn
    var = vws[0] * var_in + vws[1] * var_ln + vws[2] * var_bn
    xn = (xr - mean) / jnp.sqrt(var + EPS)
    y = xn.reshape(n, c, h, w) * g.reshape(1, c, 1, 1) + b.reshape(1, c, 1, 1)
    return jnp.where(y > 0, y, SLOPE * y)


def _ref_conv(x, w, b, pad):
    if pad:
        x = jnp.pad(x, ((0, 0), (0, 0), (1, 1), (1, 1)), mode="edge")
    y = lax.conv_general_dilated(x, w, (1, 1), "VALID",
                                 dimension_numbers=("NCHW", "OIHW", "NCHW"))
    return y + b.reshape(1, -1, 1, 1)


def _ref_forward(x0, x1, p):
    t = _ref_conv(x0, p["tr_w3"], p["tr_b3"], pad=True)
    lat = _ref_conv(t, p["tr_w1"], p["tr_b1"], pad=False)
    lat = jnp.where(lat > 0, lat, SLOPE * lat)
    r = _ref_sn_leaky(x1, p["sn1_g"], p["sn1_b"], p["sn1_mw"], p["sn1_vw"])
    r = _ref_conv(r, p["res_w3"], p["res_b3"], pad=True)
    r = _ref_sn_leaky(r, p["sn2_g"], p["sn2_b"], p["sn2_mw"], p["sn2_vw"])
    trunk = _ref_conv(r, p["res_w1"], p["res_b1"], pad=False)
    return lat, trunk + lat


# ---------------------------------- main ----------------------------------- #

if __name__ == "__main__":
    key = jax.random.PRNGKey(0)
    k0, k1, kp = jax.random.split(key, 3)
    N, in_c, out_c, H, W = 2, 4, 8, 16, 16

    x0 = jax.random.normal(k0, (N, in_c, H, W), jnp.float32)   # inputs[0]
    x1 = jax.random.normal(k1, (N, in_c, H, W), jnp.float32)   # inputs[1]
    params = init_params(kp, in_c, out_c)

    fwd = jax.jit(residual_block_with_switchnorm)
    lateral, out = fwd(x0, x1, params)
    jax.block_until_ready((lateral, out))

    ref_lat, ref_out = _ref_forward(x0, x1, params)
    assert lateral.shape == (N, out_c, H, W) and out.shape == (N, out_c, H, W)
    assert jnp.allclose(lateral, ref_lat, rtol=1e-4, atol=1e-4), \
        float(jnp.max(jnp.abs(lateral - ref_lat)))
    assert jnp.allclose(out, ref_out, rtol=1e-4, atol=1e-4), \
        float(jnp.max(jnp.abs(out - ref_out)))
    print("KERNEL_OK")
</pallas_src>

<mosaic_0001>
module attributes {stable_mosaic.version = 11 : i64} {
  func.func @_conv3x3_kernel(%arg0: i32, %arg1: memref<1x4x256xf32, #tpu.memory_space<vmem>>, %arg2: memref<9x4x4xf32, #tpu.memory_space<vmem>>, %arg3: memref<4x1xf32, #tpu.memory_space<vmem>>, %arg4: memref<1x4x256xf32, #tpu.memory_space<vmem>>) attributes {dimension_semantics = [#tpu.dimension_semantics<parallel>], iteration_bounds = array<i64: 2>, scalar_prefetch = 0 : i64, scratch_operands = 0 : i64, tpu.core_type = #tpu.core_type<tc>, window_params = [{transform_indices = @transform_0, window_bounds = array<i64: 1, 4, 256>}, {pipeline_mode = #tpu.pipeline_mode<synchronous>, transform_indices = @transform_1, window_bounds = array<i64: 9, 4, 4>}, {pipeline_mode = #tpu.pipeline_mode<synchronous>, transform_indices = @transform_2, window_bounds = array<i64: 4, 1>}, {transform_indices = @transform_3, window_bounds = array<i64: 1, 4, 256>}]} {
    %c0 = arith.constant 0 : index
    %c0_0 = arith.constant 0 : index
    %c0_1 = arith.constant 0 : index
    %0 = vector.load %arg1[%c0, %c0_0, %c0_1] : memref<1x4x256xf32, #tpu.memory_space<vmem>>, vector<1x4x256xf32>
    %1 = vector.shape_cast %0 : vector<1x4x256xf32> to vector<4x256xf32>
    %c0_2 = arith.constant 0 : index
    %c0_3 = arith.constant 0 : index
    %2 = vector.load %arg3[%c0_2, %c0_3] : memref<4x1xf32, #tpu.memory_space<vmem>>, vector<4x1xf32>
    %3 = tpu.iota {dimensions = array<i32: 1>} : vector<4x256xi32>
    %c16_i32 = arith.constant 16 : i32
    %c0_i32 = arith.constant 0 : i32
    %4 = arith.cmpi eq, %c16_i32, %c0_i32 : i32
    %c1_i32 = arith.constant 1 : i32
    %5 = arith.select %4, %c1_i32, %c16_i32 : i32
    %6 = vector.broadcast %5 : i32 to vector<4x256xi32>
    %7 = arith.remsi %3, %6 : vector<4x256xi32>
    %c0_i32_4 = arith.constant 0 : i32
    %8 = vector.broadcast %c0_i32_4 : i32 to vector<4x256xi32>
    %9 = arith.cmpi ne, %7, %8 : vector<4x256xi32>
    %c0_i32_5 = arith.constant 0 : i32
    %10 = vector.broadcast %c0_i32_5 : i32 to vector<4x256xi32>
    %11 = arith.cmpi slt, %7, %10 : vector<4x256xi32>
    %c0_i32_6 = arith.constant 0 : i32
    %12 = arith.cmpi slt, %5, %c0_i32_6 : i32
    %13 = vector.broadcast %12 : i1 to vector<4x256xi1>
    %14 = vector.broadcast %13 : vector<4x256xi1> to vector<4x256xi1>
    %15 = arith.xori %11, %14 : vector<4x256xi1>
    %16 = arith.andi %15, %9 : vector<4x256xi1>
    %17 = vector.broadcast %5 : i32 to vector<4x256xi32>
    %18 = arith.addi %7, %17 : vector<4x256xi32>
    %19 = arith.select %16, %18, %7 : vector<4x256xi1>, vector<4x256xi32>
    %c0_i32_7 = arith.constant 0 : i32
    %20 = vector.broadcast %c0_i32_7 : i32 to vector<4x256xi32>
    %21 = arith.cmpi eq, %19, %20 : vector<4x256xi32>
    %c1_i32_8 = arith.constant 1 : i32
    %22 = tpu.dynamic_rotate %1 by %c1_i32_8 dim 1 : vector<4x256xf32>, i32 -> vector<4x256xf32>
    %23 = arith.select %21, %1, %22 : vector<4x256xi1>, vector<4x256xf32>
    %c15_i32 = arith.constant 15 : i32
    %24 = vector.broadcast %c15_i32 : i32 to vector<4x256xi32>
    %25 = arith.cmpi eq, %19, %24 : vector<4x256xi32>
    %c255_i32 = arith.constant 255 : i32
    %26 = tpu.dynamic_rotate %1 by %c255_i32 dim 1 : vector<4x256xf32>, i32 -> vector<4x256xf32>
    %27 = arith.select %25, %1, %26 : vector<4x256xi1>, vector<4x256xf32>
    %c0_9 = arith.constant 0 : index
    %c0_10 = arith.constant 0 : index
    %c0_11 = arith.constant 0 : index
    %28 = vector.load %arg2[%c0_9, %c0_10, %c0_11] : memref<9x4x4xf32, #tpu.memory_space<vmem>>, vector<1x4x4xf32>
    %29 = vector.shape_cast %28 : vector<1x4x4xf32> to vector<4x4xf32>
    %cst = arith.constant dense<0.000000e+00> : vector<4x256xf32>
    %30 = tpu.matmul %29, %23, %cst {dimension_numbers = #tpu.dot_dimension_numbers<[1], [0], [0], [1], [0, 0, 1, 1], [], []>} : vector<4x4xf32>, vector<4x256xf32>, vector<4x256xf32> -> vector<4x256xf32>
    %c1 = arith.constant 1 : index
    %c0_12 = arith.constant 0 : index
    %c0_13 = arith.constant 0 : index
    %31 = vector.load %arg2[%c1, %c0_12, %c0_13] : memref<9x4x4xf32, #tpu.memory_space<vmem>>, vector<1x4x4xf32>
    %32 = vector.shape_cast %31 : vector<1x4x4xf32> to vector<4x4xf32>
    %cst_14 = arith.constant dense<0.000000e+00> : vector<4x256xf32>
    %33 = tpu.matmul %32, %1, %cst_14 {dimension_numbers = #tpu.dot_dimension_numbers<[1], [0], [0], [1], [0, 0, 1, 1], [], []>} : vector<4x4xf32>, vector<4x256xf32>, vector<4x256xf32> -> vector<4x256xf32>
    %34 = arith.addf %30, %33 : vector<4x256xf32>
    %c2 = arith.constant 2 : index
    %c0_15 = arith.constant 0 : index
    %c0_16 = arith.constant 0 : index
    %35 = vector.load %arg2[%c2, %c0_15, %c0_16] : memref<9x4x4xf32, #tpu.memory_space<vmem>>, vector<1x4x4xf32>
    %36 = vector.shape_cast %35 : vector<1x4x4xf32> to vector<4x4xf32>
    %cst_17 = arith.constant dense<0.000000e+00> : vector<4x256xf32>
    %37 = tpu.matmul %36, %27, %cst_17 {dimension_numbers = #tpu.dot_dimension_numbers<[1], [0], [0], [1], [0, 0, 1, 1], [], []>} : vector<4x4xf32>, vector<4x256xf32>, vector<4x256xf32> -> vector<4x256xf32>
    %38 = arith.addf %34, %37 : vector<4x256xf32>
    %c3 = arith.constant 3 : index
    %c0_18 = arith.constant 0 : index
    %c0_19 = arith.constant 0 : index
    %39 = vector.load %arg2[%c3, %c0_18, %c0_19] : memref<9x4x4xf32, #tpu.memory_space<vmem>>, vector<1x4x4xf32>
    %40 = vector.shape_cast %39 : vector<1x4x4xf32> to vector<4x4xf32>
    %cst_20 = arith.constant dense<0.000000e+00> : vector<4x256xf32>
    %41 = tpu.matmul %40, %23, %cst_20 {dimension_numbers = #tpu.dot_dimension_numbers<[1], [0], [0], [1], [0, 0, 1, 1], [], []>} : vector<4x4xf32>, vector<4x256xf32>, vector<4x256xf32> -> vector<4x256xf32>
    %c4 = arith.constant 4 : index
    %c0_21 = arith.constant 0 : index
    %c0_22 = arith.constant 0 : index
    %42 = vector.load %arg2[%c4, %c0_21, %c0_22] : memref<9x4x4xf32, #tpu.memory_space<vmem>>, vector<1x4x4xf32>
    %43 = vector.shape_cast %42 : vector<1x4x4xf32> to vector<4x4xf32>
    %cst_23 = arith.constant dense<0.000000e+00> : vector<4x256xf32>
    %44 = tpu.matmul %43, %1, %cst_23 {dimension_numbers = #tpu.dot_dimension_numbers<[1], [0], [0], [1], [0, 0, 1, 1], [], []>} : vector<4x4xf32>, vector<4x256xf32>, vector<4x256xf32> -> vector<4x256xf32>
    %45 = arith.addf %41, %44 : vector<4x256xf32>
    %c5 = arith.constant 5 : index
    %c0_24 = arith.constant 0 : index
    %c0_25 = arith.constant 0 : index
    %46 = vector.load %arg2[%c5, %c0_24, %c0_25] : memref<9x4x4xf32, #tpu.memory_space<vmem>>, vector<1x4x4xf32>
    %47 = vector.shape_cast %46 : vector<1x4x4xf32> to vector<4x4xf32>
    %cst_26 = arith.constant dense<0.000000e+00> : vector<4x256xf32>
    %48 = tpu.matmul %47, %27, %cst_26 {dimension_numbers = #tpu.dot_dimension_numbers<[1], [0], [0], [1], [0, 0, 1, 1], [], []>} : vector<4x4xf32>, vector<4x256xf32>, vector<4x256xf32> -> vector<4x256xf32>
    %49 = arith.addf %45, %48 : vector<4x256xf32>
    %c6 = arith.constant 6 : index
    %c0_27 = arith.constant 0 : index
    %c0_28 = arith.constant 0 : index
    %50 = vector.load %arg2[%c6, %c0_27, %c0_28] : memref<9x4x4xf32, #tpu.memory_space<vmem>>, vector<1x4x4xf32>
    %51 = vector.shape_cast %50 : vector<1x4x4xf32> to vector<4x4xf32>
    %cst_29 = arith.constant dense<0.000000e+00> : vector<4x256xf32>
    %52 = tpu.matmul %51, %23, %cst_29 {dimension_numbers = #tpu.dot_dimension_numbers<[1], [0], [0], [1], [0, 0, 1, 1], [], []>} : vector<4x4xf32>, vector<4x256xf32>, vector<4x256xf32> -> vector<4x256xf32>
    %c7 = arith.constant 7 : index
    %c0_30 = arith.constant 0 : index
    %c0_31 = arith.constant 0 : index
    %53 = vector.load %arg2[%c7, %c0_30, %c0_31] : memref<9x4x4xf32, #tpu.memory_space<vmem>>, vector<1x4x4xf32>
    %54 = vector.shape_cast %53 : vector<1x4x4xf32> to vector<4x4xf32>
    %cst_32 = arith.constant dense<0.000000e+00> : vector<4x256xf32>
    %55 = tpu.matmul %54, %1, %cst_32 {dimension_numbers = #tpu.dot_dimension_numbers<[1], [0], [0], [1], [0, 0, 1, 1], [], []>} : vector<4x4xf32>, vector<4x256xf32>, vector<4x256xf32> -> vector<4x256xf32>
    %56 = arith.addf %52, %55 : vector<4x256xf32>
    %c8 = arith.constant 8 : index
    %c0_33 = arith.constant 0 : index
    %c0_34 = arith.constant 0 : index
    %57 = vector.load %arg2[%c8, %c0_33, %c0_34] : memref<9x4x4xf32, #tpu.memory_space<vmem>>, vector<1x4x4xf32>
    %58 = vector.shape_cast %57 : vector<1x4x4xf32> to vector<4x4xf32>
    %cst_35 = arith.constant dense<0.000000e+00> : vector<4x256xf32>
    %59 = tpu.matmul %58, %27, %cst_35 {dimension_numbers = #tpu.dot_dimension_numbers<[1], [0], [0], [1], [0, 0, 1, 1], [], []>} : vector<4x4xf32>, vector<4x256xf32>, vector<4x256xf32> -> vector<4x256xf32>
    %60 = arith.addf %56, %59 : vector<4x256xf32>
    %61 = tpu.iota {dimensions = array<i32: 1>} : vector<4x256xi32>
    %c16_i32_36 = arith.constant 16 : i32
    %62 = vector.broadcast %c16_i32_36 : i32 to vector<4x256xi32>
    %63 = arith.cmpi slt, %61, %62 : vector<4x256xi32>
    %c240_i32 = arith.constant 240 : i32
    %64 = vector.broadcast %c240_i32 : i32 to vector<4x256xi32>
    %65 = arith.cmpi sge, %61, %64 : vector<4x256xi32>
    %c16_i32_37 = arith.constant 16 : i32
    %66 = tpu.dynamic_rotate %38 by %c16_i32_37 dim 1 : vector<4x256xf32>, i32 -> vector<4x256xf32>
    %67 = arith.select %63, %38, %66 : vector<4x256xi1>, vector<4x256xf32>
    %68 = arith.addf %49, %67 : vector<4x256xf32>
    %c240_i32_38 = arith.constant 240 : i32
    %69 = tpu.dynamic_rotate %60 by %c240_i32_38 dim 1 : vector<4x256xf32>, i32 -> vector<4x256xf32>
    %70 = arith.select %65, %60, %69 : vector<4x256xi1>, vector<4x256xf32>
    %71 = arith.addf %68, %70 : vector<4x256xf32>
    %72 = vector.broadcast %2 : vector<4x1xf32> to vector<4x256xf32>
    %73 = arith.addf %71, %72 : vector<4x256xf32>
    %74 = vector.shape_cast %73 : vector<4x256xf32> to vector<1x4x256xf32>
    %c0_39 = arith.constant 0 : index
    %c0_40 = arith.constant 0 : index
    %c0_41 = arith.constant 0 : index
    %75 = vector.load %arg4[%c0_39, %c0_40, %c0_41] : memref<1x4x256xf32, #tpu.memory_space<vmem>>, vector<1x4x256xf32>
    tpu.vector_store %arg4[%c0_39, %c0_40, %c0_41], %74 {strides = array<i32>} : memref<1x4x256xf32, #tpu.memory_space<vmem>>, vector<1x4x256xf32>,
    return
  }
  func.func @transform_0(%arg0: i32) -> (i32, i32, i32) {
    %c0_i32 = arith.constant 0 : i32
    %c0_i32_0 = arith.constant 0 : i32
    %c0_i32_1 = arith.constant 0 : i32
    return %arg0, %c0_i32, %c0_i32_0 : i32, i32, i32
  }
  func.func @transform_1(%arg0: i32) -> (i32, i32, i32) {
    %c0_i32 = arith.constant 0 : i32
    %c0_i32_0 = arith.constant 0 : i32
    %c0_i32_1 = arith.constant 0 : i32
    %c0_i32_2 = arith.constant 0 : i32
    return %c0_i32, %c0_i32_0, %c0_i32_1 : i32, i32, i32
  }
  func.func @transform_2(%arg0: i32) -> (i32, i32) {
    %c0_i32 = arith.constant 0 : i32
    %c0_i32_0 = arith.constant 0 : i32
    %c0_i32_1 = arith.constant 0 : i32
    return %c0_i32, %c0_i32_0 : i32, i32
  }
  func.func @transform_3(%arg0: i32) -> (i32, i32, i32) {
    %c0_i32 = arith.constant 0 : i32
    %c0_i32_0 = arith.constant 0 : i32
    %c0_i32_1 = arith.constant 0 : i32
    return %arg0, %c0_i32, %c0_i32_0 : i32, i32, i32
  }
}

module attributes {stable_mosaic.version = 11 : i64} {
  func.func @_stats_kernel(%arg0: i32, %arg1: i32, %arg2: memref<1x8x128xf32, #tpu.memory_space<vmem>>, %arg3: memref<1x1x8xf32, #tpu.memory_space<vmem>>, %arg4: memref<1x1x8xf32, #tpu.memory_space<vmem>>, %arg5: memref<8x128xf32, #tpu.memory_space<vmem>>, %arg6: memref<8x128xf32, #tpu.memory_space<vmem>>) attributes {dimension_semantics = [#tpu.dimension_semantics<parallel>, #tpu.dimension_semantics<arbitrary>], iteration_bounds = array<i64: 2, 1>, scalar_prefetch = 0 : i64, scratch_operands = 2 : i64, tpu.core_type = #tpu.core_type<tc>, window_params = [{transform_indices = @transform_0, window_bounds = array<i64: 1, 8, 128>}, {transform_indices = @transform_1, window_bounds = array<i64: 1, 1, 8>}, {transform_indices = @transform_2, window_bounds = array<i64: 1, 1, 8>}]} {
    %c0_i32 = arith.constant 0 : i32
    %0 = arith.cmpi eq, %arg1, %c0_i32 : i32
    %1 = arith.extui %0 : i1 to i32
    %c0_i32_0 = arith.constant 0 : i32
    %2 = arith.cmpi ne, %1, %c0_i32_0 : i32
    scf.if %2 {
      %cst = arith.constant 0.000000e+00 : f32
      %15 = vector.broadcast %cst : f32 to vector<8x128xf32>
      %c0_13 = arith.constant 0 : index
      %c0_14 = arith.constant 0 : index
      %16 = vector.load %arg5[%c0_13, %c0_14] : memref<8x128xf32, #tpu.memory_space<vmem>>, vector<8x128xf32>
      tpu.vector_store %arg5[%c0_13, %c0_14], %15 {strides = array<i32>} : memref<8x128xf32, #tpu.memory_space<vmem>>, vector<8x128xf32>,
      %cst_15 = arith.constant 0.000000e+00 : f32
      %17 = vector.broadcast %cst_15 : f32 to vector<8x128xf32>
      %c0_16 = arith.constant 0 : index
      %c0_17 = arith.constant 0 : index
      %18 = vector.load %arg6[%c0_16, %c0_17] : memref<8x128xf32, #tpu.memory_space<vmem>>, vector<8x128xf32>
      tpu.vector_store %arg6[%c0_16, %c0_17], %17 {strides = array<i32>} : memref<8x128xf32, #tpu.memory_space<vmem>>, vector<8x128xf32>,
    } else {
    }
    %c0 = arith.constant 0 : index
    %c0_1 = arith.constant 0 : index
    %c0_2 = arith.constant 0 : index
    %3 = vector.load %arg2[%c0, %c0_1, %c0_2] : memref<1x8x128xf32, #tpu.memory_space<vmem>>, vector<1x8x128xf32>
    %4 = vector.shape_cast %3 : vector<1x8x128xf32> to vector<8x128xf32>
    %c0_3 = arith.constant 0 : index
    %c0_4 = arith.constant 0 : index
    %5 = vector.load %arg5[%c0_3, %c0_4] : memref<8x128xf32, #tpu.memory_space<vmem>>, vector<8x128xf32>
    %6 = arith.addf %5, %4 : vector<8x128xf32>
    %c0_5 = arith.constant 0 : index
    %c0_6 = arith.constant 0 : index
    %7 = vector.load %arg5[%c0_5, %c0_6] : memref<8x128xf32, #tpu.memory_space<vmem>>, vector<8x128xf32>
    tpu.vector_store %arg5[%c0_5, %c0_6], %6 {strides = array<i32>} : memref<8x128xf32, #tpu.memory_space<vmem>>, vector<8x128xf32>,
    %c0_7 = arith.constant 0 : index
    %c0_8 = arith.constant 0 : index
    %8 = vector.load %arg6[%c0_7, %c0_8] : memref<8x128xf32, #tpu.memory_space<vmem>>, vector<8x128xf32>
    %9 = arith.mulf %4, %4 : vector<8x128xf32>
    %10 = arith.addf %8, %9 : vector<8x128xf32>
    %c0_9 = arith.constant 0 : index
    %c0_10 = arith.constant 0 : index
    %11 = vector.load %arg6[%c0_9, %c0_10] : memref<8x128xf32, #tpu.memory_space<vmem>>, vector<8x128xf32>
    tpu.vector_store %arg6[%c0_9, %c0_10], %10 {strides = array<i32>} : memref<8x128xf32, #tpu.memory_space<vmem>>, vector<8x128xf32>,
    %c0_i32_11 = arith.constant 0 : i32
    %12 = arith.cmpi eq, %arg1, %c0_i32_11 : i32
    %13 = arith.extui %12 : i1 to i32
    %c0_i32_12 = arith.constant 0 : i32
    %14 = arith.cmpi ne, %13, %c0_i32_12 : i32
    scf.if %14 {
      %c0_13 = arith.constant 0 : index
      %c0_14 = arith.constant 0 : index
      %15 = vector.load %arg5[%c0_13, %c0_14] : memref<8x128xf32, #tpu.memory_space<vmem>>, vector<8x128xf32>
      %cst = arith.constant dense<0.000000e+00> : vector<8xf32>
      %16 = vector.multi_reduction <add>, %15, %cst [1] : vector<8x128xf32> to vector<8xf32>
      %17 = vector.shape_cast %16 : vector<8xf32> to vector<1x1x8xf32>
      %c0_15 = arith.constant 0 : index
      %c0_16 = arith.constant 0 : index
      %c0_17 = arith.constant 0 : index
      %18 = vector.load %arg3[%c0_15, %c0_16, %c0_17] : memref<1x1x8xf32, #tpu.memory_space<vmem>>, vector<1x1x8xf32>
      tpu.vector_store %arg3[%c0_15, %c0_16, %c0_17], %17 {strides = array<i32>} : memref<1x1x8xf32, #tpu.memory_space<vmem>>, vector<1x1x8xf32>,
      %c0_18 = arith.constant 0 : index
      %c0_19 = arith.constant 0 : index
      %19 = vector.load %arg6[%c0_18, %c0_19] : memref<8x128xf32, #tpu.memory_space<vmem>>, vector<8x128xf32>
      %cst_20 = arith.constant dense<0.000000e+00> : vector<8xf32>
      %20 = vector.multi_reduction <add>, %19, %cst_20 [1] : vector<8x128xf32> to vector<8xf32>
      %21 = vector.shape_cast %20 : vector<8xf32> to vector<1x1x8xf32>
      %c0_21 = arith.constant 0 : index
      %c0_22 = arith.constant 0 : index
      %c0_23 = arith.constant 0 : index
      %22 = vector.load %arg4[%c0_21, %c0_22, %c0_23] : memref<1x1x8xf32, #tpu.memory_space<vmem>>, vector<1x1x8xf32>
      tpu.vector_store %arg4[%c0_21, %c0_22, %c0_23], %21 {strides = array<i32>} : memref<1x1x8xf32, #tpu.memory_space<vmem>>, vector<1x1x8xf32>,
    } else {
    }
    return
  }
  func.func @transform_0(%arg0: i32, %arg1: i32) -> (i32, i32, i32) {
    %c0_i32 = arith.constant 0 : i32
    %c0_i32_0 = arith.constant 0 : i32
    return %arg0, %c0_i32, %arg1 : i32, i32, i32
  }
  func.func @transform_1(%arg0: i32, %arg1: i32) -> (i32, i32, i32) {
    %c0_i32 = arith.constant 0 : i32
    %c0_i32_0 = arith.constant 0 : i32
    %c0_i32_1 = arith.constant 0 : i32
    return %arg0, %c0_i32, %c0_i32_0 : i32, i32, i32
  }
  func.func @transform_2(%arg0: i32, %arg1: i32) -> (i32, i32, i32) {
    %c0_i32 = arith.constant 0 : i32
    %c0_i32_0 = arith.constant 0 : i32
    %c0_i32_1 = arith.constant 0 : i32
    return %arg0, %c0_i32, %c0_i32_0 : i32, i32, i32
  }
}

module attributes {stable_mosaic.version = 11 : i64} {
  func.func @_conv3x3_sn_kernel(%arg0: i32, %arg1: memref<1x4x256xf32, #tpu.memory_space<vmem>>, %arg2: memref<1x4x1xf32, #tpu.memory_space<vmem>>, %arg3: memref<1x4x1xf32, #tpu.memory_space<vmem>>, %arg4: memref<9x4x4xf32, #tpu.memory_space<vmem>>, %arg5: memref<4x1xf32, #tpu.memory_space<vmem>>, %arg6: memref<1x4x256xf32, #tpu.memory_space<vmem>>, %arg7: memref<1x1x4xf32, #tpu.memory_space<vmem>>, %arg8: memref<1x1x4xf32, #tpu.memory_space<vmem>>) attributes {dimension_semantics = [#tpu.dimension_semantics<parallel>], iteration_bounds = array<i64: 2>, scalar_prefetch = 0 : i64, scratch_operands = 0 : i64, tpu.core_type = #tpu.core_type<tc>, window_params = [{transform_indices = @transform_0, window_bounds = array<i64: 1, 4, 256>}, {transform_indices = @transform_1, window_bounds = array<i64: 1, 4, 1>}, {transform_indices = @transform_2, window_bounds = array<i64: 1, 4, 1>}, {pipeline_mode = #tpu.pipeline_mode<synchronous>, transform_indices = @transform_3, window_bounds = array<i64: 9, 4, 4>}, {pipeline_mode = #tpu.pipeline_mode<synchronous>, transform_indices = @transform_4, window_bounds = array<i64: 4, 1>}, {transform_indices = @transform_5, window_bounds = array<i64: 1, 4, 256>}, {transform_indices = @transform_6, window_bounds = array<i64: 1, 1, 4>}, {transform_indices = @transform_7, window_bounds = array<i64: 1, 1, 4>}]} {
    %c0 = arith.constant 0 : index
    %c0_0 = arith.constant 0 : index
    %c0_1 = arith.constant 0 : index
    %0 = vector.load %arg1[%c0, %c0_0, %c0_1] : memref<1x4x256xf32, #tpu.memory_space<vmem>>, vector<1x4x256xf32>
    %1 = vector.shape_cast %0 : vector<1x4x256xf32> to vector<4x256xf32>
    %c0_2 = arith.constant 0 : index
    %c0_3 = arith.constant 0 : index
    %c0_4 = arith.constant 0 : index
    %2 = vector.load %arg2[%c0_2, %c0_3, %c0_4] : memref<1x4x1xf32, #tpu.memory_space<vmem>>, vector<1x4x1xf32>
    %3 = vector.shape_cast %2 : vector<1x4x1xf32> to vector<4x1xf32>
    %4 = vector.broadcast %3 : vector<4x1xf32> to vector<4x256xf32>
    %5 = arith.mulf %1, %4 : vector<4x256xf32>
    %c0_5 = arith.constant 0 : index
    %c0_6 = arith.constant 0 : index
    %c0_7 = arith.constant 0 : index
    %6 = vector.load %arg3[%c0_5, %c0_6, %c0_7] : memref<1x4x1xf32, #tpu.memory_space<vmem>>, vector<1x4x1xf32>
    %7 = vector.shape_cast %6 : vector<1x4x1xf32> to vector<4x1xf32>
    %8 = vector.broadcast %7 : vector<4x1xf32> to vector<4x256xf32>
    %9 = arith.addf %5, %8 : vector<4x256xf32>
    %cst = arith.constant 0.000000e+00 : f32
    %10 = vector.broadcast %cst : f32 to vector<4x256xf32>
    %11 = arith.cmpf ogt, %9, %10 : vector<4x256xf32>
    %cst_8 = arith.constant 0.00999999977 : f32
    %12 = vector.broadcast %cst_8 : f32 to vector<4x256xf32>
    %13 = arith.mulf %12, %9 : vector<4x256xf32>
    %14 = arith.select %11, %9, %13 : vector<4x256xi1>, vector<4x256xf32>
    %c0_9 = arith.constant 0 : index
    %c0_10 = arith.constant 0 : index
    %15 = vector.load %arg5[%c0_9, %c0_10] : memref<4x1xf32, #tpu.memory_space<vmem>>, vector<4x1xf32>
    %16 = tpu.iota {dimensions = array<i32: 1>} : vector<4x256xi32>
    %c16_i32 = arith.constant 16 : i32
    %c0_i32 = arith.constant 0 : i32
    %17 = arith.cmpi eq, %c16_i32, %c0_i32 : i32
    %c1_i32 = arith.constant 1 : i32
    %18 = arith.select %17, %c1_i32, %c16_i32 : i32
    %19 = vector.broadcast %18 : i32 to vector<4x256xi32>
    %20 = arith.remsi %16, %19 : vector<4x256xi32>
    %c0_i32_11 = arith.constant 0 : i32
    %21 = vector.broadcast %c0_i32_11 : i32 to vector<4x256xi32>
    %22 = arith.cmpi ne, %20, %21 : vector<4x256xi32>
    %c0_i32_12 = arith.constant 0 : i32
    %23 = vector.broadcast %c0_i32_12 : i32 to vector<4x256xi32>
    %24 = arith.cmpi slt, %20, %23 : vector<4x256xi32>
    %c0_i32_13 = arith.constant 0 : i32
    %25 = arith.cmpi slt, %18, %c0_i32_13 : i32
    %26 = vector.broadcast %25 : i1 to vector<4x256xi1>
    %27 = vector.broadcast %26 : vector<4x256xi1> to vector<4x256xi1>
    %28 = arith.xori %24, %27 : vector<4x256xi1>
    %29 = arith.andi %28, %22 : vector<4x256xi1>
    %30 = vector.broadcast %18 : i32 to vector<4x256xi32>
    %31 = arith.addi %20, %30 : vector<4x256xi32>
    %32 = arith.select %29, %31, %20 : vector<4x256xi1>, vector<4x256xi32>
    %c0_i32_14 = arith.constant 0 : i32
    %33 = vector.broadcast %c0_i32_14 : i32 to vector<4x256xi32>
    %34 = arith.cmpi eq, %32, %33 : vector<4x256xi32>
    %c1_i32_15 = arith.constant 1 : i32
    %35 = tpu.dynamic_rotate %14 by %c1_i32_15 dim 1 : vector<4x256xf32>, i32 -> vector<4x256xf32>
    %36 = arith.select %34, %14, %35 : vector<4x256xi1>, vector<4x256xf32>
    %c15_i32 = arith.constant 15 : i32
    %37 = vector.broadcast %c15_i32 : i32 to vector<4x256xi32>
    %38 = arith.cmpi eq, %32, %37 : vector<4x256xi32>
    %c255_i32 = arith.constant 255 : i32
    %39 = tpu.dynamic_rotate %14 by %c255_i32 dim 1 : vector<4x256xf32>, i32 -> vector<4x256xf32>
    %40 = arith.select %38, %14, %39 : vector<4x256xi1>, vector<4x256xf32>
    %c0_16 = arith.constant 0 : index
    %c0_17 = arith.constant 0 : index
    %c0_18 = arith.constant 0 : index
    %41 = vector.load %arg4[%c0_16, %c0_17, %c0_18] : memref<9x4x4xf32, #tpu.memory_space<vmem>>, vector<1x4x4xf32>
    %42 = vector.shape_cast %41 : vector<1x4x4xf32> to vector<4x4xf32>
    %cst_19 = arith.constant dense<0.000000e+00> : vector<4x256xf32>
    %43 = tpu.matmul %42, %36, %cst_19 {dimension_numbers = #tpu.dot_dimension_numbers<[1], [0], [0], [1], [0, 0, 1, 1], [], []>} : vector<4x4xf32>, vector<4x256xf32>, vector<4x256xf32> -> vector<4x256xf32>
    %c1 = arith.constant 1 : index
    %c0_20 = arith.constant 0 : index
    %c0_21 = arith.constant 0 : index
    %44 = vector.load %arg4[%c1, %c0_20, %c0_21] : memref<9x4x4xf32, #tpu.memory_space<vmem>>, vector<1x4x4xf32>
    %45 = vector.shape_cast %44 : vector<1x4x4xf32> to vector<4x4xf32>
    %cst_22 = arith.constant dense<0.000000e+00> : vector<4x256xf32>
    %46 = tpu.matmul %45, %14, %cst_22 {dimension_numbers = #tpu.dot_dimension_numbers<[1], [0], [0], [1], [0, 0, 1, 1], [], []>} : vector<4x4xf32>, vector<4x256xf32>, vector<4x256xf32> -> vector<4x256xf32>
    %47 = arith.addf %43, %46 : vector<4x256xf32>
    %c2 = arith.constant 2 : index
    %c0_23 = arith.constant 0 : index
    %c0_24 = arith.constant 0 : index
    %48 = vector.load %arg4[%c2, %c0_23, %c0_24] : memref<9x4x4xf32, #tpu.memory_space<vmem>>, vector<1x4x4xf32>
    %49 = vector.shape_cast %48 : vector<1x4x4xf32> to vector<4x4xf32>
    %cst_25 = arith.constant dense<0.000000e+00> : vector<4x256xf32>
    %50 = tpu.matmul %49, %40, %cst_25 {dimension_numbers = #tpu.dot_dimension_numbers<[1], [0], [0], [1], [0, 0, 1, 1], [], []>} : vector<4x4xf32>, vector<4x256xf32>, vector<4x256xf32> -> vector<4x256xf32>
    %51 = arith.addf %47, %50 : vector<4x256xf32>
    %c3 = arith.constant 3 : index
    %c0_26 = arith.constant 0 : index
    %c0_27 = arith.constant 0 : index
    %52 = vector.load %arg4[%c3, %c0_26, %c0_27] : memref<9x4x4xf32, #tpu.memory_space<vmem>>, vector<1x4x4xf32>
    %53 = vector.shape_cast %52 : vector<1x4x4xf32> to vector<4x4xf32>
    %cst_28 = arith.constant dense<0.000000e+00> : vector<4x256xf32>
    %54 = tpu.matmul %53, %36, %cst_28 {dimension_numbers = #tpu.dot_dimension_numbers<[1], [0], [0], [1], [0, 0, 1, 1], [], []>} : vector<4x4xf32>, vector<4x256xf32>, vector<4x256xf32> -> vector<4x256xf32>
    %c4 = arith.constant 4 : index
    %c0_29 = arith.constant 0 : index
    %c0_30 = arith.constant 0 : index
    %55 = vector.load %arg4[%c4, %c0_29, %c0_30] : memref<9x4x4xf32, #tpu.memory_space<vmem>>, vector<1x4x4xf32>
    %56 = vector.shape_cast %55 : vector<1x4x4xf32> to vector<4x4xf32>
    %cst_31 = arith.constant dense<0.000000e+00> : vector<4x256xf32>
    %57 = tpu.matmul %56, %14, %cst_31 {dimension_numbers = #tpu.dot_dimension_numbers<[1], [0], [0], [1], [0, 0, 1, 1], [], []>} : vector<4x4xf32>, vector<4x256xf32>, vector<4x256xf32> -> vector<4x256xf32>
    %58 = arith.addf %54, %57 : vector<4x256xf32>
    %c5 = arith.constant 5 : index
    %c0_32 = arith.constant 0 : index
    %c0_33 = arith.constant 0 : index
    %59 = vector.load %arg4[%c5, %c0_32, %c0_33] : memref<9x4x4xf32, #tpu.memory_space<vmem>>, vector<1x4x4xf32>
    %60 = vector.shape_cast %59 : vector<1x4x4xf32> to vector<4x4xf32>
    %cst_34 = arith.constant dense<0.000000e+00> : vector<4x256xf32>
    %61 = tpu.matmul %60, %40, %cst_34 {dimension_numbers = #tpu.dot_dimension_numbers<[1], [0], [0], [1], [0, 0, 1, 1], [], []>} : vector<4x4xf32>, vector<4x256xf32>, vector<4x256xf32> -> vector<4x256xf32>
    %62 = arith.addf %58, %61 : vector<4x256xf32>
    %c6 = arith.constant 6 : index
    %c0_35 = arith.constant 0 : index
    %c0_36 = arith.constant 0 : index
    %63 = vector.load %arg4[%c6, %c0_35, %c0_36] : memref<9x4x4xf32, #tpu.memory_space<vmem>>, vector<1x4x4xf32>
    %64 = vector.shape_cast %63 : vector<1x4x4xf32> to vector<4x4xf32>
    %cst_37 = arith.constant dense<0.000000e+00> : vector<4x256xf32>
    %65 = tpu.matmul %64, %36, %cst_37 {dimension_numbers = #tpu.dot_dimension_numbers<[1], [0], [0], [1], [0, 0, 1, 1], [], []>} : vector<4x4xf32>, vector<4x256xf32>, vector<4x256xf32> -> vector<4x256xf32>
    %c7 = arith.constant 7 : index
    %c0_38 = arith.constant 0 : index
    %c0_39 = arith.constant 0 : index
    %66 = vector.load %arg4[%c7, %c0_38, %c0_39] : memref<9x4x4xf32, #tpu.memory_space<vmem>>, vector<1x4x4xf32>
    %67 = vector.shape_cast %66 : vector<1x4x4xf32> to vector<4x4xf32>
    %cst_40 = arith.constant dense<0.000000e+00> : vector<4x256xf32>
    %68 = tpu.matmul %67, %14, %cst_40 {dimension_numbers = #tpu.dot_dimension_numbers<[1], [0], [0], [1], [0, 0, 1, 1], [], []>} : vector<4x4xf32>, vector<4x256xf32>, vector<4x256xf32> -> vector<4x256xf32>
    %69 = arith.addf %65, %68 : vector<4x256xf32>
    %c8 = arith.constant 8 : index
    %c0_41 = arith.constant 0 : index
    %c0_42 = arith.constant 0 : index
    %70 = vector.load %arg4[%c8, %c0_41, %c0_42] : memref<9x4x4xf32, #tpu.memory_space<vmem>>, vector<1x4x4xf32>
    %71 = vector.shape_cast %70 : vector<1x4x4xf32> to vector<4x4xf32>
    %cst_43 = arith.constant dense<0.000000e+00> : vector<4x256xf32>
    %72 = tpu.matmul %71, %40, %cst_43 {dimension_numbers = #tpu.dot_dimension_numbers<[1], [0], [0], [1], [0, 0, 1, 1], [], []>} : vector<4x4xf32>, vector<4x256xf32>, vector<4x256xf32> -> vector<4x256xf32>
    %73 = arith.addf %69, %72 : vector<4x256xf32>
    %74 = tpu.iota {dimensions = array<i32: 1>} : vector<4x256xi32>
    %c16_i32_44 = arith.constant 16 : i32
    %75 = vector.broadcast %c16_i32_44 : i32 to vector<4x256xi32>
    %76 = arith.cmpi slt, %74, %75 : vector<4x256xi32>
    %c240_i32 = arith.constant 240 : i32
    %77 = vector.broadcast %c240_i32 : i32 to vector<4x256xi32>
    %78 = arith.cmpi sge, %74, %77 : vector<4x256xi32>
    %c16_i32_45 = arith.constant 16 : i32
    %79 = tpu.dynamic_rotate %51 by %c16_i32_45 dim 1 : vector<4x256xf32>, i32 -> vector<4x256xf32>
    %80 = arith.select %76, %51, %79 : vector<4x256xi1>, vector<4x256xf32>
    %81 = arith.addf %62, %80 : vector<4x256xf32>
    %c240_i32_46 = arith.constant 240 : i32
    %82 = tpu.dynamic_rotate %73 by %c240_i32_46 dim 1 : vector<4x256xf32>, i32 -> vector<4x256xf32>
    %83 = arith.select %78, %73, %82 : vector<4x256xi1>, vector<4x256xf32>
    %84 = arith.addf %81, %83 : vector<4x256xf32>
    %85 = vector.broadcast %15 : vector<4x1xf32> to vector<4x256xf32>
    %86 = arith.addf %84, %85 : vector<4x256xf32>
    %87 = vector.shape_cast %86 : vector<4x256xf32> to vector<1x4x256xf32>
    %c0_47 = arith.constant 0 : index
    %c0_48 = arith.constant 0 : index
    %c0_49 = arith.constant 0 : index
    %88 = vector.load %arg6[%c0_47, %c0_48, %c0_49] : memref<1x4x256xf32, #tpu.memory_space<vmem>>, vector<1x4x256xf32>
    tpu.vector_store %arg6[%c0_47, %c0_48, %c0_49], %87 {strides = array<i32>} : memref<1x4x256xf32, #tpu.memory_space<vmem>>, vector<1x4x256xf32>,
    %cst_50 = arith.constant dense<0.000000e+00> : vector<4xf32>
    %89 = vector.multi_reduction <add>, %86, %cst_50 [1] : vector<4x256xf32> to vector<4xf32>
    %90 = vector.shape_cast %89 : vector<4xf32> to vector<1x1x4xf32>
    %c0_51 = arith.constant 0 : index
    %c0_52 = arith.constant 0 : index
    %c0_53 = arith.constant 0 : index
    %91 = vector.load %arg7[%c0_51, %c0_52, %c0_53] : memref<1x1x4xf32, #tpu.memory_space<vmem>>, vector<1x1x4xf32>
    tpu.vector_store %arg7[%c0_51, %c0_52, %c0_53], %90 {strides = array<i32>} : memref<1x1x4xf32, #tpu.memory_space<vmem>>, vector<1x1x4xf32>,
    %92 = arith.mulf %86, %86 : vector<4x256xf32>
    %cst_54 = arith.constant dense<0.000000e+00> : vector<4xf32>
    %93 = vector.multi_reduction <add>, %92, %cst_54 [1] : vector<4x256xf32> to vector<4xf32>
    %94 = vector.shape_cast %93 : vector<4xf32> to vector<1x1x4xf32>
    %c0_55 = arith.constant 0 : index
    %c0_56 = arith.constant 0 : index
    %c0_57 = arith.constant 0 : index
    %95 = vector.load %arg8[%c0_55, %c0_56, %c0_57] : memref<1x1x4xf32, #tpu.memory_space<vmem>>, vector<1x1x4xf32>
    tpu.vector_store %arg8[%c0_55, %c0_56, %c0_57], %94 {strides = array<i32>} : memref<1x1x4xf32, #tpu.memory_space<vmem>>, vector<1x1x4xf32>,
    return
  }
  func.func @transform_0(%arg0: i32) -> (i32, i32, i32) {
    %c0_i32 = arith.constant 0 : i32
    %c0_i32_0 = arith.constant 0 : i32
    %c0_i32_1 = arith.constant 0 : i32
    return %arg0, %c0_i32, %c0_i32_0 : i32, i32, i32
  }
  func.func @transform_1(%arg0: i32) -> (i32, i32, i32) {
    %c0_i32 = arith.constant 0 : i32
    %c0_i32_0 = arith.constant 0 : i32
    %c0_i32_1 = arith.constant 0 : i32
    return %arg0, %c0_i32, %c0_i32_0 : i32, i32, i32
  }
  func.func @transform_2(%arg0: i32) -> (i32, i32, i32) {
    %c0_i32 = arith.constant 0 : i32
    %c0_i32_0 = arith.constant 0 : i32
    %c0_i32_1 = arith.constant 0 : i32
    return %arg0, %c0_i32, %c0_i32_0 : i32, i32, i32
  }
  func.func @transform_3(%arg0: i32) -> (i32, i32, i32) {
    %c0_i32 = arith.constant 0 : i32
    %c0_i32_0 = arith.constant 0 : i32
    %c0_i32_1 = arith.constant 0 : i32
    %c0_i32_2 = arith.constant 0 : i32
    return %c0_i32, %c0_i32_0, %c0_i32_1 : i32, i32, i32
  }
  func.func @transform_4(%arg0: i32) -> (i32, i32) {
    %c0_i32 = arith.constant 0 : i32
    %c0_i32_0 = arith.constant 0 : i32
    %c0_i32_1 = arith.constant 0 : i32
    return %c0_i32, %c0_i32_0 : i32, i32
  }
  func.func @transform_5(%arg0: i32) -> (i32, i32, i32) {
    %c0_i32 = arith.constant 0 : i32
    %c0_i32_0 = arith.constant 0 : i32
    %c0_i32_1 = arith.constant 0 : i32
    return %arg0, %c0_i32, %c0_i32_0 : i32, i32, i32
  }
  func.func @transform_6(%arg0: i32) -> (i32, i32, i32) {
    %c0_i32 = arith.constant 0 : i32
    %c0_i32_0 = arith.constant 0 : i32
    %c0_i32_1 = arith.constant 0 : i32
    return %arg0, %c0_i32, %c0_i32_0 : i32, i32, i32
  }
  func.func @transform_7(%arg0: i32) -> (i32, i32, i32) {
    %c0_i32 = arith.constant 0 : i32
    %c0_i32_0 = arith.constant 0 : i32
    %c0_i32_1 = arith.constant 0 : i32
    return %arg0, %c0_i32, %c0_i32_0 : i32, i32, i32
  }
}

module attributes {stable_mosaic.version = 11 : i64} {
  func.func @_conv1x1_leaky_kernel(%arg0: i32, %arg1: i32, %arg2: memref<1x8x128xf32, #tpu.memory_space<vmem>>, %arg3: memref<16x8xf32, #tpu.memory_space<vmem>>, %arg4: memref<16x1xf32, #tpu.memory_space<vmem>>, %arg5: memref<1x16x128xf32, #tpu.memory_space<vmem>>) attributes {dimension_semantics = [#tpu.dimension_semantics<parallel>, #tpu.dimension_semantics<parallel>], iteration_bounds = array<i64: 2, 1>, scalar_prefetch = 0 : i64, scratch_operands = 0 : i64, tpu.core_type = #tpu.core_type<tc>, window_params = [{transform_indices = @transform_0, window_bounds = array<i64: 1, 8, 128>}, {pipeline_mode = #tpu.pipeline_mode<synchronous>, transform_indices = @transform_1, window_bounds = array<i64: 16, 8>}, {pipeline_mode = #tpu.pipeline_mode<synchronous>, transform_indices = @transform_2, window_bounds = array<i64: 16, 1>}, {transform_indices = @transform_3, window_bounds = array<i64: 1, 16, 128>}]} {
    %c0 = arith.constant 0 : index
    %c0_0 = arith.constant 0 : index
    %0 = vector.load %arg3[%c0, %c0_0] : memref<16x8xf32, #tpu.memory_space<vmem>>, vector<16x8xf32>
    %c0_1 = arith.constant 0 : index
    %c0_2 = arith.constant 0 : index
    %c0_3 = arith.constant 0 : index
    %1 = vector.load %arg2[%c0_1, %c0_2, %c0_3] : memref<1x8x128xf32, #tpu.memory_space<vmem>>, vector<1x8x128xf32>
    %2 = vector.shape_cast %1 : vector<1x8x128xf32> to vector<8x128xf32>
    %cst = arith.constant dense<0.000000e+00> : vector<16x128xf32>
    %3 = tpu.matmul %0, %2, %cst {dimension_numbers = #tpu.dot_dimension_numbers<[1], [0], [0], [1], [0, 0, 1, 1], [], []>} : vector<16x8xf32>, vector<8x128xf32>, vector<16x128xf32> -> vector<16x128xf32>
    %c0_4 = arith.constant 0 : index
    %c0_5 = arith.constant 0 : index
    %4 = vector.load %arg4[%c0_4, %c0_5] : memref<16x1xf32, #tpu.memory_space<vmem>>, vector<16x1xf32>
    %5 = vector.broadcast %4 : vector<16x1xf32> to vector<16x128xf32>
    %6 = arith.addf %3, %5 : vector<16x128xf32>
    %cst_6 = arith.constant 0.000000e+00 : f32
    %7 = vector.broadcast %cst_6 : f32 to vector<16x128xf32>
    %8 = arith.cmpf ogt, %6, %7 : vector<16x128xf32>
    %cst_7 = arith.constant 0.00999999977 : f32
    %9 = vector.broadcast %cst_7 : f32 to vector<16x128xf32>
    %10 = arith.mulf %9, %6 : vector<16x128xf32>
    %11 = arith.select %8, %6, %10 : vector<16x128xi1>, vector<16x128xf32>
    %12 = vector.shape_cast %11 : vector<16x128xf32> to vector<1x16x128xf32>
    %c0_8 = arith.constant 0 : index
    %c0_9 = arith.constant 0 : index
    %c0_10 = arith.constant 0 : index
    %13 = vector.load %arg5[%c0_8, %c0_9, %c0_10] : memref<1x16x128xf32, #tpu.memory_space<vmem>>, vector<1x16x128xf32>
    tpu.vector_store %arg5[%c0_8, %c0_9, %c0_10], %12 {strides = array<i32>} : memref<1x16x128xf32, #tpu.memory_space<vmem>>, vector<1x16x128xf32>,
    return
  }
  func.func @transform_0(%arg0: i32, %arg1: i32) -> (i32, i32, i32) {
    %c0_i32 = arith.constant 0 : i32
    %c0_i32_0 = arith.constant 0 : i32
    return %arg0, %c0_i32, %arg1 : i32, i32, i32
  }
  func.func @transform_1(%arg0: i32, %arg1: i32) -> (i32, i32) {
    %c0_i32 = arith.constant 0 : i32
    %c0_i32_0 = arith.constant 0 : i32
    %c0_i32_1 = arith.constant 0 : i32
    return %c0_i32, %c0_i32_0 : i32, i32
  }
  func.func @transform_2(%arg0: i32, %arg1: i32) -> (i32, i32) {
    %c0_i32 = arith.constant 0 : i32
    %c0_i32_0 = arith.constant 0 : i32
    %c0_i32_1 = arith.constant 0 : i32
    return %c0_i32, %c0_i32_0 : i32, i32
  }
  func.func @transform_3(%arg0: i32, %arg1: i32) -> (i32, i32, i32) {
    %c0_i32 = arith.constant 0 : i32
    %c0_i32_0 = arith.constant 0 : i32
    return %arg0, %c0_i32, %arg1 : i32, i32, i32
  }
}

module attributes {stable_mosaic.version = 11 : i64} {
  func.func @_conv1x1_sn_res_kernel(%arg0: i32, %arg1: i32, %arg2: memref<1x8x128xf32, #tpu.memory_space<vmem>>, %arg3: memref<1x8x1xf32, #tpu.memory_space<vmem>>, %arg4: memref<1x8x1xf32, #tpu.memory_space<vmem>>, %arg5: memref<16x8xf32, #tpu.memory_space<vmem>>, %arg6: memref<16x1xf32, #tpu.memory_space<vmem>>, %arg7: memref<1x16x128xf32, #tpu.memory_space<vmem>>, %arg8: memref<1x16x128xf32, #tpu.memory_space<vmem>>) attributes {dimension_semantics = [#tpu.dimension_semantics<parallel>, #tpu.dimension_semantics<parallel>], iteration_bounds = array<i64: 2, 1>, scalar_prefetch = 0 : i64, scratch_operands = 0 : i64, tpu.core_type = #tpu.core_type<tc>, window_params = [{transform_indices = @transform_0, window_bounds = array<i64: 1, 8, 128>}, {transform_indices = @transform_1, window_bounds = array<i64: 1, 8, 1>}, {transform_indices = @transform_2, window_bounds = array<i64: 1, 8, 1>}, {pipeline_mode = #tpu.pipeline_mode<synchronous>, transform_indices = @transform_3, window_bounds = array<i64: 16, 8>}, {pipeline_mode = #tpu.pipeline_mode<synchronous>, transform_indices = @transform_4, window_bounds = array<i64: 16, 1>}, {transform_indices = @transform_5, window_bounds = array<i64: 1, 16, 128>}, {transform_indices = @transform_6, window_bounds = array<i64: 1, 16, 128>}]} {
    %c0 = arith.constant 0 : index
    %c0_0 = arith.constant 0 : index
    %c0_1 = arith.constant 0 : index
    %0 = vector.load %arg2[%c0, %c0_0, %c0_1] : memref<1x8x128xf32, #tpu.memory_space<vmem>>, vector<1x8x128xf32>
    %1 = vector.shape_cast %0 : vector<1x8x128xf32> to vector<8x128xf32>
    %c0_2 = arith.constant 0 : index
    %c0_3 = arith.constant 0 : index
    %c0_4 = arith.constant 0 : index
    %2 = vector.load %arg3[%c0_2, %c0_3, %c0_4] : memref<1x8x1xf32, #tpu.memory_space<vmem>>, vector<1x8x1xf32>
    %3 = vector.shape_cast %2 : vector<1x8x1xf32> to vector<8x1xf32>
    %4 = vector.broadcast %3 : vector<8x1xf32> to vector<8x128xf32>
    %5 = arith.mulf %1, %4 : vector<8x128xf32>
    %c0_5 = arith.constant 0 : index
    %c0_6 = arith.constant 0 : index
    %c0_7 = arith.constant 0 : index
    %6 = vector.load %arg4[%c0_5, %c0_6, %c0_7] : memref<1x8x1xf32, #tpu.memory_space<vmem>>, vector<1x8x1xf32>
    %7 = vector.shape_cast %6 : vector<1x8x1xf32> to vector<8x1xf32>
    %8 = vector.broadcast %7 : vector<8x1xf32> to vector<8x128xf32>
    %9 = arith.addf %5, %8 : vector<8x128xf32>
    %cst = arith.constant 0.000000e+00 : f32
    %10 = vector.broadcast %cst : f32 to vector<8x128xf32>
    %11 = arith.cmpf ogt, %9, %10 : vector<8x128xf32>
    %cst_8 = arith.constant 0.00999999977 : f32
    %12 = vector.broadcast %cst_8 : f32 to vector<8x128xf32>
    %13 = arith.mulf %12, %9 : vector<8x128xf32>
    %14 = arith.select %11, %9, %13 : vector<8x128xi1>, vector<8x128xf32>
    %c0_9 = arith.constant 0 : index
    %c0_10 = arith.constant 0 : index
    %15 = vector.load %arg5[%c0_9, %c0_10] : memref<16x8xf32, #tpu.memory_space<vmem>>, vector<16x8xf32>
    %cst_11 = arith.constant dense<0.000000e+00> : vector<16x128xf32>
    %16 = tpu.matmul %15, %14, %cst_11 {dimension_numbers = #tpu.dot_dimension_numbers<[1], [0], [0], [1], [0, 0, 1, 1], [], []>} : vector<16x8xf32>, vector<8x128xf32>, vector<16x128xf32> -> vector<16x128xf32>
    %c0_12 = arith.constant 0 : index
    %c0_13 = arith.constant 0 : index
    %17 = vector.load %arg6[%c0_12, %c0_13] : memref<16x1xf32, #tpu.memory_space<vmem>>, vector<16x1xf32>
    %18 = vector.broadcast %17 : vector<16x1xf32> to vector<16x128xf32>
    %19 = arith.addf %16, %18 : vector<16x128xf32>
    %c0_14 = arith.constant 0 : index
    %c0_15 = arith.constant 0 : index
    %c0_16 = arith.constant 0 : index
    %20 = vector.load %arg7[%c0_14, %c0_15, %c0_16] : memref<1x16x128xf32, #tpu.memory_space<vmem>>, vector<1x16x128xf32>
    %21 = vector.shape_cast %20 : vector<1x16x128xf32> to vector<16x128xf32>
    %22 = arith.addf %19, %21 : vector<16x128xf32>
    %23 = vector.shape_cast %22 : vector<16x128xf32> to vector<1x16x128xf32>
    %c0_17 = arith.constant 0 : index
    %c0_18 = arith.constant 0 : index
    %c0_19 = arith.constant 0 : index
    %24 = vector.load %arg8[%c0_17, %c0_18, %c0_19] : memref<1x16x128xf32, #tpu.memory_space<vmem>>, vector<1x16x128xf32>
    tpu.vector_store %arg8[%c0_17, %c0_18, %c0_19], %23 {strides = array<i32>} : memref<1x16x128xf32, #tpu.memory_space<vmem>>, vector<1x16x128xf32>,
    return
  }
  func.func @transform_0(%arg0: i32, %arg1: i32) -> (i32, i32, i32) {
    %c0_i32 = arith.constant 0 : i32
    %c0_i32_0 = arith.constant 0 : i32
    return %arg0, %c0_i32, %arg1 : i32, i32, i32
  }
  func.func @transform_1(%arg0: i32, %arg1: i32) -> (i32, i32, i32) {
    %c0_i32 = arith.constant 0 : i32
    %c0_i32_0 = arith.constant 0 : i32
    %c0_i32_1 = arith.constant 0 : i32
    return %arg0, %c0_i32, %c0_i32_0 : i32, i32, i32
  }
  func.func @transform_2(%arg0: i32, %arg1: i32) -> (i32, i32, i32) {
    %c0_i32 = arith.constant 0 : i32
    %c0_i32_0 = arith.constant 0 : i32
    %c0_i32_1 = arith.constant 0 : i32
    return %arg0, %c0_i32, %c0_i32_0 : i32, i32, i32
  }
  func.func @transform_3(%arg0: i32, %arg1: i32) -> (i32, i32) {
    %c0_i32 = arith.constant 0 : i32
    %c0_i32_0 = arith.constant 0 : i32
    %c0_i32_1 = arith.constant 0 : i32
    return %c0_i32, %c0_i32_0 : i32, i32
  }
  func.func @transform_4(%arg0: i32, %arg1: i32) -> (i32, i32) {
    %c0_i32 = arith.constant 0 : i32
    %c0_i32_0 = arith.constant 0 : i32
    %c0_i32_1 = arith.constant 0 : i32
    return %c0_i32, %c0_i32_0 : i32, i32
  }
  func.func @transform_5(%arg0: i32, %arg1: i32) -> (i32, i32, i32) {
    %c0_i32 = arith.constant 0 : i32
    %c0_i32_0 = arith.constant 0 : i32
    return %arg0, %c0_i32, %arg1 : i32, i32, i32
  }
  func.func @transform_6(%arg0: i32, %arg1: i32) -> (i32, i32, i32) {
    %c0_i32 = arith.constant 0 : i32
    %c0_i32_0 = arith.constant 0 : i32
    return %arg0, %c0_i32, %arg1 : i32, i32, i32
  }
}

</mosaic_0001>

<llo_original>
// kernel: squeeze.16
$region0: #{squeeze.16}
  %s0 = inlined_call_operand.vmem [shape: f32[2,8], index: 0, kind: input, shape index: {}]
  %s1 = inlined_call_operand.vmem [shape: f32[2,4,2], index: 1, kind: output, shape index: {}]
  $region1: #{squeeze.16} parent=0
    #allocation0 [shape = 'u8[8192]{0}', space=vmem, size = 0x2000, scoped, tag = 'scoped mem for output reshape']
    #allocation1 [shape = 'u8[4096]{0}', space=vmem, size = 0x1000, scoped, tag = 'scoped mem for input reshape']
    %s3 = sshllo.u32 0, 2
    %v4 = vld [vmem:[%s0] sm:%s3]
    %5 = vst [vmem:[#allocation1] sm:%s3] %v4
    %v6 = vld [vmem:[#allocation1] sm:$0x3]
    %vm7 = vcmask 15360
    %8 = vst.msk [vmem:[#allocation0] ss:$8 sm:$0x3] %vm7, %v6
    %v9 = vld [vmem:[#allocation1] sm:$0x3]
    %10 = vrot.lane.b32.xlu0 %v9, 126
    %v11 = vpop.permute.xlu0 %10
    %vm12 = vcmask 15360
    %s13 = scalar_lea.vmem [#allocation0], 1
    %14 = vst.msk [vmem:[%s13] ss:$8 sm:$0x3] %vm12, %v11
    %v15 = vld [vmem:[#allocation1] sm:$0x3]
    %16 = vrot.lane.b32.xlu0 %v15, 124
    %v17 = vpop.permute.xlu0 %16
    %vm18 = vcmask 15360
    %s19 = scalar_lea.vmem [#allocation0], 2
    %20 = vst.msk [vmem:[%s19] ss:$8 sm:$0x3] %vm18, %v17
    %v21 = vld [vmem:[#allocation1] sm:$0x3]
    %22 = vrot.lane.b32.xlu0 %v21, 122
    %v23 = vpop.permute.xlu0 %22
    %vm24 = vcmask 15360
    %s25 = scalar_lea.vmem [#allocation0], 3
    %26 = vst.msk [vmem:[%s25] ss:$8 sm:$0x3] %vm24, %v23
    %s28 = sshllo.u32 0, 4
    %v30 = vld [vmem:[#allocation0] sm:%s28]
    %s31 = sshllo.u32 0, 4
    %32 = vst [vmem:[%s1] sm:%s31] %v30
    %s33 = scalar_lea.vmem [#allocation0], 8
    %v34 = vld [vmem:[%s33] sm:%s28]
    %s35 = sshllo.u32 0, 4
    %s36 = scalar_lea.vmem %s1, 4
    %37 = vst [vmem:[%s36] sm:%s35] %v34

// kernel: residual_block_with_switchnorm.7
$region0: #{residual_block_with_switchnorm.7}
  #allocation0 [shape = 'u32[]', space=smem, size = 0x4, offset = 0x4, fixed_abs, tag = 'smem constant byte address 0x4 - core index']
  #allocation1 [shape = 'u32[144,128]{1,0:T(1,128)}', space=vmem, size = 0x12000, scoped, tag = 'internal scratch']
  #allocation2 [shape = 'f32[8,128]{1,0:T(8,128)}', space=vmem, size = 0x1000, scoped, tag = 'scratch operand']
  #allocation3 [shape = 'f32[8,128]{1,0:T(8,128)}', space=vmem, size = 0x1000, scoped, tag = 'scratch operand']
  %s0 = inlined_call_operand.vmem [shape: f32[2,8,128], index: 0, kind: input, shape index: {}]
  %s1 = inlined_call_operand.vmem [shape: f32[2,1,8], index: 1, kind: output, shape index: {0}]
  %s2 = inlined_call_operand.vmem [shape: f32[2,1,8], index: 2, kind: output, shape index: {1}]
  %3 = xla_tuple %s1, %s2
  %s4 = sld [smem:[#allocation0]]
  $region53: #{residual_block_with_switchnorm.7} parent=0
    _
  %s6 = ssub.s32 1, %s4
  %s7 = scalar_select 0, %s6, %s4
  loop: start=0, step=1, limit=4
  $region2: #{residual_block_with_switchnorm.7} parent=0 // loop_pre_header
    _
  $region3: #{residual_block_with_switchnorm.7} parent=0 // loop_header
    %s9 = sphi 0, %s13
    %p10 = scmp.ge.s32.totalorder %s9, 4
    %s16 = sphi 0, %s28
    %s17 = sphi 0, %s24
    %s18 = sphi 0, %s16
    %s19 = sphi 0, %s17
    %s20 = sphi 0, %s18
    %s21 = sphi 0, %s19
    %s33 = sphi 0, %s35
    %s36 = sphi 0, %s33
    %s37 = sphi 0, %s36
    %s53 = sphi 0, %s37
    %s59 = sphi 0, %s61
    %s62 = sphi 0, %s59
    %s63 = sphi 0, %s62
    %s79 = sphi 0, %s63
    %s85 = sphi 0, %s87
    %s88 = sphi 0, %s85
    %s89 = sphi 0, %s88
    %s105 = sphi 0, %s89
  $region4: #{residual_block_with_switchnorm.7} parent=0 // loop_header_branch
    %12 = sbr.rel (%p10) target = $region8
  $region5: #{residual_block_with_switchnorm.7} parent=0 // loop_body
    %s14 = ssub.s32 %s9, 1
    %s15 = ssub.s32 %s9, 2
    %s22 = sadd.s32 1, %s17
    %p23 = scmp.ge.s32.totalorder %s22, 1
    %s24 = scalar_select %p23, 0, %s22
    %s25 = sadd.s32 1, %s16
    %s26 = scalar_select %p23, %s25, %s16
    %p27 = scmp.ge.s32.totalorder %s26, 2
    %s28 = scalar_select %p27, 0, %s26
    %s29 = ssub.s32 %s16, %s28
    %s30 = ssub.s32 %s17, %s24
    %s31 = sor.u32 %s29, %s30
    %p32 = scmp.eq.s32.totalorder %s31, 0
    %s34 = sadd.s32 %s33, 1
    %s35 = scalar_select %p32, %s33, %s34
    %p38 = pneg %p32
    %p39 = scmp.eq.s32.totalorder %s9, 1
    %p40 = por %p38, %p39
    %p41 = scmp.ne.s32.totalorder %s33, %s36
    %p42 = scmp.eq.s32.totalorder %s9, 0
    %p43 = por %p41, %p42
    %p44 = scmp.ne.s32.totalorder %s33, %s36
    %p45 = scmp.eq.s32.totalorder %s14, 1
    %p46 = por %p44, %p45
    %p47 = scmp.ne.s32.totalorder %s36, %s37
    %p48 = scmp.eq.s32.totalorder %s14, 0
    %p49 = por %p47, %p48
    %p50 = scmp.ne.s32.totalorder %s36, %s37
    %p51 = scmp.eq.s32.totalorder %s15, 1
    %p52 = por %p50, %p51
    %p54 = scmp.ne.s32.totalorder %s37, %s53
    %p55 = scmp.eq.s32.totalorder %s15, 0
    %p56 = por %p54, %p55
    %s57 = ssub.s32 %s16, %s28
    %p58 = scmp.eq.s32.totalorder %s57, 0
    %s60 = sadd.s32 %s59, 1
    %s61 = scalar_select %p58, %s59, %s60
    %p64 = pneg %p58
    %p65 = scmp.eq.s32.totalorder %s9, 1
    %p66 = por %p64, %p65
    %p67 = scmp.ne.s32.totalorder %s59, %s62
    %p68 = scmp.eq.s32.totalorder %s9, 0
    %p69 = por %p67, %p68
    %p70 = scmp.ne.s32.totalorder %s59, %s62
    %p71 = scmp.eq.s32.totalorder %s14, 1
    %p72 = por %p70, %p71
    %p73 = scmp.ne.s32.totalorder %s62, %s63
    %p74 = scmp.eq.s32.totalorder %s14, 0
    %p75 = por %p73, %p74
    %p76 = scmp.ne.s32.totalorder %s62, %s63
    %p77 = scmp.eq.s32.totalorder %s15, 1
    %p78 = por %p76, %p77
    %p80 = scmp.ne.s32.totalorder %s63, %s79
    %p81 = scmp.eq.s32.totalorder %s15, 0
    %p82 = por %p80, %p81
    %s83 = ssub.s32 %s16, %s28
    %p84 = scmp.eq.s32.totalorder %s83, 0
    %s86 = sadd.s32 %s85, 1
    %s87 = scalar_select %p84, %s85, %s86
    %p90 = pneg %p84
    %p91 = scmp.eq.s32.totalorder %s9, 1
    %p92 = por %p90, %p91
    %p93 = scmp.ne.s32.totalorder %s85, %s88
    %p94 = scmp.eq.s32.totalorder %s9, 0
    %p95 = por %p93, %p94
    %p96 = scmp.ne.s32.totalorder %s85, %s88
    %p97 = scmp.eq.s32.totalorder %s14, 1
    %p98 = por %p96, %p97
    %p99 = scmp.ne.s32.totalorder %s88, %s89
    %p100 = scmp.eq.s32.totalorder %s14, 0
    %p101 = por %p99, %p100
    %p102 = scmp.ne.s32.totalorder %s88, %s89
    %p103 = scmp.eq.s32.totalorder %s15, 1
    %p104 = por %p102, %p103
    %p106 = scmp.ne.s32.totalorder %s89, %s105
    %p107 = scmp.eq.s32.totalorder %s15, 0
    %p108 = por %p106, %p107
    %p109 = scmp.le.s32.totalorder 1, %s9
    %p110 = scmp.lt.s32.totalorder %s9, 3
    %p111 = pnand %p109, %p110
    %p112 = pneg %p111
    // Predicated region
    $region9: #{residual_block_with_switchnorm.7} parent=5 // pred_check
      _
    $region10: #{residual_block_with_switchnorm.7} parent=5 // pred_check_branch
      %114 = sbr.rel (%p111) target = $region12
    $region11: #{residual_block_with_switchnorm.7} parent=5 // pred_region
      %s115 = ssub.s32 %s9, 1
    $region12: #{residual_block_with_switchnorm.7} parent=5 // pred_fallthru
      _
    %p116 = scmp.lt.s32.totalorder %s9, 2
    // Predicated region
    $region13: #{residual_block_with_switchnorm.7} parent=5 // pred_check
      %p117 = pneg %p116
    $region14: #{residual_block_with_switchnorm.7} parent=5 // pred_check_branch
      %119 = sbr.rel (%p117) target = $region16
    $region15: #{residual_block_with_switchnorm.7} parent=5 // pred_region
      // Predicated region
      $region17: #{residual_block_with_switchnorm.7} parent=15 // pred_check
        %p120 = pneg %p43
      $region18: #{residual_block_with_switchnorm.7} parent=15 // pred_check_branch
        %122 = sbr.rel (%p120) target = $region20
      $region19: #{residual_block_with_switchnorm.7} parent=15 // pred_region
        %p123 = scmp.lt.s32.totalorder %s16, 1
        %s124 = scalar_select %p123, %s16, 1
        %p125 = scmp.lt.s32.totalorder %s17, 0
        %s126 = scalar_select %p125, %s17, 0
        %s127 = sadd.s32 %s126, %s124
        %s128 = smul.addr %s127, 8
        %s129 = scalar_lea.vmem %s0, %s128
      $region20: #{residual_block_with_switchnorm.7} parent=15 // pred_fallthru
        _
    $region16: #{residual_block_with_switchnorm.7} parent=5 // pred_fallthru
      _
    %p130 = scmp.le.s32.totalorder 1, %s9
    %p131 = scmp.lt.s32.totalorder %s9, 3
    %p132 = pnand %p130, %p131
    %p133 = pneg %p132
    // Predicated region
    $region21: #{residual_block_with_switchnorm.7} parent=5 // pred_check
      _
    $region22: #{residual_block_with_switchnorm.7} parent=5 // pred_check_branch
      %135 = sbr.rel (%p132) target = $region24
    $region23: #{residual_block_with_switchnorm.7} parent=5 // pred_region
      %s136 = ssub.s32 %s9, 1
      %p137 = scmp.lt.s32.totalorder %s18, 1
      %s138 = scalar_select %p137, %s18, 1
      %p139 = scmp.lt.s32.totalorder %s19, 0
      %s140 = scalar_select %p139, %s19, 0
      %s141 = sadd.s32 %s140, %s138
      %s142 = smul.addr %s141, 8
      %s143 = scalar_lea.vmem %s0, %s142
      %p144 = pneg %p49
      %p145 = pneg %p46
      %p146 = pneg %p75
      %p147 = pneg %p72
      %p148 = scmp.lt.s32.totalorder %s18, 1
      %s149 = scalar_select %p148, %s18, 1
      %s150 = scalar_lea.vmem %s1, %s149
      %p151 = pneg %p101
      %p152 = pneg %p98
      %p153 = scmp.lt.s32.totalorder %s18, 1
      %s154 = scalar_select %p153, %s18, 1
      %s155 = scalar_lea.vmem %s2, %s154
      %p156 = scmp.lt.s32.totalorder %s18, 1
      %s157 = scalar_select %p156, %s18, 1
      %p158 = scmp.lt.s32.totalorder %s19, 0
      %s159 = scalar_select %p158, %s19, 0
      %s160 = sadd.s32 %s159, %s157
      %s161 = smul.addr %s160, 8
      %s162 = scalar_lea.vmem %s0, %s161
      %p163 = scmp.lt.s32.totalorder %s18, 1
      %s164 = scalar_select %p163, %s18, 1
      %s165 = scalar_lea.vmem %s1, %s164
      %p166 = scmp.lt.s32.totalorder %s18, 1
      %s167 = scalar_select %p166, %s18, 1
      %s168 = scalar_lea.vmem %s2, %s167
      %p169 = scmp.eq.s32.totalorder %s19, 0
      // Predicated region
      $region25: #{residual_block_with_switchnorm.7} parent=23 // pred_check
        %p170 = pneg %p169
      $region26: #{residual_block_with_switchnorm.7} parent=23 // pred_check_branch
        %172 = sbr.rel (%p170) target = $region28
      $region27: #{residual_block_with_switchnorm.7} parent=23 // pred_region
        %173 = vst [vmem:[#allocation2] sm:$0xff] 0.0
        %174 = vst [vmem:[#allocation3] sm:$0xff] 0.0
      $region28: #{residual_block_with_switchnorm.7} parent=23 // pred_fallthru
        _
      %v175 = vld [vmem:[%s162] sm:$0xff]
      %v176 = vld [vmem:[#allocation2] sm:$0xff]
      %v177 = vadd.f32 %v176, %v175
      %178 = vst [vmem:[#allocation2] sm:$0xff] %v177
      %v179 = vld [vmem:[#allocation3] sm:$0xff]
      %v180 = vmul.f32 %v175, %v175
      %v181 = vadd.f32 %v179, %v180
      %182 = vst [vmem:[#allocation3] sm:$0xff] %v181
      // Predicated region
      $region29: #{residual_block_with_switchnorm.7} parent=23 // pred_check
        %p183 = pneg %p169
      $region30: #{residual_block_with_switchnorm.7} parent=23 // pred_check_branch
        %185 = sbr.rel (%p183) target = $region32
      $region31: #{residual_block_with_switchnorm.7} parent=23 // pred_region
        %v186 = vld [vmem:[#allocation2] sm:$0xff]
        %187 = vadd.xlane.f32.xlu0 %v186
        %v188 = vpop.xlane.xlu0 %187
        %v190 = vlaneseq
        %v191 = vand.u32 %v190, 127
        %v192 = vlaneseq
        %v193 = vshrl.u32 %v192, 7
        %v194 = vsub.s32 %v191, %v193
        %v195 = vrot.slane %v188, %v194
        %vm197 = vcmask 57344
        %198 = vst.msk [vmem:[%s165] sm:$0x1] %vm197, %v195
        %v199 = vld [vmem:[#allocation3] sm:$0xff]
        %200 = vadd.xlane.f32.xlu0 %v199
        %v201 = vpop.xlane.xlu0 %200
        %v203 = vlaneseq
        %v204 = vshrl.u32 %v203, 7
        %v205 = vsub.s32 %v191, %v204
        %v206 = vrot.slane %v201, %v205
        %208 = vst.msk [vmem:[%s168] sm:$0x1] %vm197, %v206
      $region32: #{residual_block_with_switchnorm.7} parent=23 // pred_fallthru
        _
      %p209 = scmp.lt.s32.totalorder %s18, 1
      %s210 = scalar_select %p209, %s18, 1
      %s211 = scalar_lea.vmem %s1, %s210
      %p212 = scmp.lt.s32.totalorder %s18, 1
      %s213 = scalar_select %p212, %s18, 1
      %s214 = scalar_lea.vmem %s2, %s213
      // Predicated region
      $region33: #{residual_block_with_switchnorm.7} parent=23 // pred_check
        %p215 = pneg %p72
      $region34: #{residual_block_with_switchnorm.7} parent=23 // pred_check_branch
        %217 = sbr.rel (%p215) target = $region36
      $region35: #{residual_block_with_switchnorm.7} parent=23 // pred_region
        _
      $region36: #{residual_block_with_switchnorm.7} parent=23 // pred_fallthru
        _
      // Predicated region
      $region37: #{residual_block_with_switchnorm.7} parent=23 // pred_check
        %p218 = pneg %p98
      $region38: #{residual_block_with_switchnorm.7} parent=23 // pred_check_branch
        %220 = sbr.rel (%p218) target = $region40
      $region39: #{residual_block_with_switchnorm.7} parent=23 // pred_region
        _
      $region40: #{residual_block_with_switchnorm.7} parent=23 // pred_fallthru
        _
    $region24: #{residual_block_with_switchnorm.7} parent=5 // pred_fallthru
      _
    %p221 = scmp.le.s32.totalorder 2, %s9
    // Predicated region
    $region41: #{residual_block_with_switchnorm.7} parent=5 // pred_check
      %p222 = pneg %p221
    $region42: #{residual_block_with_switchnorm.7} parent=5 // pred_check_branch
      %224 = sbr.rel (%p222) target = $region44
    $region43: #{residual_block_with_switchnorm.7} parent=5 // pred_region
      %s225 = ssub.s32 %s9, 2
      // Predicated region
      $region45: #{residual_block_with_switchnorm.7} parent=43 // pred_check
        %p226 = pneg %p78
      $region46: #{residual_block_with_switchnorm.7} parent=43 // pred_check_branch
        %228 = sbr.rel (%p226) target = $region48
      $region47: #{residual_block_with_switchnorm.7} parent=43 // pred_region
        %p229 = scmp.lt.s32.totalorder %s20, 1
        %s230 = scalar_select %p229, %s20, 1
        %s231 = scalar_lea.vmem %s1, %s230
      $region48: #{residual_block_with_switchnorm.7} parent=43 // pred_fallthru
        _
      // Predicated region
      $region49: #{residual_block_with_switchnorm.7} parent=43 // pred_check
        %p232 = pneg %p104
      $region50: #{residual_block_with_switchnorm.7} parent=43 // pred_check_branch
        %234 = sbr.rel (%p232) target = $region52
      $region51: #{residual_block_with_switchnorm.7} parent=43 // pred_region
        %p235 = scmp.lt.s32.totalorder %s20, 1
        %s236 = scalar_select %p235, %s20, 1
        %s237 = scalar_lea.vmem %s2, %s236
      $region52: #{residual_block_with_switchnorm.7} parent=43 // pred_fallthru
        _
    $region44: #{residual_block_with_switchnorm.7} parent=5 // pred_fallthru
      _
  $region6: #{residual_block_with_switchnorm.7} parent=0 // loop_footer
    %s13 = sadd.s32 1, %s9
  $region7: #{residual_block_with_switchnorm.7} parent=0 // loop_footer_branch
    %8 = sbr.rel target = $region3
  $region8: #{residual_block_with_switchnorm.7} parent=0 // loop_exit
    _

// kernel: residual_block_with_switchnorm.5
$region0: #{residual_block_with_switchnorm.5}
  #allocation0 [shape = 'u32[]', space=smem, size = 0x4, offset = 0x4, fixed_abs, tag = 'smem constant byte address 0x4 - core index']
  #allocation1 [shape = 'u32[144,128]{1,0:T(1,128)}', space=vmem, size = 0x12000, scoped, tag = 'internal scratch']
  %s0 = inlined_call_operand.vmem [shape: f32[2,4,256], index: 0, kind: input, shape index: {}]
  %s1 = inlined_call_operand.vmem [shape: f32[9,4,4], index: 1, kind: input, shape index: {}]
  %s2 = inlined_call_operand.vmem [shape: f32[4,1], index: 2, kind: input, shape index: {}]
  %s3 = inlined_call_operand.vmem [shape: f32[2,4,256], index: 3, kind: output, shape index: {}]
  %s4 = sld [smem:[#allocation0]]
  $region45: #{residual_block_with_switchnorm.5} parent=0
    _
  %s6 = ssub.s32 1, %s4
  %s7 = scalar_select 0, %s6, %s4
  loop: start=0, step=1, limit=4
  $region2: #{residual_block_with_switchnorm.5} parent=0 // loop_pre_header
    _
  $region3: #{residual_block_with_switchnorm.5} parent=0 // loop_header
    %s9 = sphi 0, %s13
    %p10 = scmp.ge.s32.totalorder %s9, 4
    %s19 = sphi 0, %s21
    %s22 = sphi 0, %s19
    %s23 = sphi 0, %s22
    %s39 = sphi 0, %s23
    %s43 = sphi 0, %s43
    %s45 = sphi 0, %s43
    %s46 = sphi 0, %s45
    %s60 = sphi 0, %s46
    %s64 = sphi 0, %s64
    %s66 = sphi 0, %s64
    %s67 = sphi 0, %s66
    %s81 = sphi 0, %s67
    %s87 = sphi 0, %s89
    %s90 = sphi 0, %s87
    %s91 = sphi 0, %s90
    %s107 = sphi 0, %s91
  $region4: #{residual_block_with_switchnorm.5} parent=0 // loop_header_branch
    %12 = sbr.rel (%p10) target = $region8
  $region5: #{residual_block_with_switchnorm.5} parent=0 // loop_body
    %s14 = ssub.s32 %s9, 1
    %s15 = ssub.s32 %s9, 2
    %s16 = sadd.s32 %s9, 1
    %s17 = ssub.s32 %s9, %s16
    %p18 = scmp.eq.s32.totalorder %s17, 0
    %s20 = sadd.s32 %s19, 1
    %s21 = scalar_select %p18, %s19, %s20
    %p24 = pneg %p18
    %p25 = scmp.eq.s32.totalorder %s9, 1
    %p26 = por %p24, %p25
    %p27 = scmp.ne.s32.totalorder %s19, %s22
    %p28 = scmp.eq.s32.totalorder %s9, 0
    %p29 = por %p27, %p28
    %p30 = scmp.ne.s32.totalorder %s19, %s22
    %p31 = scmp.eq.s32.totalorder %s14, 1
    %p32 = por %p30, %p31
    %p33 = scmp.ne.s32.totalorder %s22, %s23
    %p34 = scmp.eq.s32.totalorder %s14, 0
    %p35 = por %p33, %p34
    %p36 = scmp.ne.s32.totalorder %s22, %s23
    %p37 = scmp.eq.s32.totalorder %s15, 1
    %p38 = por %p36, %p37
    %p40 = scmp.ne.s32.totalorder %s23, %s39
    %p41 = scmp.eq.s32.totalorder %s15, 0
    %p42 = por %p40, %p41
    %s44 = sadd.s32 %s43, 1
    %p47 = scmp.eq.s32.totalorder %s9, 1
    %p48 = scmp.ne.s32.totalorder %s43, %s45
    %p49 = scmp.eq.s32.totalorder %s9, 0
    %p50 = por %p48, %p49
    %p51 = scmp.ne.s32.totalorder %s43, %s45
    %p52 = scmp.eq.s32.totalorder %s14, 1
    %p53 = por %p51, %p52
    %p54 = scmp.ne.s32.totalorder %s45, %s46
    %p55 = scmp.eq.s32.totalorder %s14, 0
    %p56 = por %p54, %p55
    %p57 = scmp.ne.s32.totalorder %s45, %s46
    %p58 = scmp.eq.s32.totalorder %s15, 1
    %p59 = por %p57, %p58
    %p61 = scmp.ne.s32.totalorder %s46, %s60
    %p62 = scmp.eq.s32.totalorder %s15, 0
    %p63 = por %p61, %p62
    %s65 = sadd.s32 %s64, 1
    %p68 = scmp.eq.s32.totalorder %s9, 1
    %p69 = scmp.ne.s32.totalorder %s64, %s66
    %p70 = scmp.eq.s32.totalorder %s9, 0
    %p71 = por %p69, %p70
    %p72 = scmp.ne.s32.totalorder %s64, %s66
    %p73 = scmp.eq.s32.totalorder %s14, 1
    %p74 = por %p72, %p73
    %p75 = scmp.ne.s32.totalorder %s66, %s67
    %p76 = scmp.eq.s32.totalorder %s14, 0
    %p77 = por %p75, %p76
    %p78 = scmp.ne.s32.totalorder %s66, %s67
    %p79 = scmp.eq.s32.totalorder %s15, 1
    %p80 = por %p78, %p79
    %p82 = scmp.ne.s32.totalorder %s67, %s81
    %p83 = scmp.eq.s32.totalorder %s15, 0
    %p84 = por %p82, %p83
    %s85 = ssub.s32 %s9, %s16
    %p86 = scmp.eq.s32.totalorder %s85, 0
    %s88 = sadd.s32 %s87, 1
    %s89 = scalar_select %p86, %s87, %s88
    %p92 = pneg %p86
    %p93 = scmp.eq.s32.totalorder %s9, 1
    %p94 = por %p92, %p93
    %p95 = scmp.ne.s32.totalorder %s87, %s90
    %p96 = scmp.eq.s32.totalorder %s9, 0
    %p97 = por %p95, %p96
    %p98 = scmp.ne.s32.totalorder %s87, %s90
    %p99 = scmp.eq.s32.totalorder %s14, 1
    %p100 = por %p98, %p99
    %p101 = scmp.ne.s32.totalorder %s90, %s91
    %p102 = scmp.eq.s32.totalorder %s14, 0
    %p103 = por %p101, %p102
    %p104 = scmp.ne.s32.totalorder %s90, %s91
    %p105 = scmp.eq.s32.totalorder %s15, 1
    %p106 = por %p104, %p105
    %p108 = scmp.ne.s32.totalorder %s91, %s107
    %p109 = scmp.eq.s32.totalorder %s15, 0
    %p110 = por %p108, %p109
    %p111 = scmp.le.s32.totalorder 1, %s9
    %p112 = scmp.lt.s32.totalorder %s9, 3
    %p113 = pnand %p111, %p112
    %p114 = pneg %p113
    // Predicated region
    $region9: #{residual_block_with_switchnorm.5} parent=5 // pred_check
      _
    $region10: #{residual_block_with_switchnorm.5} parent=5 // pred_check_branch
      %116 = sbr.rel (%p113) target = $region12
    $region11: #{residual_block_with_switchnorm.5} parent=5 // pred_region
      %s117 = ssub.s32 %s9, 1
      // Predicated region
      $region13: #{residual_block_with_switchnorm.5} parent=11 // pred_check
        %p118 = pneg %p56
      $region14: #{residual_block_with_switchnorm.5} parent=11 // pred_check_branch
        %120 = sbr.rel (%p118) target = $region16
      $region15: #{residual_block_with_switchnorm.5} parent=11 // pred_region
        _
      $region16: #{residual_block_with_switchnorm.5} parent=11 // pred_fallthru
        _
      // Predicated region
      $region17: #{residual_block_with_switchnorm.5} parent=11 // pred_check
        %p121 = pneg %p77
      $region18: #{residual_block_with_switchnorm.5} parent=11 // pred_check_branch
        %123 = sbr.rel (%p121) target = $region20
      $region19: #{residual_block_with_switchnorm.5} parent=11 // pred_region
        _
      $region20: #{residual_block_with_switchnorm.5} parent=11 // pred_fallthru
        _
    $region12: #{residual_block_with_switchnorm.5} parent=5 // pred_fallthru
      _
    %p124 = scmp.lt.s32.totalorder %s9, 2
    // Predicated region
    $region21: #{residual_block_with_switchnorm.5} parent=5 // pred_check
      %p125 = pneg %p124
    $region22: #{residual_block_with_switchnorm.5} parent=5 // pred_check_branch
      %127 = sbr.rel (%p125) target = $region24
    $region23: #{residual_block_with_switchnorm.5} parent=5 // pred_region
      // Predicated region
      $region25: #{residual_block_with_switchnorm.5} parent=23 // pred_check
        %p128 = pneg %p29
      $region26: #{residual_block_with_switchnorm.5} parent=23 // pred_check_branch
        %130 = sbr.rel (%p128) target = $region28
      $region27: #{residual_block_with_switchnorm.5} parent=23 // pred_region
        %p131 = scmp.lt.s32.totalorder %s9, 1
        %s132 = scalar_select %p131, %s9, 1
        %s133 = smul.addr %s132, 2
        %s134 = smul.addr %s133, 4
        %s135 = scalar_lea.vmem %s0, %s134
      $region28: #{residual_block_with_switchnorm.5} parent=23 // pred_fallthru
        _
    $region24: #{residual_block_with_switchnorm.5} parent=5 // pred_fallthru
      _
    %p136 = scmp.le.s32.totalorder 1, %s9
    %p137 = scmp.lt.s32.totalorder %s9, 3
    %p138 = pnand %p136, %p137
    %p139 = pneg %p138
    // Predicated region
    $region29: #{residual_block_with_switchnorm.5} parent=5 // pred_check
      _
    $region30: #{residual_block_with_switchnorm.5} parent=5 // pred_check_branch
      %141 = sbr.rel (%p138) target = $region32
    $region31: #{residual_block_with_switchnorm.5} parent=5 // pred_region
      %s142 = ssub.s32 %s9, 1
      %p143 = scmp.lt.s32.totalorder %s14, 1
      %s144 = scalar_select %p143, %s14, 1
      %s145 = smul.addr %s144, 2
      %s146 = smul.addr %s145, 4
      %s147 = scalar_lea.vmem %s0, %s146
      %p148 = pneg %p35
      %p149 = pneg %p32
      %p150 = pneg %p56
      %p151 = pneg %p53
      %p152 = pneg %p77
      %p153 = pneg %p74
      %p154 = pneg %p103
      %p155 = pneg %p100
      %p156 = scmp.lt.s32.totalorder %s14, 1
      %s157 = scalar_select %p156, %s14, 1
      %s158 = smul.addr %s157, 2
      %s159 = smul.addr %s158, 4
      %s160 = scalar_lea.vmem %s3, %s159
      %p161 = scmp.lt.s32.totalorder %s14, 1
      %s162 = scalar_select %p161, %s14, 1
      %s163 = smul.addr %s162, 2
      %s164 = smul.addr %s163, 4
      %s165 = scalar_lea.vmem %s0, %s164
      %p166 = scmp.lt.s32.totalorder %s14, 1
      %s167 = scalar_select %p166, %s14, 1
      %s168 = smul.addr %s167, 2
      %s169 = smul.addr %s168, 4
      %s170 = scalar_lea.vmem %s3, %s169
      %v171 = vld [vmem:[%s165] sm:$0xff]
      %v172 = vld [vmem:[%s2] sm:$0xf]
      %v173 = vlaneseq
      %v174 = vand.u32 %v173, 127
      %v175 = vadd.s32 %v174, 128
      %vm176 = vcmp.lt.s32.totalorder %v174, 0
      %v177 = vsub.s32 0, %v174
      %v178 = vsel %vm176, %v177, %v174
      %v179 = vshrl.u32 %v178, 4
      %v180 = vand.u32 %v178, 15
      %v181 = vsub.s32 0, %v180
      %v182 = vsel %vm176, %v181, %v180
      %vm183 = vcmp.lt.s32.totalorder %v175, 0
      %v184 = vsub.s32 0, %v175
      %v185 = vsel %vm183, %v184, %v175
      %v186 = vshrl.u32 %v185, 4
      %v187 = vand.u32 %v185, 15
      %v188 = vsub.s32 0, %v187
      %v189 = vsel %vm183, %v188, %v187
      %vm190 = vcmp.ne.s32.totalorder %v182, 0
      %vm191 = vcmp.ne.s32.totalorder %v189, 0
      %vm192 = vcmp.lt.s32.totalorder %v182, 0
      %vm193 = vcmp.lt.s32.totalorder %v189, 0
      %vm194 = vmand %vm192, %vm190
      %vm195 = vmand %vm193, %vm191
      %v196 = vadd.s32 %v182, 16
      %v197 = vadd.s32 %v189, 16
      %v198 = vsel %vm194, %v196, %v182
      %v199 = vsel %vm195, %v197, %v189
      %vm200 = vcmp.eq.s32.totalorder %v198, 0
      %vm201 = vcmp.eq.s32.totalorder %v199, 0
      %v203 = vcombine.high %v171, %v171
      %205 = vrot.lane.b32.xlu0 %v171, 1
      %v206 = vpop.permute.xlu0 %205
      %207 = vrot.lane.b32.xlu0 %v203, 1
      %v208 = vpop.permute.xlu0 %207
      %vm209 = vcmp.lt.s32.totalorder %v174, 1
      %v210 = vsel %vm209, %v206, %v208
      %v211 = vsel %vm209, %v208, %v206
      %v212 = vsel %vm200, %v171, %v211
      %v213 = vsel %vm201, %v203, %v210
      %vm214 = vcmp.eq.s32.totalorder %v198, 15
      %vm215 = vcmp.eq.s32.totalorder %v199, 15
      %216 = vrot.lane.b32.xlu0 %v171, 127
      %v217 = vpop.permute.xlu0 %216
      %218 = vrot.lane.b32.xlu0 %v203, 127
      %v219 = vpop.permute.xlu0 %218
      %vm220 = vcmp.lt.s32.totalorder %v174, 127
      %v221 = vsel %vm220, %v217, %v219
      %v222 = vsel %vm220, %v219, %v217
      %v223 = vsel %vm214, %v171, %v221
      %v224 = vsel %vm215, %v203, %v222
      %v225 = vld [vmem:[%s1] sm:$0xf]
      %s226 = scalar_lea.vmem %s1, 4
      %v227 = vld [vmem:[%s226] sm:$0xf]
      %vm228 = vcmask 31744
      %v230 = vsel %vm228, %v227, 0
      %vm232 = vcmask 1043456
      %v233 = vsel %vm232, %v171, 0
      %v235 = vsel %vm232, %v203, 0
      %237 = vmatprep.subr.mxu0 %v235
      %238 = vmatpush1.msra.mxu0 %v233
      %239 = vmatprep.subr.mxu0 0.0
      %240 = vmatpush1.msra.mxu0 0.0
      %241 = vmatprep.subr.mxu0 0.0
      %242 = vmatpush1.msra.mxu0 0.0
      %243 = vmatprep.subr.mxu0 0.0
      %244 = vmatpush1.msra.mxu0 0.0
      %245 = vmatprep.subr.mxu0 0.0
      %246 = vmatpush1.msra.mxu0 0.0
      %247 = vmatprep.subr.mxu0 0.0
      %248 = vmatpush1.msra.mxu0 0.0
      %249 = vmatprep.subr.mxu0 0.0
      %250 = vmatpush1.msra.mxu0 0.0
      %251 = vmatprep.subr.mxu0 0.0
      %252 = vmatpush1.msra.mxu0 0.0
      %253 = vmatprep.subr.mxu0 0.0
      %254 = vmatpush1.msra.mxu0 0.0
      %255 = vmatprep.subr.mxu0 0.0
      %256 = vmatpush1.msra.mxu0 0.0
      %257 = vmatprep.subr.mxu0 0.0
      %258 = vmatpush1.msra.mxu0 0.0
      %259 = vmatprep.subr.mxu0 0.0
      %260 = vmatpush1.msra.mxu0 0.0
      %261 = vmatprep.subr.mxu0 0.0
      %262 = vmatpush1.msra.mxu0 0.0
      %263 = vmatprep.subr.mxu0 0.0
      %264 = vmatpush1.msra.mxu0 0.0
      %265 = vmatprep.subr.mxu0 0.0
      %266 = vmatpush1.msra.mxu0 0.0
      %267 = vmatprep.subr.mxu0 0.0
      %268 = vmatpush1.msra.mxu0 0.0
      %269 = vmatprep.subr.mxu0 0.0
      %270 = vmatpush1.msra.mxu0 0.0
      %271 = vmatprep.subr.mxu0 0.0
      %272 = vmatpush1.msra.mxu0 0.0
      %273 = vmatprep.subr.mxu0 0.0
      %274 = vmatpush1.msra.mxu0 0.0
      %275 = vmatprep.subr.mxu0 0.0
      %276 = vmatpush1.msra.mxu0 0.0
      %277 = vmatprep.subr.mxu0 0.0
      %278 = vmatpush1.msra.mxu0 0.0
      %279 = vmatprep.subr.mxu0 0.0
      %280 = vmatpush1.msra.mxu0 0.0
      %281 = vmatprep.subr.mxu0 0.0
      %282 = vmatpush1.msra.mxu0 0.0
      %283 = vmatprep.subr.mxu0 0.0
      %284 = vmatpush1.msra.mxu0 0.0
      %285 = vmatprep.subr.mxu0 0.0
      %286 = vmatpush1.msra.mxu0 0.0
      %287 = vmatprep.subr.mxu0 0.0
      %288 = vmatpush1.msra.mxu0 0.0
      %289 = vmatprep.subr.mxu0 0.0
      %290 = vmatpush1.msra.mxu0 0.0
      %291 = vmatprep.subr.mxu0 0.0
      %292 = vmatpush1.msra.mxu0 0.0
      %293 = vmatprep.subr.mxu0 0.0
      %294 = vmatpush1.msra.mxu0 0.0
      %295 = vmatprep.subr.mxu0 0.0
      %296 = vmatpush1.msra.mxu0 0.0
      %297 = vmatprep.subr.mxu0 0.0
      %298 = vmatpush1.msra.mxu0 0.0
      %299 = vmatprep.subr.mxu0 0.0
      %300 = vmatpush1.msra.mxu0 0.0
      %301 = vmatprep.mubr.f32.mxu0 0.0
      %302 = vmatmul.mubr.f32.gmra.mrb[0].mxu0 %v230
      %v303 = vpop.f32.mrb[0].mxu0
      %v304 = vadd.f32 0.0, %v303
      %v305 = vpop.f32.mrb[0].mxu0
      %v306 = vadd.f32 0.0, %v305
      %307 = vdwg.mxu0
      %v309 = vsel %vm228, %v225, 0
      %v312 = vsel %vm232, %v212, 0
      %v315 = vsel %vm232, %v213, 0
      %317 = vmatprep.subr.mxu0 %v315
      %318 = vmatpush1.msra.mxu0 %v312
      %319 = vmatprep.subr.mxu0 0.0
      %320 = vmatpush1.msra.mxu0 0.0
      %321 = vmatprep.subr.mxu0 0.0
      %322 = vmatpush1.msra.mxu0 0.0
      %323 = vmatprep.subr.mxu0 0.0
      %324 = vmatpush1.msra.mxu0 0.0
      %325 = vmatprep.subr.mxu0 0.0
      %326 = vmatpush1.msra.mxu0 0.0
      %327 = vmatprep.subr.mxu0 0.0
      %328 = vmatpush1.msra.mxu0 0.0
      %329 = vmatprep.subr.mxu0 0.0
      %330 = vmatpush1.msra.mxu0 0.0
      %331 = vmatprep.subr.mxu0 0.0
      %332 = vmatpush1.msra.mxu0 0.0
      %333 = vmatprep.subr.mxu0 0.0
      %334 = vmatpush1.msra.mxu0 0.0
      %335 = vmatprep.subr.mxu0 0.0
      %336 = vmatpush1.msra.mxu0 0.0
      %337 = vmatprep.subr.mxu0 0.0
      %338 = vmatpush1.msra.mxu0 0.0
      %339 = vmatprep.subr.mxu0 0.0
      %340 = vmatpush1.msra.mxu0 0.0
      %341 = vmatprep.subr.mxu0 0.0
      %342 = vmatpush1.msra.mxu0 0.0
      %343 = vmatprep.subr.mxu0 0.0
      %344 = vmatpush1.msra.mxu0 0.0
      %345 = vmatprep.subr.mxu0 0.0
      %346 = vmatpush1.msra.mxu0 0.0
      %347 = vmatprep.subr.mxu0 0.0
      %348 = vmatpush1.msra.mxu0 0.0
      %349 = vmatprep.subr.mxu0 0.0
      %350 = vmatpush1.msra.mxu0 0.0
      %351 = vmatprep.subr.mxu0 0.0
      %352 = vmatpush1.msra.mxu0 0.0
      %353 = vmatprep.subr.mxu0 0.0
      %354 = vmatpush1.msra.mxu0 0.0
      %355 = vmatprep.subr.mxu0 0.0
      %356 = vmatpush1.msra.mxu0 0.0
      %357 = vmatprep.subr.mxu0 0.0
      %358 = vmatpush1.msra.mxu0 0.0
      %359 = vmatprep.subr.mxu0 0.0
      %360 = vmatpush1.msra.mxu0 0.0
      %361 = vmatprep.subr.mxu0 0.0
      %362 = vmatpush1.msra.mxu0 0.0
      %363 = vmatprep.subr.mxu0 0.0
      %364 = vmatpush1.msra.mxu0 0.0
      %365 = vmatprep.subr.mxu0 0.0
      %366 = vmatpush1.msra.mxu0 0.0
      %367 = vmatprep.subr.mxu0 0.0
      %368 = vmatpush1.msra.mxu0 0.0
      %369 = vmatprep.subr.mxu0 0.0
      %370 = vmatpush1.msra.mxu0 0.0
      %371 = vmatprep.subr.mxu0 0.0
      %372 = vmatpush1.msra.mxu0 0.0
      %373 = vmatprep.subr.mxu0 0.0
      %374 = vmatpush1.msra.mxu0 0.0
      %375 = vmatprep.subr.mxu0 0.0
      %376 = vmatpush1.msra.mxu0 0.0
      %377 = vmatprep.subr.mxu0 0.0
      %378 = vmatpush1.msra.mxu0 0.0
      %379 = vmatprep.subr.mxu0 0.0
      %380 = vmatpush1.msra.mxu0 0.0
      %381 = vmatprep.mubr.f32.mxu0 0.0
      %382 = vmatmul.mubr.f32.gmra.mrb[0].mxu0 %v309
      %v383 = vpop.f32.mrb[0].mxu0
      %v384 = vadd.f32 %v304, %v383
      %v385 = vpop.f32.mrb[0].mxu0
      %v386 = vadd.f32 %v306, %v385
      %387 = vdwg.mxu0
      %s388 = scalar_lea.vmem %s1, 8
      %v389 = vld [vmem:[%s388] sm:$0xf]
      %v391 = vsel %vm228, %v389, 0
      %v394 = vsel %vm232, %v223, 0
      %v397 = vsel %vm232, %v224, 0
      %399 = vmatprep.subr.mxu0 %v397
      %400 = vmatpush1.msra.mxu0 %v394
      %401 = vmatprep.subr.mxu0 0.0
      %402 = vmatpush1.msra.mxu0 0.0
      %403 = vmatprep.subr.mxu0 0.0
      %404 = vmatpush1.msra.mxu0 0.0
      %405 = vmatprep.subr.mxu0 0.0
      %406 = vmatpush1.msra.mxu0 0.0
      %407 = vmatprep.subr.mxu0 0.0
      %408 = vmatpush1.msra.mxu0 0.0
      %409 = vmatprep.subr.mxu0 0.0
      %410 = vmatpush1.msra.mxu0 0.0
      %411 = vmatprep.subr.mxu0 0.0
      %412 = vmatpush1.msra.mxu0 0.0
      %413 = vmatprep.subr.mxu0 0.0
      %414 = vmatpush1.msra.mxu0 0.0
      %415 = vmatprep.subr.mxu0 0.0
      %416 = vmatpush1.msra.mxu0 0.0
      %417 = vmatprep.subr.mxu0 0.0
      %418 = vmatpush1.msra.mxu0 0.0
      %419 = vmatprep.subr.mxu0 0.0
      %420 = vmatpush1.msra.mxu0 0.0
      %421 = vmatprep.subr.mxu0 0.0
      %422 = vmatpush1.msra.mxu0 0.0
      %423 = vmatprep.subr.mxu0 0.0
      %424 = vmatpush1.msra.mxu0 0.0
      %425 = vmatprep.subr.mxu0 0.0
      %426 = vmatpush1.msra.mxu0 0.0
      %427 = vmatprep.subr.mxu0 0.0
      %428 = vmatpush1.msra.mxu0 0.0
      %429 = vmatprep.subr.mxu0 0.0
      %430 = vmatpush1.msra.mxu0 0.0
      %431 = vmatprep.subr.mxu0 0.0
      %432 = vmatpush1.msra.mxu0 0.0
      %433 = vmatprep.subr.mxu0 0.0
      %434 = vmatpush1.msra.mxu0 0.0
      %435 = vmatprep.subr.mxu0 0.0
      %436 = vmatpush1.msra.mxu0 0.0
      %437 = vmatprep.subr.mxu0 0.0
      %438 = vmatpush1.msra.mxu0 0.0
      %439 = vmatprep.subr.mxu0 0.0
      %440 = vmatpush1.msra.mxu0 0.0
      %441 = vmatprep.subr.mxu0 0.0
      %442 = vmatpush1.msra.mxu0 0.0
      %443 = vmatprep.subr.mxu0 0.0
      %444 = vmatpush1.msra.mxu0 0.0
      %445 = vmatprep.subr.mxu0 0.0
      %446 = vmatpush1.msra.mxu0 0.0
      %447 = vmatprep.subr.mxu0 0.0
      %448 = vmatpush1.msra.mxu0 0.0
      %449 = vmatprep.subr.mxu0 0.0
      %450 = vmatpush1.msra.mxu0 0.0
      %451 = vmatprep.subr.mxu0 0.0
      %452 = vmatpush1.msra.mxu0 0.0
      %453 = vmatprep.subr.mxu0 0.0
      %454 = vmatpush1.msra.mxu0 0.0
      %455 = vmatprep.subr.mxu0 0.0
      %456 = vmatpush1.msra.mxu0 0.0
      %457 = vmatprep.subr.mxu0 0.0
      %458 = vmatpush1.msra.mxu0 0.0
      %459 = vmatprep.subr.mxu0 0.0
      %460 = vmatpush1.msra.mxu0 0.0
      %461 = vmatprep.subr.mxu0 0.0
      %462 = vmatpush1.msra.mxu0 0.0
      %463 = vmatprep.mubr.f32.mxu0 0.0
      %464 = vmatmul.mubr.f32.gmra.mrb[0].mxu0 %v391
      %v465 = vpop.f32.mrb[0].mxu0
      %v466 = vadd.f32 0.0, %v465
      %v467 = vpop.f32.mrb[0].mxu0
      %v468 = vadd.f32 0.0, %v467
      %469 = vdwg.mxu0
      %v470 = vadd.f32 %v384, %v466
      %v471 = vadd.f32 %v386, %v468
      %s472 = scalar_lea.vmem %s1, 12
      %v473 = vld [vmem:[%s472] sm:$0xf]
      %s474 = scalar_lea.vmem %s1, 16
      %v475 = vld [vmem:[%s474] sm:$0xf]
      %v477 = vsel %vm228, %v475, 0
      %479 = vmatprep.subr.mxu0 %v235
      %480 = vmatpush1.msra.mxu0 %v233
      %481 = vmatprep.subr.mxu0 0.0
      %482 = vmatpush1.msra.mxu0 0.0
      %483 = vmatprep.subr.mxu0 0.0
      %484 = vmatpush1.msra.mxu0 0.0
      %485 = vmatprep.subr.mxu0 0.0
      %486 = vmatpush1.msra.mxu0 0.0
      %487 = vmatprep.subr.mxu0 0.0
      %488 = vmatpush1.msra.mxu0 0.0
      %489 = vmatprep.subr.mxu0 0.0
      %490 = vmatpush1.msra.mxu0 0.0
      %491 = vmatprep.subr.mxu0 0.0
      %492 = vmatpush1.msra.mxu0 0.0
      %493 = vmatprep.subr.mxu0 0.0
      %494 = vmatpush1.msra.mxu0 0.0
      %495 = vmatprep.subr.mxu0 0.0
      %496 = vmatpush1.msra.mxu0 0.0
      %497 = vmatprep.subr.mxu0 0.0
      %498 = vmatpush1.msra.mxu0 0.0
      %499 = vmatprep.subr.mxu0 0.0
      %500 = vmatpush1.msra.mxu0 0.0
      %501 = vmatprep.subr.mxu0 0.0
      %502 = vmatpush1.msra.mxu0 0.0
      %503 = vmatprep.subr.mxu0 0.0
      %504 = vmatpush1.msra.mxu0 0.0
      %505 = vmatprep.subr.mxu0 0.0
      %506 = vmatpush1.msra.mxu0 0.0
      %507 = vmatprep.subr.mxu0 0.0
      %508 = vmatpush1.msra.mxu0 0.0
      %509 = vmatprep.subr.mxu0 0.0
      %510 = vmatpush1.msra.mxu0 0.0
      %511 = vmatprep.subr.mxu0 0.0
      %512 = vmatpush1.msra.mxu0 0.0
      %513 = vmatprep.subr.mxu0 0.0
      %514 = vmatpush1.msra.mxu0 0.0
      %515 = vmatprep.subr.mxu0 0.0
      %516 = vmatpush1.msra.mxu0 0.0
      %517 = vmatprep.subr.mxu0 0.0
      %518 = vmatpush1.msra.mxu0 0.0
      %519 = vmatprep.subr.mxu0 0.0
      %520 = vmatpush1.msra.mxu0 0.0
      %521 = vmatprep.subr.mxu0 0.0
      %522 = vmatpush1.msra.mxu0 0.0
      %523 = vmatprep.subr.mxu0 0.0
      %524 = vmatpush1.msra.mxu0 0.0
      %525 = vmatprep.subr.mxu0 0.0
      %526 = vmatpush1.msra.mxu0 0.0
      %527 = vmatprep.subr.mxu0 0.0
      %528 = vmatpush1.msra.mxu0 0.0
      %529 = vmatprep.subr.mxu0 0.0
      %530 = vmatpush1.msra.mxu0 0.0
      %531 = vmatprep.subr.mxu0 0.0
      %532 = vmatpush1.msra.mxu0 0.0
      %533 = vmatprep.subr.mxu0 0.0
      %534 = vmatpush1.msra.mxu0 0.0
      %535 = vmatprep.subr.mxu0 0.0
      %536 = vmatpush1.msra.mxu0 0.0
      %537 = vmatprep.subr.mxu0 0.0
      %538 = vmatpush1.msra.mxu0 0.0
      %539 = vmatprep.subr.mxu0 0.0
      %540 = vmatpush1.msra.mxu0 0.0
      %541 = vmatprep.subr.mxu0 0.0
      %542 = vmatpush1.msra.mxu0 0.0
      %543 = vmatprep.mubr.f32.mxu0 0.0
      %544 = vmatmul.mubr.f32.gmra.mrb[0].mxu0 %v477
      %v545 = vpop.f32.mrb[0].mxu0
      %v546 = vadd.f32 0.0, %v545
      %v547 = vpop.f32.mrb[0].mxu0
      %v548 = vadd.f32 0.0, %v547
      %549 = vdwg.mxu0
      %v551 = vsel %vm228, %v473, 0
      %553 = vmatprep.subr.mxu0 %v315
      %554 = vmatpush1.msra.mxu0 %v312
      %555 = vmatprep.subr.mxu0 0.0
      %556 = vmatpush1.msra.mxu0 0.0
      %557 = vmatprep.subr.mxu0 0.0
      %558 = vmatpush1.msra.mxu0 0.0
      %559 = vmatprep.subr.mxu0 0.0
      %560 = vmatpush1.msra.mxu0 0.0
      %561 = vmatprep.subr.mxu0 0.0
      %562 = vmatpush1.msra.mxu0 0.0
      %563 = vmatprep.subr.mxu0 0.0
      %564 = vmatpush1.msra.mxu0 0.0
      %565 = vmatprep.subr.mxu0 0.0
      %566 = vmatpush1.msra.mxu0 0.0
      %567 = vmatprep.subr.mxu0 0.0
      %568 = vmatpush1.msra.mxu0 0.0
      %569 = vmatprep.subr.mxu0 0.0
      %570 = vmatpush1.msra.mxu0 0.0
      %571 = vmatprep.subr.mxu0 0.0
      %572 = vmatpush1.msra.mxu0 0.0
      %573 = vmatprep.subr.mxu0 0.0
      %574 = vmatpush1.msra.mxu0 0.0
      %575 = vmatprep.subr.mxu0 0.0
      %576 = vmatpush1.msra.mxu0 0.0
      %577 = vmatprep.subr.mxu0 0.0
      %578 = vmatpush1.msra.mxu0 0.0
      %579 = vmatprep.subr.mxu0 0.0
      %580 = vmatpush1.msra.mxu0 0.0
      %581 = vmatprep.subr.mxu0 0.0
      %582 = vmatpush1.msra.mxu0 0.0
      %583 = vmatprep.subr.mxu0 0.0
      %584 = vmatpush1.msra.mxu0 0.0
      %585 = vmatprep.subr.mxu0 0.0
      %586 = vmatpush1.msra.mxu0 0.0
      %587 = vmatprep.subr.mxu0 0.0
      %588 = vmatpush1.msra.mxu0 0.0
      %589 = vmatprep.subr.mxu0 0.0
      %590 = vmatpush1.msra.mxu0 0.0
      %591 = vmatprep.subr.mxu0 0.0
      %592 = vmatpush1.msra.mxu0 0.0
      %593 = vmatprep.subr.mxu0 0.0
      %594 = vmatpush1.msra.mxu0 0.0
      %595 = vmatprep.subr.mxu0 0.0
      %596 = vmatpush1.msra.mxu0 0.0
      %597 = vmatprep.subr.mxu0 0.0
      %598 = vmatpush1.msra.mxu0 0.0
      %599 = vmatprep.subr.mxu0 0.0
      %600 = vmatpush1.msra.mxu0 0.0
      %601 = vmatprep.subr.mxu0 0.0
      %602 = vmatpush1.msra.mxu0 0.0
      %603 = vmatprep.subr.mxu0 0.0
      %604 = vmatpush1.msra.mxu0 0.0
      %605 = vmatprep.subr.mxu0 0.0
      %606 = vmatpush1.msra.mxu0 0.0
      %607 = vmatprep.subr.mxu0 0.0
      %608 = vmatpush1.msra.mxu0 0.0
      %609 = vmatprep.subr.mxu0 0.0
      %610 = vmatpush1.msra.mxu0 0.0
      %611 = vmatprep.subr.mxu0 0.0
      %612 = vmatpush1.msra.mxu0 0.0
      %613 = vmatprep.subr.mxu0 0.0
      %614 = vmatpush1.msra.mxu0 0.0
      %615 = vmatprep.subr.mxu0 0.0
      %616 = vmatpush1.msra.mxu0 0.0
      %617 = vmatprep.mubr.f32.mxu0 0.0
      %618 = vmatmul.mubr.f32.gmra.mrb[0].mxu0 %v551
      %v619 = vpop.f32.mrb[0].mxu0
      %v620 = vadd.f32 %v546, %v619
      %v621 = vpop.f32.mrb[0].mxu0
      %v622 = vadd.f32 %v548, %v621
      %623 = vdwg.mxu0
      %s624 = scalar_lea.vmem %s1, 20
      %v625 = vld [vmem:[%s624] sm:$0xf]
      %v627 = vsel %vm228, %v625, 0
      %629 = vmatprep.subr.mxu0 %v397
      %630 = vmatpush1.msra.mxu0 %v394
      %631 = vmatprep.subr.mxu0 0.0
      %632 = vmatpush1.msra.mxu0 0.0
      %633 = vmatprep.subr.mxu0 0.0
      %634 = vmatpush1.msra.mxu0 0.0
      %635 = vmatprep.subr.mxu0 0.0
      %636 = vmatpush1.msra.mxu0 0.0
      %637 = vmatprep.subr.mxu0 0.0
      %638 = vmatpush1.msra.mxu0 0.0
      %639 = vmatprep.subr.mxu0 0.0
      %640 = vmatpush1.msra.mxu0 0.0
      %641 = vmatprep.subr.mxu0 0.0
      %642 = vmatpush1.msra.mxu0 0.0
      %643 = vmatprep.subr.mxu0 0.0
      %644 = vmatpush1.msra.mxu0 0.0
      %645 = vmatprep.subr.mxu0 0.0
      %646 = vmatpush1.msra.mxu0 0.0
      %647 = vmatprep.subr.mxu0 0.0
      %648 = vmatpush1.msra.mxu0 0.0
      %649 = vmatprep.subr.mxu0 0.0
      %650 = vmatpush1.msra.mxu0 0.0
      %651 = vmatprep.subr.mxu0 0.0
      %652 = vmatpush1.msra.mxu0 0.0
      %653 = vmatprep.subr.mxu0 0.0
      %654 = vmatpush1.msra.mxu0 0.0
      %655 = vmatprep.subr.mxu0 0.0
      %656 = vmatpush1.msra.mxu0 0.0
      %657 = vmatprep.subr.mxu0 0.0
      %658 = vmatpush1.msra.mxu0 0.0
      %659 = vmatprep.subr.mxu0 0.0
      %660 = vmatpush1.msra.mxu0 0.0
      %661 = vmatprep.subr.mxu0 0.0
      %662 = vmatpush1.msra.mxu0 0.0
      %663 = vmatprep.subr.mxu0 0.0
      %664 = vmatpush1.msra.mxu0 0.0
      %665 = vmatprep.subr.mxu0 0.0
      %666 = vmatpush1.msra.mxu0 0.0
      %667 = vmatprep.subr.mxu0 0.0
      %668 = vmatpush1.msra.mxu0 0.0
      %669 = vmatprep.subr.mxu0 0.0
      %670 = vmatpush1.msra.mxu0 0.0
      %671 = vmatprep.subr.mxu0 0.0
      %672 = vmatpush1.msra.mxu0 0.0
      %673 = vmatprep.subr.mxu0 0.0
      %674 = vmatpush1.msra.mxu0 0.0
      %675 = vmatprep.subr.mxu0 0.0
      %676 = vmatpush1.msra.mxu0 0.0
      %677 = vmatprep.subr.mxu0 0.0
      %678 = vmatpush1.msra.mxu0 0.0
      %679 = vmatprep.subr.mxu0 0.0
      %680 = vmatpush1.msra.mxu0 0.0
      %681 = vmatprep.subr.mxu0 0.0
      %682 = vmatpush1.msra.mxu0 0.0
      %683 = vmatprep.subr.mxu0 0.0
      %684 = vmatpush1.msra.mxu0 0.0
      %685 = vmatprep.subr.mxu0 0.0
      %686 = vmatpush1.msra.mxu0 0.0
      %687 = vmatprep.subr.mxu0 0.0
      %688 = vmatpush1.msra.mxu0 0.0
      %689 = vmatprep.subr.mxu0 0.0
      %690 = vmatpush1.msra.mxu0 0.0
      %691 = vmatprep.subr.mxu0 0.0
      %692 = vmatpush1.msra.mxu0 0.0
      %693 = vmatprep.mubr.f32.mxu0 0.0
      %694 = vmatmul.mubr.f32.gmra.mrb[0].mxu0 %v627
      %v695 = vpop.f32.mrb[0].mxu0
      %v696 = vadd.f32 0.0, %v695
      %v697 = vpop.f32.mrb[0].mxu0
      %v698 = vadd.f32 0.0, %v697
      %699 = vdwg.mxu0
      %v700 = vadd.f32 %v620, %v696
      %v701 = vadd.f32 %v622, %v698
      %s702 = scalar_lea.vmem %s1, 24
      %v703 = vld [vmem:[%s702] sm:$0xf]
      %s704 = scalar_lea.vmem %s1, 28
      %v705 = vld [vmem:[%s704] sm:$0xf]
      %v707 = vsel %vm228, %v705, 0
      %709 = vmatprep.subr.mxu0 %v235
      %710 = vmatpush1.msra.mxu0 %v233
      %711 = vmatprep.subr.mxu0 0.0
      %712 = vmatpush1.msra.mxu0 0.0
      %713 = vmatprep.subr.mxu0 0.0
      %714 = vmatpush1.msra.mxu0 0.0
      %715 = vmatprep.subr.mxu0 0.0
      %716 = vmatpush1.msra.mxu0 0.0
      %717 = vmatprep.subr.mxu0 0.0
      %718 = vmatpush1.msra.mxu0 0.0
      %719 = vmatprep.subr.mxu0 0.0
      %720 = vmatpush1.msra.mxu0 0.0
      %721 = vmatprep.subr.mxu0 0.0
      %722 = vmatpush1.msra.mxu0 0.0
      %723 = vmatprep.subr.mxu0 0.0
      %724 = vmatpush1.msra.mxu0 0.0
      %725 = vmatprep.subr.mxu0 0.0
      %726 = vmatpush1.msra.mxu0 0.0
      %727 = vmatprep.subr.mxu0 0.0
      %728 = vmatpush1.msra.mxu0 0.0
      %729 = vmatprep.subr.mxu0 0.0
      %730 = vmatpush1.msra.mxu0 0.0
      %731 = vmatprep.subr.mxu0 0.0
      %732 = vmatpush1.msra.mxu0 0.0
      %733 = vmatprep.subr.mxu0 0.0
      %734 = vmatpush1.msra.mxu0 0.0
      %735 = vmatprep.subr.mxu0 0.0
      %736 = vmatpush1.msra.mxu0 0.0
      %737 = vmatprep.subr.mxu0 0.0
      %738 = vmatpush1.msra.mxu0 0.0
      %739 = vmatprep.subr.mxu0 0.0
      %740 = vmatpush1.msra.mxu0 0.0
      %741 = vmatprep.subr.mxu0 0.0
      %742 = vmatpush1.msra.mxu0 0.0
      %743 = vmatprep.subr.mxu0 0.0
      %744 = vmatpush1.msra.mxu0 0.0
      %745 = vmatprep.subr.mxu0 0.0
      %746 = vmatpush1.msra.mxu0 0.0
      %747 = vmatprep.subr.mxu0 0.0
      %748 = vmatpush1.msra.mxu0 0.0
      %749 = vmatprep.subr.mxu0 0.0
      %750 = vmatpush1.msra.mxu0 0.0
      %751 = vmatprep.subr.mxu0 0.0
      %752 = vmatpush1.msra.mxu0 0.0
      %753 = vmatprep.subr.mxu0 0.0
      %754 = vmatpush1.msra.mxu0 0.0
      %755 = vmatprep.subr.mxu0 0.0
      %756 = vmatpush1.msra.mxu0 0.0
      %757 = vmatprep.subr.mxu0 0.0
      %758 = vmatpush1.msra.mxu0 0.0
      %759 = vmatprep.subr.mxu0 0.0
      %760 = vmatpush1.msra.mxu0 0.0
      %761 = vmatprep.subr.mxu0 0.0
      %762 = vmatpush1.msra.mxu0 0.0
      %763 = vmatprep.subr.mxu0 0.0
      %764 = vmatpush1.msra.mxu0 0.0
      %765 = vmatprep.subr.mxu0 0.0
      %766 = vmatpush1.msra.mxu0 0.0
      %767 = vmatprep.subr.mxu0 0.0
      %768 = vmatpush1.msra.mxu0 0.0
      %769 = vmatprep.subr.mxu0 0.0
      %770 = vmatpush1.msra.mxu0 0.0
      %771 = vmatprep.subr.mxu0 0.0
      %772 = vmatpush1.msra.mxu0 0.0
      %773 = vmatprep.mubr.f32.mxu0 0.0
      %774 = vmatmul.mubr.f32.gmra.mrb[0].mxu0 %v707
      %v775 = vpop.f32.mrb[0].mxu0
      %v776 = vadd.f32 0.0, %v775
      %v777 = vpop.f32.mrb[0].mxu0
      %v778 = vadd.f32 0.0, %v777
      %779 = vdwg.mxu0
      %v781 = vsel %vm228, %v703, 0
      %783 = vmatprep.subr.mxu0 %v315
      %784 = vmatpush1.msra.mxu0 %v312
      %785 = vmatprep.subr.mxu0 0.0
      %786 = vmatpush1.msra.mxu0 0.0
      %787 = vmatprep.subr.mxu0 0.0
      %788 = vmatpush1.msra.mxu0 0.0
      %789 = vmatprep.subr.mxu0 0.0
      %790 = vmatpush1.msra.mxu0 0.0
      %791 = vmatprep.subr.mxu0 0.0
      %792 = vmatpush1.msra.mxu0 0.0
      %793 = vmatprep.subr.mxu0 0.0
      %794 = vmatpush1.msra.mxu0 0.0
      %795 = vmatprep.subr.mxu0 0.0
      %796 = vmatpush1.msra.mxu0 0.0
      %797 = vmatprep.subr.mxu0 0.0
      %798 = vmatpush1.msra.mxu0 0.0
      %799 = vmatprep.subr.mxu0 0.0
      %800 = vmatpush1.msra.mxu0 0.0
      %801 = vmatprep.subr.mxu0 0.0
      %802 = vmatpush1.msra.mxu0 0.0
      %803 = vmatprep.subr.mxu0 0.0
      %804 = vmatpush1.msra.mxu0 0.0
      %805 = vmatprep.subr.mxu0 0.0
      %806 = vmatpush1.msra.mxu0 0.0
      %807 = vmatprep.subr.mxu0 0.0
      %808 = vmatpush1.msra.mxu0 0.0
      %809 = vmatprep.subr.mxu0 0.0
      %810 = vmatpush1.msra.mxu0 0.0
      %811 = vmatprep.subr.mxu0 0.0
      %812 = vmatpush1.msra.mxu0 0.0
      %813 = vmatprep.subr.mxu0 0.0
      %814 = vmatpush1.msra.mxu0 0.0
      %815 = vmatprep.subr.mxu0 0.0
      %816 = vmatpush1.msra.mxu0 0.0
      %817 = vmatprep.subr.mxu0 0.0
      %818 = vmatpush1.msra.mxu0 0.0
      %819 = vmatprep.subr.mxu0 0.0
      %820 = vmatpush1.msra.mxu0 0.0
      %821 = vmatprep.subr.mxu0 0.0
      %822 = vmatpush1.msra.mxu0 0.0
      %823 = vmatprep.subr.mxu0 0.0
      %824 = vmatpush1.msra.mxu0 0.0
      %825 = vmatprep.subr.mxu0 0.0
      %826 = vmatpush1.msra.mxu0 0.0
      %827 = vmatprep.subr.mxu0 0.0
      %828 = vmatpush1.msra.mxu0 0.0
      %829 = vmatprep.subr.mxu0 0.0
      %830 = vmatpush1.msra.mxu0 0.0
      %831 = vmatprep.subr.mxu0 0.0
      %832 = vmatpush1.msra.mxu0 0.0
      %833 = vmatprep.subr.mxu0 0.0
      %834 = vmatpush1.msra.mxu0 0.0
      %835 = vmatprep.subr.mxu0 0.0
      %836 = vmatpush1.msra.mxu0 0.0
      %837 = vmatprep.subr.mxu0 0.0
      %838 = vmatpush1.msra.mxu0 0.0
      %839 = vmatprep.subr.mxu0 0.0
      %840 = vmatpush1.msra.mxu0 0.0
      %841 = vmatprep.subr.mxu0 0.0
      %842 = vmatpush1.msra.mxu0 0.0
      %843 = vmatprep.subr.mxu0 0.0
      %844 = vmatpush1.msra.mxu0 0.0
      %845 = vmatprep.subr.mxu0 0.0
      %846 = vmatpush1.msra.mxu0 0.0
      %847 = vmatprep.mubr.f32.mxu0 0.0
      %848 = vmatmul.mubr.f32.gmra.mrb[0].mxu0 %v781
      %v849 = vpop.f32.mrb[0].mxu0
      %v850 = vadd.f32 %v776, %v849
      %v851 = vpop.f32.mrb[0].mxu0
      %v852 = vadd.f32 %v778, %v851
      %853 = vdwg.mxu0
      %s854 = scalar_lea.vmem %s1, 32
      %v855 = vld [vmem:[%s854] sm:$0xf]
      %v857 = vsel %vm228, %v855, 0
      %859 = vmatprep.subr.mxu0 %v397
      %860 = vmatpush1.msra.mxu0 %v394
      %861 = vmatprep.subr.mxu0 0.0
      %862 = vmatpush1.msra.mxu0 0.0
      %863 = vmatprep.subr.mxu0 0.0
      %864 = vmatpush1.msra.mxu0 0.0
      %865 = vmatprep.subr.mxu0 0.0
      %866 = vmatpush1.msra.mxu0 0.0
      %867 = vmatprep.subr.mxu0 0.0
      %868 = vmatpush1.msra.mxu0 0.0
      %869 = vmatprep.subr.mxu0 0.0
      %870 = vmatpush1.msra.mxu0 0.0
      %871 = vmatprep.subr.mxu0 0.0
      %872 = vmatpush1.msra.mxu0 0.0
      %873 = vmatprep.subr.mxu0 0.0
      %874 = vmatpush1.msra.mxu0 0.0
      %875 = vmatprep.subr.mxu0 0.0
      %876 = vmatpush1.msra.mxu0 0.0
      %877 = vmatprep.subr.mxu0 0.0
      %878 = vmatpush1.msra.mxu0 0.0
      %879 = vmatprep.subr.mxu0 0.0
      %880 = vmatpush1.msra.mxu0 0.0
      %881 = vmatprep.subr.mxu0 0.0
      %882 = vmatpush1.msra.mxu0 0.0
      %883 = vmatprep.subr.mxu0 0.0
      %884 = vmatpush1.msra.mxu0 0.0
      %885 = vmatprep.subr.mxu0 0.0
      %886 = vmatpush1.msra.mxu0 0.0
      %887 = vmatprep.subr.mxu0 0.0
      %888 = vmatpush1.msra.mxu0 0.0
      %889 = vmatprep.subr.mxu0 0.0
      %890 = vmatpush1.msra.mxu0 0.0
      %891 = vmatprep.subr.mxu0 0.0
      %892 = vmatpush1.msra.mxu0 0.0
      %893 = vmatprep.subr.mxu0 0.0
      %894 = vmatpush1.msra.mxu0 0.0
      %895 = vmatprep.subr.mxu0 0.0
      %896 = vmatpush1.msra.mxu0 0.0
      %897 = vmatprep.subr.mxu0 0.0
      %898 = vmatpush1.msra.mxu0 0.0
      %899 = vmatprep.subr.mxu0 0.0
      %900 = vmatpush1.msra.mxu0 0.0
      %901 = vmatprep.subr.mxu0 0.0
      %902 = vmatpush1.msra.mxu0 0.0
      %903 = vmatprep.subr.mxu0 0.0
      %904 = vmatpush1.msra.mxu0 0.0
      %905 = vmatprep.subr.mxu0 0.0
      %906 = vmatpush1.msra.mxu0 0.0
      %907 = vmatprep.subr.mxu0 0.0
      %908 = vmatpush1.msra.mxu0 0.0
      %909 = vmatprep.subr.mxu0 0.0
      %910 = vmatpush1.msra.mxu0 0.0
      %911 = vmatprep.subr.mxu0 0.0
      %912 = vmatpush1.msra.mxu0 0.0
      %913 = vmatprep.subr.mxu0 0.0
      %914 = vmatpush1.msra.mxu0 0.0
      %915 = vmatprep.subr.mxu0 0.0
      %916 = vmatpush1.msra.mxu0 0.0
      %917 = vmatprep.subr.mxu0 0.0
      %918 = vmatpush1.msra.mxu0 0.0
      %919 = vmatprep.subr.mxu0 0.0
      %920 = vmatpush1.msra.mxu0 0.0
      %921 = vmatprep.subr.mxu0 0.0
      %922 = vmatpush1.msra.mxu0 0.0
      %923 = vmatprep.mubr.f32.mxu0 0.0
      %924 = vmatmul.mubr.f32.gmra.mrb[0].mxu0 %v857
      %v925 = vpop.f32.mrb[0].mxu0
      %v926 = vadd.f32 0.0, %v925
      %v927 = vpop.f32.mrb[0].mxu0
      %v928 = vadd.f32 0.0, %v927
      %929 = vdwg.mxu0
      %v930 = vadd.f32 %v850, %v926
      %v931 = vadd.f32 %v852, %v928
      %vm932 = vcmp.lt.s32.totalorder %v174, 16
      %vm933 = vcmp.lt.s32.totalorder %v175, 16
      %vm934 = vcmp.ge.s32.totalorder %v174, 240
      %vm935 = vcmp.ge.s32.totalorder %v175, 240
      %936 = vrot.lane.b32.xlu0 %v470, 16
      %v937 = vpop.permute.xlu0 %936
      %938 = vrot.lane.b32.xlu0 %v471, 16
      %v939 = vpop.permute.xlu0 %938
      %v940 = vsel %vm932, %v937, %v939
      %v941 = vsel %vm932, %v939, %v937
      %v942 = vsel %vm932, %v470, %v941
      %v943 = vsel %vm933, %v471, %v940
      %v944 = vadd.f32 %v700, %v942
      %v945 = vadd.f32 %v701, %v943
      %946 = vrot.lane.b32.xlu0 %v930, 112
      %v947 = vpop.permute.xlu0 %946
      %948 = vrot.lane.b32.xlu0 %v931, 112
      %v949 = vpop.permute.xlu0 %948
      %vm950 = vcmp.lt.s32.totalorder %v174, 112
      %v951 = vsel %vm950, %v947, %v949
      %v952 = vsel %vm950, %v949, %v947
      %v953 = vsel %vm934, %v930, %v951
      %v954 = vsel %vm935, %v931, %v952
      %v955 = vadd.f32 %v944, %v953
      %v956 = vadd.f32 %v945, %v954
      %958 = vset.pattern.permute.xlu0 0
      %959 = vperm.xlu0 %958, %v172
      %v960 = vpop.permute.xlu0 %959
      %v962 = vadd.f32 %v955, %v960
      %v963 = vadd.f32 %v956, %v960
      %v966 = vcombine.low %v962, %v963
      %968 = vst [vmem:[%s170] sm:$0xff] %v966
      %p969 = scmp.lt.s32.totalorder %s14, 1
      %s970 = scalar_select %p969, %s14, 1
      %s971 = smul.addr %s970, 2
      %s972 = smul.addr %s971, 4
      %s973 = scalar_lea.vmem %s3, %s972
      // Predicated region
      $region33: #{residual_block_with_switchnorm.5} parent=31 // pred_check
        %p974 = pneg %p100
      $region34: #{residual_block_with_switchnorm.5} parent=31 // pred_check_branch
        %976 = sbr.rel (%p974) target = $region36
      $region35: #{residual_block_with_switchnorm.5} parent=31 // pred_region
        _
      $region36: #{residual_block_with_switchnorm.5} parent=31 // pred_fallthru
        _
    $region32: #{residual_block_with_switchnorm.5} parent=5 // pred_fallthru
      _
    %p977 = scmp.le.s32.totalorder 2, %s9
    // Predicated region
    $region37: #{residual_block_with_switchnorm.5} parent=5 // pred_check
      %p978 = pneg %p977
    $region38: #{residual_block_with_switchnorm.5} parent=5 // pred_check_branch
      %980 = sbr.rel (%p978) target = $region40
    $region39: #{residual_block_with_switchnorm.5} parent=5 // pred_region
      %s981 = ssub.s32 %s9, 2
      // Predicated region
      $region41: #{residual_block_with_switchnorm.5} parent=39 // pred_check
        %p982 = pneg %p106
      $region42: #{residual_block_with_switchnorm.5} parent=39 // pred_check_branch
        %984 = sbr.rel (%p982) target = $region44
      $region43: #{residual_block_with_switchnorm.5} parent=39 // pred_region
        %p985 = scmp.lt.s32.totalorder %s15, 1
        %s986 = scalar_select %p985, %s15, 1
        %s987 = smul.addr %s986, 2
        %s988 = smul.addr %s987, 4
        %s989 = scalar_lea.vmem %s3, %s988
      $region44: #{residual_block_with_switchnorm.5} parent=39 // pred_fallthru
        _
    $region40: #{residual_block_with_switchnorm.5} parent=5 // pred_fallthru
      _
  $region6: #{residual_block_with_switchnorm.5} parent=0 // loop_footer
    %s13 = sadd.s32 1, %s9
  $region7: #{residual_block_with_switchnorm.5} parent=0 // loop_footer_branch
    %8 = sbr.rel target = $region3
  $region8: #{residual_block_with_switchnorm.5} parent=0 // loop_exit
    _

// kernel: residual_block_with_switchnorm.8
$region0: #{residual_block_with_switchnorm.8}
  #allocation0 [shape = 'u32[]', space=smem, size = 0x4, offset = 0x4, fixed_abs, tag = 'smem constant byte address 0x4 - core index']
  #allocation1 [shape = 'u32[144,128]{1,0:T(1,128)}', space=vmem, size = 0x12000, scoped, tag = 'internal scratch']
  %s0 = inlined_call_operand.vmem [shape: f32[2,4,256], index: 0, kind: input, shape index: {}]
  %s1 = inlined_call_operand.vmem [shape: f32[2,4,1], index: 1, kind: input, shape index: {}]
  %s2 = inlined_call_operand.vmem [shape: f32[2,4,1], index: 2, kind: input, shape index: {}]
  %s3 = inlined_call_operand.vmem [shape: f32[9,4,4], index: 3, kind: input, shape index: {}]
  %s4 = inlined_call_operand.vmem [shape: f32[4,1], index: 4, kind: input, shape index: {}]
  %s5 = inlined_call_operand.vmem [shape: f32[2,4,256], index: 5, kind: output, shape index: {0}]
  %s6 = inlined_call_operand.vmem [shape: f32[2,1,4], index: 6, kind: output, shape index: {1}]
  %s7 = inlined_call_operand.vmem [shape: f32[2,1,4], index: 7, kind: output, shape index: {2}]
  %8 = xla_tuple %s5, %s6, %s7
  %s9 = sld [smem:[#allocation0]]
  $region69: #{residual_block_with_switchnorm.8} parent=0
    _
  %s11 = ssub.s32 1, %s9
  %s12 = scalar_select 0, %s11, %s9
  loop: start=0, step=1, limit=4
  $region2: #{residual_block_with_switchnorm.8} parent=0 // loop_pre_header
    _
  $region3: #{residual_block_with_switchnorm.8} parent=0 // loop_header
    %s14 = sphi 0, %s18
    %p15 = scmp.ge.s32.totalorder %s14, 4
    %s24 = sphi 0, %s26
    %s27 = sphi 0, %s24
    %s28 = sphi 0, %s27
    %s44 = sphi 0, %s28
    %s50 = sphi 0, %s52
    %s53 = sphi 0, %s50
    %s54 = sphi 0, %s53
    %s70 = sphi 0, %s54
    %s76 = sphi 0, %s78
    %s79 = sphi 0, %s76
    %s80 = sphi 0, %s79
    %s96 = sphi 0, %s80
    %s100 = sphi 0, %s100
    %s102 = sphi 0, %s100
    %s103 = sphi 0, %s102
    %s117 = sphi 0, %s103
    %s121 = sphi 0, %s121
    %s123 = sphi 0, %s121
    %s124 = sphi 0, %s123
    %s138 = sphi 0, %s124
    %s144 = sphi 0, %s146
    %s147 = sphi 0, %s144
    %s148 = sphi 0, %s147
    %s164 = sphi 0, %s148
    %s170 = sphi 0, %s172
    %s173 = sphi 0, %s170
    %s174 = sphi 0, %s173
    %s190 = sphi 0, %s174
    %s196 = sphi 0, %s198
    %s199 = sphi 0, %s196
    %s200 = sphi 0, %s199
    %s216 = sphi 0, %s200
  $region4: #{residual_block_with_switchnorm.8} parent=0 // loop_header_branch
    %17 = sbr.rel (%p15) target = $region8
  $region5: #{residual_block_with_switchnorm.8} parent=0 // loop_body
    %s19 = ssub.s32 %s14, 1
    %s20 = ssub.s32 %s14, 2
    %s21 = sadd.s32 %s14, 1
    %s22 = ssub.s32 %s14, %s21
    %p23 = scmp.eq.s32.totalorder %s22, 0
    %s25 = sadd.s32 %s24, 1
    %s26 = scalar_select %p23, %s24, %s25
    %p29 = pneg %p23
    %p30 = scmp.eq.s32.totalorder %s14, 1
    %p31 = por %p29, %p30
    %p32 = scmp.ne.s32.totalorder %s24, %s27
    %p33 = scmp.eq.s32.totalorder %s14, 0
    %p34 = por %p32, %p33
    %p35 = scmp.ne.s32.totalorder %s24, %s27
    %p36 = scmp.eq.s32.totalorder %s19, 1
    %p37 = por %p35, %p36
    %p38 = scmp.ne.s32.totalorder %s27, %s28
    %p39 = scmp.eq.s32.totalorder %s19, 0
    %p40 = por %p38, %p39
    %p41 = scmp.ne.s32.totalorder %s27, %s28
    %p42 = scmp.eq.s32.totalorder %s20, 1
    %p43 = por %p41, %p42
    %p45 = scmp.ne.s32.totalorder %s28, %s44
    %p46 = scmp.eq.s32.totalorder %s20, 0
    %p47 = por %p45, %p46
    %s48 = ssub.s32 %s14, %s21
    %p49 = scmp.eq.s32.totalorder %s48, 0
    %s51 = sadd.s32 %s50, 1
    %s52 = scalar_select %p49, %s50, %s51
    %p55 = pneg %p49
    %p56 = scmp.eq.s32.totalorder %s14, 1
    %p57 = por %p55, %p56
    %p58 = scmp.ne.s32.totalorder %s50, %s53
    %p59 = scmp.eq.s32.totalorder %s14, 0
    %p60 = por %p58, %p59
    %p61 = scmp.ne.s32.totalorder %s50, %s53
    %p62 = scmp.eq.s32.totalorder %s19, 1
    %p63 = por %p61, %p62
    %p64 = scmp.ne.s32.totalorder %s53, %s54
    %p65 = scmp.eq.s32.totalorder %s19, 0
    %p66 = por %p64, %p65
    %p67 = scmp.ne.s32.totalorder %s53, %s54
    %p68 = scmp.eq.s32.totalorder %s20, 1
    %p69 = por %p67, %p68
    %p71 = scmp.ne.s32.totalorder %s54, %s70
    %p72 = scmp.eq.s32.totalorder %s20, 0
    %p73 = por %p71, %p72
    %s74 = ssub.s32 %s14, %s21
    %p75 = scmp.eq.s32.totalorder %s74, 0
    %s77 = sadd.s32 %s76, 1
    %s78 = scalar_select %p75, %s76, %s77
    %p81 = pneg %p75
    %p82 = scmp.eq.s32.totalorder %s14, 1
    %p83 = por %p81, %p82
    %p84 = scmp.ne.s32.totalorder %s76, %s79
    %p85 = scmp.eq.s32.totalorder %s14, 0
    %p86 = por %p84, %p85
    %p87 = scmp.ne.s32.totalorder %s76, %s79
    %p88 = scmp.eq.s32.totalorder %s19, 1
    %p89 = por %p87, %p88
    %p90 = scmp.ne.s32.totalorder %s79, %s80
    %p91 = scmp.eq.s32.totalorder %s19, 0
    %p92 = por %p90, %p91
    %p93 = scmp.ne.s32.totalorder %s79, %s80
    %p94 = scmp.eq.s32.totalorder %s20, 1
    %p95 = por %p93, %p94
    %p97 = scmp.ne.s32.totalorder %s80, %s96
    %p98 = scmp.eq.s32.totalorder %s20, 0
    %p99 = por %p97, %p98
    %s101 = sadd.s32 %s100, 1
    %p104 = scmp.eq.s32.totalorder %s14, 1
    %p105 = scmp.ne.s32.totalorder %s100, %s102
    %p106 = scmp.eq.s32.totalorder %s14, 0
    %p107 = por %p105, %p106
    %p108 = scmp.ne.s32.totalorder %s100, %s102
    %p109 = scmp.eq.s32.totalorder %s19, 1
    %p110 = por %p108, %p109
    %p111 = scmp.ne.s32.totalorder %s102, %s103
    %p112 = scmp.eq.s32.totalorder %s19, 0
    %p113 = por %p111, %p112
    %p114 = scmp.ne.s32.totalorder %s102, %s103
    %p115 = scmp.eq.s32.totalorder %s20, 1
    %p116 = por %p114, %p115
    %p118 = scmp.ne.s32.totalorder %s103, %s117
    %p119 = scmp.eq.s32.totalorder %s20, 0
    %p120 = por %p118, %p119
    %s122 = sadd.s32 %s121, 1
    %p125 = scmp.eq.s32.totalorder %s14, 1
    %p126 = scmp.ne.s32.totalorder %s121, %s123
    %p127 = scmp.eq.s32.totalorder %s14, 0
    %p128 = por %p126, %p127
    %p129 = scmp.ne.s32.totalorder %s121, %s123
    %p130 = scmp.eq.s32.totalorder %s19, 1
    %p131 = por %p129, %p130
    %p132 = scmp.ne.s32.totalorder %s123, %s124
    %p133 = scmp.eq.s32.totalorder %s19, 0
    %p134 = por %p132, %p133
    %p135 = scmp.ne.s32.totalorder %s123, %s124
    %p136 = scmp.eq.s32.totalorder %s20, 1
    %p137 = por %p135, %p136
    %p139 = scmp.ne.s32.totalorder %s124, %s138
    %p140 = scmp.eq.s32.totalorder %s20, 0
    %p141 = por %p139, %p140
    %s142 = ssub.s32 %s14, %s21
    %p143 = scmp.eq.s32.totalorder %s142, 0
    %s145 = sadd.s32 %s144, 1
    %s146 = scalar_select %p143, %s144, %s145
    %p149 = pneg %p143
    %p150 = scmp.eq.s32.totalorder %s14, 1
    %p151 = por %p149, %p150
    %p152 = scmp.ne.s32.totalorder %s144, %s147
    %p153 = scmp.eq.s32.totalorder %s14, 0
    %p154 = por %p152, %p153
    %p155 = scmp.ne.s32.totalorder %s144, %s147
    %p156 = scmp.eq.s32.totalorder %s19, 1
    %p157 = por %p155, %p156
    %p158 = scmp.ne.s32.totalorder %s147, %s148
    %p159 = scmp.eq.s32.totalorder %s19, 0
    %p160 = por %p158, %p159
    %p161 = scmp.ne.s32.totalorder %s147, %s148
    %p162 = scmp.eq.s32.totalorder %s20, 1
    %p163 = por %p161, %p162
    %p165 = scmp.ne.s32.totalorder %s148, %s164
    %p166 = scmp.eq.s32.totalorder %s20, 0
    %p167 = por %p165, %p166
    %s168 = ssub.s32 %s14, %s21
    %p169 = scmp.eq.s32.totalorder %s168, 0
    %s171 = sadd.s32 %s170, 1
    %s172 = scalar_select %p169, %s170, %s171
    %p175 = pneg %p169
    %p176 = scmp.eq.s32.totalorder %s14, 1
    %p177 = por %p175, %p176
    %p178 = scmp.ne.s32.totalorder %s170, %s173
    %p179 = scmp.eq.s32.totalorder %s14, 0
    %p180 = por %p178, %p179
    %p181 = scmp.ne.s32.totalorder %s170, %s173
    %p182 = scmp.eq.s32.totalorder %s19, 1
    %p183 = por %p181, %p182
    %p184 = scmp.ne.s32.totalorder %s173, %s174
    %p185 = scmp.eq.s32.totalorder %s19, 0
    %p186 = por %p184, %p185
    %p187 = scmp.ne.s32.totalorder %s173, %s174
    %p188 = scmp.eq.s32.totalorder %s20, 1
    %p189 = por %p187, %p188
    %p191 = scmp.ne.s32.totalorder %s174, %s190
    %p192 = scmp.eq.s32.totalorder %s20, 0
    %p193 = por %p191, %p192
    %s194 = ssub.s32 %s14, %s21
    %p195 = scmp.eq.s32.totalorder %s194, 0
    %s197 = sadd.s32 %s196, 1
    %s198 = scalar_select %p195, %s196, %s197
    %p201 = pneg %p195
    %p202 = scmp.eq.s32.totalorder %s14, 1
    %p203 = por %p201, %p202
    %p204 = scmp.ne.s32.totalorder %s196, %s199
    %p205 = scmp.eq.s32.totalorder %s14, 0
    %p206 = por %p204, %p205
    %p207 = scmp.ne.s32.totalorder %s196, %s199
    %p208 = scmp.eq.s32.totalorder %s19, 1
    %p209 = por %p207, %p208
    %p210 = scmp.ne.s32.totalorder %s199, %s200
    %p211 = scmp.eq.s32.totalorder %s19, 0
    %p212 = por %p210, %p211
    %p213 = scmp.ne.s32.totalorder %s199, %s200
    %p214 = scmp.eq.s32.totalorder %s20, 1
    %p215 = por %p213, %p214
    %p217 = scmp.ne.s32.totalorder %s200, %s216
    %p218 = scmp.eq.s32.totalorder %s20, 0
    %p219 = por %p217, %p218
    %p220 = scmp.le.s32.totalorder 1, %s14
    %p221 = scmp.lt.s32.totalorder %s14, 3
    %p222 = pnand %p220, %p221
    %p223 = pneg %p222
    // Predicated region
    $region9: #{residual_block_with_switchnorm.8} parent=5 // pred_check
      _
    $region10: #{residual_block_with_switchnorm.8} parent=5 // pred_check_branch
      %225 = sbr.rel (%p222) target = $region12
    $region11: #{residual_block_with_switchnorm.8} parent=5 // pred_region
      %s226 = ssub.s32 %s14, 1
      // Predicated region
      $region13: #{residual_block_with_switchnorm.8} parent=11 // pred_check
        %p227 = pneg %p113
      $region14: #{residual_block_with_switchnorm.8} parent=11 // pred_check_branch
        %229 = sbr.rel (%p227) target = $region16
      $region15: #{residual_block_with_switchnorm.8} parent=11 // pred_region
        _
      $region16: #{residual_block_with_switchnorm.8} parent=11 // pred_fallthru
        _
      // Predicated region
      $region17: #{residual_block_with_switchnorm.8} parent=11 // pred_check
        %p230 = pneg %p134
      $region18: #{residual_block_with_switchnorm.8} parent=11 // pred_check_branch
        %232 = sbr.rel (%p230) target = $region20
      $region19: #{residual_block_with_switchnorm.8} parent=11 // pred_region
        _
      $region20: #{residual_block_with_switchnorm.8} parent=11 // pred_fallthru
        _
    $region12: #{residual_block_with_switchnorm.8} parent=5 // pred_fallthru
      _
    %p233 = scmp.lt.s32.totalorder %s14, 2
    // Predicated region
    $region21: #{residual_block_with_switchnorm.8} parent=5 // pred_check
      %p234 = pneg %p233
    $region22: #{residual_block_with_switchnorm.8} parent=5 // pred_check_branch
      %236 = sbr.rel (%p234) target = $region24
    $region23: #{residual_block_with_switchnorm.8} parent=5 // pred_region
      // Predicated region
      $region25: #{residual_block_with_switchnorm.8} parent=23 // pred_check
        %p237 = pneg %p34
      $region26: #{residual_block_with_switchnorm.8} parent=23 // pred_check_branch
        %239 = sbr.rel (%p237) target = $region28
      $region27: #{residual_block_with_switchnorm.8} parent=23 // pred_region
        %p240 = scmp.lt.s32.totalorder %s14, 1
        %s241 = scalar_select %p240, %s14, 1
        %s242 = smul.addr %s241, 2
        %s243 = smul.addr %s242, 4
        %s244 = scalar_lea.vmem %s0, %s243
      $region28: #{residual_block_with_switchnorm.8} parent=23 // pred_fallthru
        _
      // Predicated region
      $region29: #{residual_block_with_switchnorm.8} parent=23 // pred_check
        %p245 = pneg %p60
      $region30: #{residual_block_with_switchnorm.8} parent=23 // pred_check_branch
        %247 = sbr.rel (%p245) target = $region32
      $region31: #{residual_block_with_switchnorm.8} parent=23 // pred_region
        %p248 = scmp.lt.s32.totalorder %s14, 1
        %s249 = scalar_select %p248, %s14, 1
        %s250 = smul.addr %s249, 4
        %s251 = scalar_lea.vmem %s1, %s250
      $region32: #{residual_block_with_switchnorm.8} parent=23 // pred_fallthru
        _
      // Predicated region
      $region33: #{residual_block_with_switchnorm.8} parent=23 // pred_check
        %p252 = pneg %p86
      $region34: #{residual_block_with_switchnorm.8} parent=23 // pred_check_branch
        %254 = sbr.rel (%p252) target = $region36
      $region35: #{residual_block_with_switchnorm.8} parent=23 // pred_region
        %p255 = scmp.lt.s32.totalorder %s14, 1
        %s256 = scalar_select %p255, %s14, 1
        %s257 = smul.addr %s256, 4
        %s258 = scalar_lea.vmem %s2, %s257
      $region36: #{residual_block_with_switchnorm.8} parent=23 // pred_fallthru
        _
    $region24: #{residual_block_with_switchnorm.8} parent=5 // pred_fallthru
      _
    %p259 = scmp.le.s32.totalorder 1, %s14
    %p260 = scmp.lt.s32.totalorder %s14, 3
    %p261 = pnand %p259, %p260
    %p262 = pneg %p261
    // Predicated region
    $region37: #{residual_block_with_switchnorm.8} parent=5 // pred_check
      _
    $region38: #{residual_block_with_switchnorm.8} parent=5 // pred_check_branch
      %264 = sbr.rel (%p261) target = $region40
    $region39: #{residual_block_with_switchnorm.8} parent=5 // pred_region
      %s265 = ssub.s32 %s14, 1
      %p266 = scmp.lt.s32.totalorder %s19, 1
      %s267 = scalar_select %p266, %s19, 1
      %s268 = smul.addr %s267, 2
      %s269 = smul.addr %s268, 4
      %s270 = scalar_lea.vmem %s0, %s269
      %p271 = pneg %p40
      %p272 = pneg %p37
      %p273 = scmp.lt.s32.totalorder %s19, 1
      %s274 = scalar_select %p273, %s19, 1
      %s275 = smul.addr %s274, 4
      %s276 = scalar_lea.vmem %s1, %s275
      %p277 = pneg %p66
      %p278 = pneg %p63
      %p279 = scmp.lt.s32.totalorder %s19, 1
      %s280 = scalar_select %p279, %s19, 1
      %s281 = smul.addr %s280, 4
      %s282 = scalar_lea.vmem %s2, %s281
      %p283 = pneg %p92
      %p284 = pneg %p89
      %p285 = pneg %p113
      %p286 = pneg %p110
      %p287 = pneg %p134
      %p288 = pneg %p131
      %p289 = pneg %p160
      %p290 = pneg %p157
      %p291 = scmp.lt.s32.totalorder %s19, 1
      %s292 = scalar_select %p291, %s19, 1
      %s293 = smul.addr %s292, 2
      %s294 = smul.addr %s293, 4
      %s295 = scalar_lea.vmem %s5, %s294
      %p296 = pneg %p186
      %p297 = pneg %p183
      %p298 = scmp.lt.s32.totalorder %s19, 1
      %s299 = scalar_select %p298, %s19, 1
      %s300 = scalar_lea.vmem %s6, %s299
      %p301 = pneg %p212
      %p302 = pneg %p209
      %p303 = scmp.lt.s32.totalorder %s19, 1
      %s304 = scalar_select %p303, %s19, 1
      %s305 = scalar_lea.vmem %s7, %s304
      %p306 = scmp.lt.s32.totalorder %s19, 1
      %s307 = scalar_select %p306, %s19, 1
      %s308 = smul.addr %s307, 2
      %s309 = smul.addr %s308, 4
      %s310 = scalar_lea.vmem %s0, %s309
      %p311 = scmp.lt.s32.totalorder %s19, 1
      %s312 = scalar_select %p311, %s19, 1
      %s313 = smul.addr %s312, 4
      %s314 = scalar_lea.vmem %s1, %s313
      %p315 = scmp.lt.s32.totalorder %s19, 1
      %s316 = scalar_select %p315, %s19, 1
      %s317 = smul.addr %s316, 4
      %s318 = scalar_lea.vmem %s2, %s317
      %p319 = scmp.lt.s32.totalorder %s19, 1
      %s320 = scalar_select %p319, %s19, 1
      %s321 = smul.addr %s320, 2
      %s322 = smul.addr %s321, 4
      %s323 = scalar_lea.vmem %s5, %s322
      %p324 = scmp.lt.s32.totalorder %s19, 1
      %s325 = scalar_select %p324, %s19, 1
      %s326 = scalar_lea.vmem %s6, %s325
      %p327 = scmp.lt.s32.totalorder %s19, 1
      %s328 = scalar_select %p327, %s19, 1
      %s329 = scalar_lea.vmem %s7, %s328
      %v330 = vld [vmem:[%s310] sm:$0xff]
      %v331 = vld [vmem:[%s314] sm:$0xf]
      %333 = vset.pattern.permute.xlu0 0
      %334 = vperm.xlu0 %333, %v331
      %v335 = vpop.permute.xlu0 %334
      %v337 = vunpack.c.l.s4 839922192
      %v338 = vunpack.c.0.s8 %v337
      %v339 = vlaneseq
      %v340 = vshrl.u32 %v339, 7
      %v341 = vsub.s32 %v338, %v340
      %v342 = vrot.slane %v335, %v341
      %v344 = vmul.f32 %v330, %v342
      %v345 = vld [vmem:[%s318] sm:$0xf]
      %347 = vset.pattern.permute.xlu0 0
      %348 = vperm.xlu0 %347, %v345
      %v349 = vpop.permute.xlu0 %348
      %v351 = vunpack.c.l.s4 839922192
      %v352 = vunpack.c.0.s8 %v351
      %v353 = vlaneseq
      %v354 = vshrl.u32 %v353, 7
      %v355 = vsub.s32 %v352, %v354
      %v356 = vrot.slane %v349, %v355
      %v358 = vadd.f32 %v344, %v356
      %vm359 = vcmp.gt.f32.partialorder %v358, 0.0
      %v360 = vmul.f32 %v358, 0.01
      %v361 = vsel %vm359, %v358, %v360
      %v362 = vld [vmem:[%s4] sm:$0xf]
      %v363 = vlaneseq
      %v364 = vand.u32 %v363, 127
      %v365 = vadd.s32 %v364, 128
      %vm366 = vcmp.lt.s32.totalorder %v364, 0
      %v367 = vsub.s32 0, %v364
      %v368 = vsel %vm366, %v367, %v364
      %v369 = vshrl.u32 %v368, 4
      %v370 = vand.u32 %v368, 15
      %v371 = vsub.s32 0, %v370
      %v372 = vsel %vm366, %v371, %v370
      %vm373 = vcmp.lt.s32.totalorder %v365, 0
      %v374 = vsub.s32 0, %v365
      %v375 = vsel %vm373, %v374, %v365
      %v376 = vshrl.u32 %v375, 4
      %v377 = vand.u32 %v375, 15
      %v378 = vsub.s32 0, %v377
      %v379 = vsel %vm373, %v378, %v377
      %vm380 = vcmp.ne.s32.totalorder %v372, 0
      %vm381 = vcmp.ne.s32.totalorder %v379, 0
      %vm382 = vcmp.lt.s32.totalorder %v372, 0
      %vm383 = vcmp.lt.s32.totalorder %v379, 0
      %vm384 = vmand %vm382, %vm380
      %vm385 = vmand %vm383, %vm381
      %v386 = vadd.s32 %v372, 16
      %v387 = vadd.s32 %v379, 16
      %v388 = vsel %vm384, %v386, %v372
      %v389 = vsel %vm385, %v387, %v379
      %vm390 = vcmp.eq.s32.totalorder %v388, 0
      %vm391 = vcmp.eq.s32.totalorder %v389, 0
      %v393 = vcombine.high %v361, %v361
      %395 = vrot.lane.b32.xlu0 %v361, 1
      %v396 = vpop.permute.xlu0 %395
      %397 = vrot.lane.b32.xlu0 %v393, 1
      %v398 = vpop.permute.xlu0 %397
      %vm399 = vcmp.lt.s32.totalorder %v364, 1
      %v400 = vsel %vm399, %v396, %v398
      %v401 = vsel %vm399, %v398, %v396
      %v402 = vsel %vm390, %v361, %v401
      %v403 = vsel %vm391, %v393, %v400
      %vm404 = vcmp.eq.s32.totalorder %v388, 15
      %vm405 = vcmp.eq.s32.totalorder %v389, 15
      %406 = vrot.lane.b32.xlu0 %v361, 127
      %v407 = vpop.permute.xlu0 %406
      %408 = vrot.lane.b32.xlu0 %v393, 127
      %v409 = vpop.permute.xlu0 %408
      %vm410 = vcmp.lt.s32.totalorder %v364, 127
      %v411 = vsel %vm410, %v407, %v409
      %v412 = vsel %vm410, %v409, %v407
      %v413 = vsel %vm404, %v361, %v411
      %v414 = vsel %vm405, %v393, %v412
      %v415 = vld [vmem:[%s3] sm:$0xf]
      %s416 = scalar_lea.vmem %s3, 4
      %v417 = vld [vmem:[%s416] sm:$0xf]
      %vm418 = vcmask 31744
      %v420 = vsel %vm418, %v417, 0
      %vm422 = vcmask 1043456
      %v423 = vsel %vm422, %v361, 0
      %v425 = vsel %vm422, %v393, 0
      %427 = vmatprep.subr.mxu0 %v425
      %428 = vmatpush1.msra.mxu0 %v423
      %429 = vmatprep.subr.mxu0 0.0
      %430 = vmatpush1.msra.mxu0 0.0
      %431 = vmatprep.subr.mxu0 0.0
      %432 = vmatpush1.msra.mxu0 0.0
      %433 = vmatprep.subr.mxu0 0.0
      %434 = vmatpush1.msra.mxu0 0.0
      %435 = vmatprep.subr.mxu0 0.0
      %436 = vmatpush1.msra.mxu0 0.0
      %437 = vmatprep.subr.mxu0 0.0
      %438 = vmatpush1.msra.mxu0 0.0
      %439 = vmatprep.subr.mxu0 0.0
      %440 = vmatpush1.msra.mxu0 0.0
      %441 = vmatprep.subr.mxu0 0.0
      %442 = vmatpush1.msra.mxu0 0.0
      %443 = vmatprep.subr.mxu0 0.0
      %444 = vmatpush1.msra.mxu0 0.0
      %445 = vmatprep.subr.mxu0 0.0
      %446 = vmatpush1.msra.mxu0 0.0
      %447 = vmatprep.subr.mxu0 0.0
      %448 = vmatpush1.msra.mxu0 0.0
      %449 = vmatprep.subr.mxu0 0.0
      %450 = vmatpush1.msra.mxu0 0.0
      %451 = vmatprep.subr.mxu0 0.0
      %452 = vmatpush1.msra.mxu0 0.0
      %453 = vmatprep.subr.mxu0 0.0
      %454 = vmatpush1.msra.mxu0 0.0
      %455 = vmatprep.subr.mxu0 0.0
      %456 = vmatpush1.msra.mxu0 0.0
      %457 = vmatprep.subr.mxu0 0.0
      %458 = vmatpush1.msra.mxu0 0.0
      %459 = vmatprep.subr.mxu0 0.0
      %460 = vmatpush1.msra.mxu0 0.0
      %461 = vmatprep.subr.mxu0 0.0
      %462 = vmatpush1.msra.mxu0 0.0
      %463 = vmatprep.subr.mxu0 0.0
      %464 = vmatpush1.msra.mxu0 0.0
      %465 = vmatprep.subr.mxu0 0.0
      %466 = vmatpush1.msra.mxu0 0.0
      %467 = vmatprep.subr.mxu0 0.0
      %468 = vmatpush1.msra.mxu0 0.0
      %469 = vmatprep.subr.mxu0 0.0
      %470 = vmatpush1.msra.mxu0 0.0
      %471 = vmatprep.subr.mxu0 0.0
      %472 = vmatpush1.msra.mxu0 0.0
      %473 = vmatprep.subr.mxu0 0.0
      %474 = vmatpush1.msra.mxu0 0.0
      %475 = vmatprep.subr.mxu0 0.0
      %476 = vmatpush1.msra.mxu0 0.0
      %477 = vmatprep.subr.mxu0 0.0
      %478 = vmatpush1.msra.mxu0 0.0
      %479 = vmatprep.subr.mxu0 0.0
      %480 = vmatpush1.msra.mxu0 0.0
      %481 = vmatprep.subr.mxu0 0.0
      %482 = vmatpush1.msra.mxu0 0.0
      %483 = vmatprep.subr.mxu0 0.0
      %484 = vmatpush1.msra.mxu0 0.0
      %485 = vmatprep.subr.mxu0 0.0
      %486 = vmatpush1.msra.mxu0 0.0
      %487 = vmatprep.subr.mxu0 0.0
      %488 = vmatpush1.msra.mxu0 0.0
      %489 = vmatprep.subr.mxu0 0.0
      %490 = vmatpush1.msra.mxu0 0.0
      %491 = vmatprep.mubr.f32.mxu0 0.0
      %492 = vmatmul.mubr.f32.gmra.mrb[0].mxu0 %v420
      %v493 = vpop.f32.mrb[0].mxu0
      %v494 = vadd.f32 0.0, %v493
      %v495 = vpop.f32.mrb[0].mxu0
      %v496 = vadd.f32 0.0, %v495
      %497 = vdwg.mxu0
      %v499 = vsel %vm418, %v415, 0
      %v502 = vsel %vm422, %v402, 0
      %v505 = vsel %vm422, %v403, 0
      %507 = vmatprep.subr.mxu0 %v505
      %508 = vmatpush1.msra.mxu0 %v502
      %509 = vmatprep.subr.mxu0 0.0
      %510 = vmatpush1.msra.mxu0 0.0
      %511 = vmatprep.subr.mxu0 0.0
      %512 = vmatpush1.msra.mxu0 0.0
      %513 = vmatprep.subr.mxu0 0.0
      %514 = vmatpush1.msra.mxu0 0.0
      %515 = vmatprep.subr.mxu0 0.0
      %516 = vmatpush1.msra.mxu0 0.0
      %517 = vmatprep.subr.mxu0 0.0
      %518 = vmatpush1.msra.mxu0 0.0
      %519 = vmatprep.subr.mxu0 0.0
      %520 = vmatpush1.msra.mxu0 0.0
      %521 = vmatprep.subr.mxu0 0.0
      %522 = vmatpush1.msra.mxu0 0.0
      %523 = vmatprep.subr.mxu0 0.0
      %524 = vmatpush1.msra.mxu0 0.0
      %525 = vmatprep.subr.mxu0 0.0
      %526 = vmatpush1.msra.mxu0 0.0
      %527 = vmatprep.subr.mxu0 0.0
      %528 = vmatpush1.msra.mxu0 0.0
      %529 = vmatprep.subr.mxu0 0.0
      %530 = vmatpush1.msra.mxu0 0.0
      %531 = vmatprep.subr.mxu0 0.0
      %532 = vmatpush1.msra.mxu0 0.0
      %533 = vmatprep.subr.mxu0 0.0
      %534 = vmatpush1.msra.mxu0 0.0
      %535 = vmatprep.subr.mxu0 0.0
      %536 = vmatpush1.msra.mxu0 0.0
      %537 = vmatprep.subr.mxu0 0.0
      %538 = vmatpush1.msra.mxu0 0.0
      %539 = vmatprep.subr.mxu0 0.0
      %540 = vmatpush1.msra.mxu0 0.0
      %541 = vmatprep.subr.mxu0 0.0
      %542 = vmatpush1.msra.mxu0 0.0
      %543 = vmatprep.subr.mxu0 0.0
      %544 = vmatpush1.msra.mxu0 0.0
      %545 = vmatprep.subr.mxu0 0.0
      %546 = vmatpush1.msra.mxu0 0.0
      %547 = vmatprep.subr.mxu0 0.0
      %548 = vmatpush1.msra.mxu0 0.0
      %549 = vmatprep.subr.mxu0 0.0
      %550 = vmatpush1.msra.mxu0 0.0
      %551 = vmatprep.subr.mxu0 0.0
      %552 = vmatpush1.msra.mxu0 0.0
      %553 = vmatprep.subr.mxu0 0.0
      %554 = vmatpush1.msra.mxu0 0.0
      %555 = vmatprep.subr.mxu0 0.0
      %556 = vmatpush1.msra.mxu0 0.0
      %557 = vmatprep.subr.mxu0 0.0
      %558 = vmatpush1.msra.mxu0 0.0
      %559 = vmatprep.subr.mxu0 0.0
      %560 = vmatpush1.msra.mxu0 0.0
      %561 = vmatprep.subr.mxu0 0.0
      %562 = vmatpush1.msra.mxu0 0.0
      %563 = vmatprep.subr.mxu0 0.0
      %564 = vmatpush1.msra.mxu0 0.0
      %565 = vmatprep.subr.mxu0 0.0
      %566 = vmatpush1.msra.mxu0 0.0
      %567 = vmatprep.subr.mxu0 0.0
      %568 = vmatpush1.msra.mxu0 0.0
      %569 = vmatprep.subr.mxu0 0.0
      %570 = vmatpush1.msra.mxu0 0.0
      %571 = vmatprep.mubr.f32.mxu0 0.0
      %572 = vmatmul.mubr.f32.gmra.mrb[0].mxu0 %v499
      %v573 = vpop.f32.mrb[0].mxu0
      %v574 = vadd.f32 %v494, %v573
      %v575 = vpop.f32.mrb[0].mxu0
      %v576 = vadd.f32 %v496, %v575
      %577 = vdwg.mxu0
      %s578 = scalar_lea.vmem %s3, 8
      %v579 = vld [vmem:[%s578] sm:$0xf]
      %v581 = vsel %vm418, %v579, 0
      %v584 = vsel %vm422, %v413, 0
      %v587 = vsel %vm422, %v414, 0
      %589 = vmatprep.subr.mxu0 %v587
      %590 = vmatpush1.msra.mxu0 %v584
      %591 = vmatprep.subr.mxu0 0.0
      %592 = vmatpush1.msra.mxu0 0.0
      %593 = vmatprep.subr.mxu0 0.0
      %594 = vmatpush1.msra.mxu0 0.0
      %595 = vmatprep.subr.mxu0 0.0
      %596 = vmatpush1.msra.mxu0 0.0
      %597 = vmatprep.subr.mxu0 0.0
      %598 = vmatpush1.msra.mxu0 0.0
      %599 = vmatprep.subr.mxu0 0.0
      %600 = vmatpush1.msra.mxu0 0.0
      %601 = vmatprep.subr.mxu0 0.0
      %602 = vmatpush1.msra.mxu0 0.0
      %603 = vmatprep.subr.mxu0 0.0
      %604 = vmatpush1.msra.mxu0 0.0
      %605 = vmatprep.subr.mxu0 0.0
      %606 = vmatpush1.msra.mxu0 0.0
      %607 = vmatprep.subr.mxu0 0.0
      %608 = vmatpush1.msra.mxu0 0.0
      %609 = vmatprep.subr.mxu0 0.0
      %610 = vmatpush1.msra.mxu0 0.0
      %611 = vmatprep.subr.mxu0 0.0
      %612 = vmatpush1.msra.mxu0 0.0
      %613 = vmatprep.subr.mxu0 0.0
      %614 = vmatpush1.msra.mxu0 0.0
      %615 = vmatprep.subr.mxu0 0.0
      %616 = vmatpush1.msra.mxu0 0.0
      %617 = vmatprep.subr.mxu0 0.0
      %618 = vmatpush1.msra.mxu0 0.0
      %619 = vmatprep.subr.mxu0 0.0
      %620 = vmatpush1.msra.mxu0 0.0
      %621 = vmatprep.subr.mxu0 0.0
      %622 = vmatpush1.msra.mxu0 0.0
      %623 = vmatprep.subr.mxu0 0.0
      %624 = vmatpush1.msra.mxu0 0.0
      %625 = vmatprep.subr.mxu0 0.0
      %626 = vmatpush1.msra.mxu0 0.0
      %627 = vmatprep.subr.mxu0 0.0
      %628 = vmatpush1.msra.mxu0 0.0
      %629 = vmatprep.subr.mxu0 0.0
      %630 = vmatpush1.msra.mxu0 0.0
      %631 = vmatprep.subr.mxu0 0.0
      %632 = vmatpush1.msra.mxu0 0.0
      %633 = vmatprep.subr.mxu0 0.0
      %634 = vmatpush1.msra.mxu0 0.0
      %635 = vmatprep.subr.mxu0 0.0
      %636 = vmatpush1.msra.mxu0 0.0
      %637 = vmatprep.subr.mxu0 0.0
      %638 = vmatpush1.msra.mxu0 0.0
      %639 = vmatprep.subr.mxu0 0.0
      %640 = vmatpush1.msra.mxu0 0.0
      %641 = vmatprep.subr.mxu0 0.0
      %642 = vmatpush1.msra.mxu0 0.0
      %643 = vmatprep.subr.mxu0 0.0
      %644 = vmatpush1.msra.mxu0 0.0
      %645 = vmatprep.subr.mxu0 0.0
      %646 = vmatpush1.msra.mxu0 0.0
      %647 = vmatprep.subr.mxu0 0.0
      %648 = vmatpush1.msra.mxu0 0.0
      %649 = vmatprep.subr.mxu0 0.0
      %650 = vmatpush1.msra.mxu0 0.0
      %651 = vmatprep.subr.mxu0 0.0
      %652 = vmatpush1.msra.mxu0 0.0
      %653 = vmatprep.mubr.f32.mxu0 0.0
      %654 = vmatmul.mubr.f32.gmra.mrb[0].mxu0 %v581
      %v655 = vpop.f32.mrb[0].mxu0
      %v656 = vadd.f32 0.0, %v655
      %v657 = vpop.f32.mrb[0].mxu0
      %v658 = vadd.f32 0.0, %v657
      %659 = vdwg.mxu0
      %v660 = vadd.f32 %v574, %v656
      %v661 = vadd.f32 %v576, %v658
      %s662 = scalar_lea.vmem %s3, 12
      %v663 = vld [vmem:[%s662] sm:$0xf]
      %s664 = scalar_lea.vmem %s3, 16
      %v665 = vld [vmem:[%s664] sm:$0xf]
      %v667 = vsel %vm418, %v665, 0
      %669 = vmatprep.subr.mxu0 %v425
      %670 = vmatpush1.msra.mxu0 %v423
      %671 = vmatprep.subr.mxu0 0.0
      %672 = vmatpush1.msra.mxu0 0.0
      %673 = vmatprep.subr.mxu0 0.0
      %674 = vmatpush1.msra.mxu0 0.0
      %675 = vmatprep.subr.mxu0 0.0
      %676 = vmatpush1.msra.mxu0 0.0
      %677 = vmatprep.subr.mxu0 0.0
      %678 = vmatpush1.msra.mxu0 0.0
      %679 = vmatprep.subr.mxu0 0.0
      %680 = vmatpush1.msra.mxu0 0.0
      %681 = vmatprep.subr.mxu0 0.0
      %682 = vmatpush1.msra.mxu0 0.0
      %683 = vmatprep.subr.mxu0 0.0
      %684 = vmatpush1.msra.mxu0 0.0
      %685 = vmatprep.subr.mxu0 0.0
      %686 = vmatpush1.msra.mxu0 0.0
      %687 = vmatprep.subr.mxu0 0.0
      %688 = vmatpush1.msra.mxu0 0.0
      %689 = vmatprep.subr.mxu0 0.0
      %690 = vmatpush1.msra.mxu0 0.0
      %691 = vmatprep.subr.mxu0 0.0
      %692 = vmatpush1.msra.mxu0 0.0
      %693 = vmatprep.subr.mxu0 0.0
      %694 = vmatpush1.msra.mxu0 0.0
      %695 = vmatprep.subr.mxu0 0.0
      %696 = vmatpush1.msra.mxu0 0.0
      %697 = vmatprep.subr.mxu0 0.0
      %698 = vmatpush1.msra.mxu0 0.0
      %699 = vmatprep.subr.mxu0 0.0
      %700 = vmatpush1.msra.mxu0 0.0
      %701 = vmatprep.subr.mxu0 0.0
      %702 = vmatpush1.msra.mxu0 0.0
      %703 = vmatprep.subr.mxu0 0.0
      %704 = vmatpush1.msra.mxu0 0.0
      %705 = vmatprep.subr.mxu0 0.0
      %706 = vmatpush1.msra.mxu0 0.0
      %707 = vmatprep.subr.mxu0 0.0
      %708 = vmatpush1.msra.mxu0 0.0
      %709 = vmatprep.subr.mxu0 0.0
      %710 = vmatpush1.msra.mxu0 0.0
      %711 = vmatprep.subr.mxu0 0.0
      %712 = vmatpush1.msra.mxu0 0.0
      %713 = vmatprep.subr.mxu0 0.0
      %714 = vmatpush1.msra.mxu0 0.0
      %715 = vmatprep.subr.mxu0 0.0
      %716 = vmatpush1.msra.mxu0 0.0
      %717 = vmatprep.subr.mxu0 0.0
      %718 = vmatpush1.msra.mxu0 0.0
      %719 = vmatprep.subr.mxu0 0.0
      %720 = vmatpush1.msra.mxu0 0.0
      %721 = vmatprep.subr.mxu0 0.0
      %722 = vmatpush1.msra.mxu0 0.0
      %723 = vmatprep.subr.mxu0 0.0
      %724 = vmatpush1.msra.mxu0 0.0
      %725 = vmatprep.subr.mxu0 0.0
      %726 = vmatpush1.msra.mxu0 0.0
      %727 = vmatprep.subr.mxu0 0.0
      %728 = vmatpush1.msra.mxu0 0.0
      %729 = vmatprep.subr.mxu0 0.0
      %730 = vmatpush1.msra.mxu0 0.0
      %731 = vmatprep.subr.mxu0 0.0
      %732 = vmatpush1.msra.mxu0 0.0
      %733 = vmatprep.mubr.f32.mxu0 0.0
      %734 = vmatmul.mubr.f32.gmra.mrb[0].mxu0 %v667
      %v735 = vpop.f32.mrb[0].mxu0
      %v736 = vadd.f32 0.0, %v735
      %v737 = vpop.f32.mrb[0].mxu0
      %v738 = vadd.f32 0.0, %v737
      %739 = vdwg.mxu0
      %v741 = vsel %vm418, %v663, 0
      %743 = vmatprep.subr.mxu0 %v505
      %744 = vmatpush1.msra.mxu0 %v502
      %745 = vmatprep.subr.mxu0 0.0
      %746 = vmatpush1.msra.mxu0 0.0
      %747 = vmatprep.subr.mxu0 0.0
      %748 = vmatpush1.msra.mxu0 0.0
      %749 = vmatprep.subr.mxu0 0.0
      %750 = vmatpush1.msra.mxu0 0.0
      %751 = vmatprep.subr.mxu0 0.0
      %752 = vmatpush1.msra.mxu0 0.0
      %753 = vmatprep.subr.mxu0 0.0
      %754 = vmatpush1.msra.mxu0 0.0
      %755 = vmatprep.subr.mxu0 0.0
      %756 = vmatpush1.msra.mxu0 0.0
      %757 = vmatprep.subr.mxu0 0.0
      %758 = vmatpush1.msra.mxu0 0.0
      %759 = vmatprep.subr.mxu0 0.0
      %760 = vmatpush1.msra.mxu0 0.0
      %761 = vmatprep.subr.mxu0 0.0
      %762 = vmatpush1.msra.mxu0 0.0
      %763 = vmatprep.subr.mxu0 0.0
      %764 = vmatpush1.msra.mxu0 0.0
      %765 = vmatprep.subr.mxu0 0.0
      %766 = vmatpush1.msra.mxu0 0.0
      %767 = vmatprep.subr.mxu0 0.0
      %768 = vmatpush1.msra.mxu0 0.0
      %769 = vmatprep.subr.mxu0 0.0
      %770 = vmatpush1.msra.mxu0 0.0
      %771 = vmatprep.subr.mxu0 0.0
      %772 = vmatpush1.msra.mxu0 0.0
      %773 = vmatprep.subr.mxu0 0.0
      %774 = vmatpush1.msra.mxu0 0.0
      %775 = vmatprep.subr.mxu0 0.0
      %776 = vmatpush1.msra.mxu0 0.0
      %777 = vmatprep.subr.mxu0 0.0
      %778 = vmatpush1.msra.mxu0 0.0
      %779 = vmatprep.subr.mxu0 0.0
      %780 = vmatpush1.msra.mxu0 0.0
      %781 = vmatprep.subr.mxu0 0.0
      %782 = vmatpush1.msra.mxu0 0.0
      %783 = vmatprep.subr.mxu0 0.0
      %784 = vmatpush1.msra.mxu0 0.0
      %785 = vmatprep.subr.mxu0 0.0
      %786 = vmatpush1.msra.mxu0 0.0
      %787 = vmatprep.subr.mxu0 0.0
      %788 = vmatpush1.msra.mxu0 0.0
      %789 = vmatprep.subr.mxu0 0.0
      %790 = vmatpush1.msra.mxu0 0.0
      %791 = vmatprep.subr.mxu0 0.0
      %792 = vmatpush1.msra.mxu0 0.0
      %793 = vmatprep.subr.mxu0 0.0
      %794 = vmatpush1.msra.mxu0 0.0
      %795 = vmatprep.subr.mxu0 0.0
      %796 = vmatpush1.msra.mxu0 0.0
      %797 = vmatprep.subr.mxu0 0.0
      %798 = vmatpush1.msra.mxu0 0.0
      %799 = vmatprep.subr.mxu0 0.0
      %800 = vmatpush1.msra.mxu0 0.0
      %801 = vmatprep.subr.mxu0 0.0
      %802 = vmatpush1.msra.mxu0 0.0
      %803 = vmatprep.subr.mxu0 0.0
      %804 = vmatpush1.msra.mxu0 0.0
      %805 = vmatprep.subr.mxu0 0.0
      %806 = vmatpush1.msra.mxu0 0.0
      %807 = vmatprep.mubr.f32.mxu0 0.0
      %808 = vmatmul.mubr.f32.gmra.mrb[0].mxu0 %v741
      %v809 = vpop.f32.mrb[0].mxu0
      %v810 = vadd.f32 %v736, %v809
      %v811 = vpop.f32.mrb[0].mxu0
      %v812 = vadd.f32 %v738, %v811
      %813 = vdwg.mxu0
      %s814 = scalar_lea.vmem %s3, 20
      %v815 = vld [vmem:[%s814] sm:$0xf]
      %v817 = vsel %vm418, %v815, 0
      %819 = vmatprep.subr.mxu0 %v587
      %820 = vmatpush1.msra.mxu0 %v584
      %821 = vmatprep.subr.mxu0 0.0
      %822 = vmatpush1.msra.mxu0 0.0
      %823 = vmatprep.subr.mxu0 0.0
      %824 = vmatpush1.msra.mxu0 0.0
      %825 = vmatprep.subr.mxu0 0.0
      %826 = vmatpush1.msra.mxu0 0.0
      %827 = vmatprep.subr.mxu0 0.0
      %828 = vmatpush1.msra.mxu0 0.0
      %829 = vmatprep.subr.mxu0 0.0
      %830 = vmatpush1.msra.mxu0 0.0
      %831 = vmatprep.subr.mxu0 0.0
      %832 = vmatpush1.msra.mxu0 0.0
      %833 = vmatprep.subr.mxu0 0.0
      %834 = vmatpush1.msra.mxu0 0.0
      %835 = vmatprep.subr.mxu0 0.0
      %836 = vmatpush1.msra.mxu0 0.0
      %837 = vmatprep.subr.mxu0 0.0
      %838 = vmatpush1.msra.mxu0 0.0
      %839 = vmatprep.subr.mxu0 0.0
      %840 = vmatpush1.msra.mxu0 0.0
      %841 = vmatprep.subr.mxu0 0.0
      %842 = vmatpush1.msra.mxu0 0.0
      %843 = vmatprep.subr.mxu0 0.0
      %844 = vmatpush1.msra.mxu0 0.0
      %845 = vmatprep.subr.mxu0 0.0
      %846 = vmatpush1.msra.mxu0 0.0
      %847 = vmatprep.subr.mxu0 0.0
      %848 = vmatpush1.msra.mxu0 0.0
      %849 = vmatprep.subr.mxu0 0.0
      %850 = vmatpush1.msra.mxu0 0.0
      %851 = vmatprep.subr.mxu0 0.0
      %852 = vmatpush1.msra.mxu0 0.0
      %853 = vmatprep.subr.mxu0 0.0
      %854 = vmatpush1.msra.mxu0 0.0
      %855 = vmatprep.subr.mxu0 0.0
      %856 = vmatpush1.msra.mxu0 0.0
      %857 = vmatprep.subr.mxu0 0.0
      %858 = vmatpush1.msra.mxu0 0.0
      %859 = vmatprep.subr.mxu0 0.0
      %860 = vmatpush1.msra.mxu0 0.0
      %861 = vmatprep.subr.mxu0 0.0
      %862 = vmatpush1.msra.mxu0 0.0
      %863 = vmatprep.subr.mxu0 0.0
      %864 = vmatpush1.msra.mxu0 0.0
      %865 = vmatprep.subr.mxu0 0.0
      %866 = vmatpush1.msra.mxu0 0.0
      %867 = vmatprep.subr.mxu0 0.0
      %868 = vmatpush1.msra.mxu0 0.0
      %869 = vmatprep.subr.mxu0 0.0
      %870 = vmatpush1.msra.mxu0 0.0
      %871 = vmatprep.subr.mxu0 0.0
      %872 = vmatpush1.msra.mxu0 0.0
      %873 = vmatprep.subr.mxu0 0.0
      %874 = vmatpush1.msra.mxu0 0.0
      %875 = vmatprep.subr.mxu0 0.0
      %876 = vmatpush1.msra.mxu0 0.0
      %877 = vmatprep.subr.mxu0 0.0
      %878 = vmatpush1.msra.mxu0 0.0
      %879 = vmatprep.subr.mxu0 0.0
      %880 = vmatpush1.msra.mxu0 0.0
      %881 = vmatprep.subr.mxu0 0.0
      %882 = vmatpush1.msra.mxu0 0.0
      %883 = vmatprep.mubr.f32.mxu0 0.0
      %884 = vmatmul.mubr.f32.gmra.mrb[0].mxu0 %v817
      %v885 = vpop.f32.mrb[0].mxu0
      %v886 = vadd.f32 0.0, %v885
      %v887 = vpop.f32.mrb[0].mxu0
      %v888 = vadd.f32 0.0, %v887
      %889 = vdwg.mxu0
      %v890 = vadd.f32 %v810, %v886
      %v891 = vadd.f32 %v812, %v888
      %s892 = scalar_lea.vmem %s3, 24
      %v893 = vld [vmem:[%s892] sm:$0xf]
      %s894 = scalar_lea.vmem %s3, 28
      %v895 = vld [vmem:[%s894] sm:$0xf]
      %v897 = vsel %vm418, %v895, 0
      %899 = vmatprep.subr.mxu0 %v425
      %900 = vmatpush1.msra.mxu0 %v423
      %901 = vmatprep.subr.mxu0 0.0
      %902 = vmatpush1.msra.mxu0 0.0
      %903 = vmatprep.subr.mxu0 0.0
      %904 = vmatpush1.msra.mxu0 0.0
      %905 = vmatprep.subr.mxu0 0.0
      %906 = vmatpush1.msra.mxu0 0.0
      %907 = vmatprep.subr.mxu0 0.0
      %908 = vmatpush1.msra.mxu0 0.0
      %909 = vmatprep.subr.mxu0 0.0
      %910 = vmatpush1.msra.mxu0 0.0
      %911 = vmatprep.subr.mxu0 0.0
      %912 = vmatpush1.msra.mxu0 0.0
      %913 = vmatprep.subr.mxu0 0.0
      %914 = vmatpush1.msra.mxu0 0.0
      %915 = vmatprep.subr.mxu0 0.0
      %916 = vmatpush1.msra.mxu0 0.0
      %917 = vmatprep.subr.mxu0 0.0
      %918 = vmatpush1.msra.mxu0 0.0
      %919 = vmatprep.subr.mxu0 0.0
      %920 = vmatpush1.msra.mxu0 0.0
      %921 = vmatprep.subr.mxu0 0.0
      %922 = vmatpush1.msra.mxu0 0.0
      %923 = vmatprep.subr.mxu0 0.0
      %924 = vmatpush1.msra.mxu0 0.0
      %925 = vmatprep.subr.mxu0 0.0
      %926 = vmatpush1.msra.mxu0 0.0
      %927 = vmatprep.subr.mxu0 0.0
      %928 = vmatpush1.msra.mxu0 0.0
      %929 = vmatprep.subr.mxu0 0.0
      %930 = vmatpush1.msra.mxu0 0.0
      %931 = vmatprep.subr.mxu0 0.0
      %932 = vmatpush1.msra.mxu0 0.0
      %933 = vmatprep.subr.mxu0 0.0
      %934 = vmatpush1.msra.mxu0 0.0
      %935 = vmatprep.subr.mxu0 0.0
      %936 = vmatpush1.msra.mxu0 0.0
      %937 = vmatprep.subr.mxu0 0.0
      %938 = vmatpush1.msra.mxu0 0.0
      %939 = vmatprep.subr.mxu0 0.0
      %940 = vmatpush1.msra.mxu0 0.0
      %941 = vmatprep.subr.mxu0 0.0
      %942 = vmatpush1.msra.mxu0 0.0
      %943 = vmatprep.subr.mxu0 0.0
      %944 = vmatpush1.msra.mxu0 0.0
      %945 = vmatprep.subr.mxu0 0.0
      %946 = vmatpush1.msra.mxu0 0.0
      %947 = vmatprep.subr.mxu0 0.0
      %948 = vmatpush1.msra.mxu0 0.0
      %949 = vmatprep.subr.mxu0 0.0
      %950 = vmatpush1.msra.mxu0 0.0
      %951 = vmatprep.subr.mxu0 0.0
      %952 = vmatpush1.msra.mxu0 0.0
      %953 = vmatprep.subr.mxu0 0.0
      %954 = vmatpush1.msra.mxu0 0.0
      %955 = vmatprep.subr.mxu0 0.0
      %956 = vmatpush1.msra.mxu0 0.0
      %957 = vmatprep.subr.mxu0 0.0
      %958 = vmatpush1.msra.mxu0 0.0
      %959 = vmatprep.subr.mxu0 0.0
      %960 = vmatpush1.msra.mxu0 0.0
      %961 = vmatprep.subr.mxu0 0.0
      %962 = vmatpush1.msra.mxu0 0.0
      %963 = vmatprep.mubr.f32.mxu0 0.0
      %964 = vmatmul.mubr.f32.gmra.mrb[0].mxu0 %v897
      %v965 = vpop.f32.mrb[0].mxu0
      %v966 = vadd.f32 0.0, %v965
      %v967 = vpop.f32.mrb[0].mxu0
      %v968 = vadd.f32 0.0, %v967
      %969 = vdwg.mxu0
      %v971 = vsel %vm418, %v893, 0
      %973 = vmatprep.subr.mxu0 %v505
      %974 = vmatpush1.msra.mxu0 %v502
      %975 = vmatprep.subr.mxu0 0.0
      %976 = vmatpush1.msra.mxu0 0.0
      %977 = vmatprep.subr.mxu0 0.0
      %978 = vmatpush1.msra.mxu0 0.0
      %979 = vmatprep.subr.mxu0 0.0
      %980 = vmatpush1.msra.mxu0 0.0
      %981 = vmatprep.subr.mxu0 0.0
      %982 = vmatpush1.msra.mxu0 0.0
      %983 = vmatprep.subr.mxu0 0.0
      %984 = vmatpush1.msra.mxu0 0.0
      %985 = vmatprep.subr.mxu0 0.0
      %986 = vmatpush1.msra.mxu0 0.0
      %987 = vmatprep.subr.mxu0 0.0
      %988 = vmatpush1.msra.mxu0 0.0
      %989 = vmatprep.subr.mxu0 0.0
      %990 = vmatpush1.msra.mxu0 0.0
      %991 = vmatprep.subr.mxu0 0.0
      %992 = vmatpush1.msra.mxu0 0.0
      %993 = vmatprep.subr.mxu0 0.0
      %994 = vmatpush1.msra.mxu0 0.0
      %995 = vmatprep.subr.mxu0 0.0
      %996 = vmatpush1.msra.mxu0 0.0
      %997 = vmatprep.subr.mxu0 0.0
      %998 = vmatpush1.msra.mxu0 0.0
      %999 = vmatprep.subr.mxu0 0.0
      %1000 = vmatpush1.msra.mxu0 0.0
      %1001 = vmatprep.subr.mxu0 0.0
      %1002 = vmatpush1.msra.mxu0 0.0
      %1003 = vmatprep.subr.mxu0 0.0
      %1004 = vmatpush1.msra.mxu0 0.0
      %1005 = vmatprep.subr.mxu0 0.0
      %1006 = vmatpush1.msra.mxu0 0.0
      %1007 = vmatprep.subr.mxu0 0.0
      %1008 = vmatpush1.msra.mxu0 0.0
      %1009 = vmatprep.subr.mxu0 0.0
      %1010 = vmatpush1.msra.mxu0 0.0
      %1011 = vmatprep.subr.mxu0 0.0
      %1012 = vmatpush1.msra.mxu0 0.0
      %1013 = vmatprep.subr.mxu0 0.0
      %1014 = vmatpush1.msra.mxu0 0.0
      %1015 = vmatprep.subr.mxu0 0.0
      %1016 = vmatpush1.msra.mxu0 0.0
      %1017 = vmatprep.subr.mxu0 0.0
      %1018 = vmatpush1.msra.mxu0 0.0
      %1019 = vmatprep.subr.mxu0 0.0
      %1020 = vmatpush1.msra.mxu0 0.0
      %1021 = vmatprep.subr.mxu0 0.0
      %1022 = vmatpush1.msra.mxu0 0.0
      %1023 = vmatprep.subr.mxu0 0.0
      %1024 = vmatpush1.msra.mxu0 0.0
      %1025 = vmatprep.subr.mxu0 0.0
      %1026 = vmatpush1.msra.mxu0 0.0
      %1027 = vmatprep.subr.mxu0 0.0
      %1028 = vmatpush1.msra.mxu0 0.0
      %1029 = vmatprep.subr.mxu0 0.0
      %1030 = vmatpush1.msra.mxu0 0.0
      %1031 = vmatprep.subr.mxu0 0.0
      %1032 = vmatpush1.msra.mxu0 0.0
      %1033 = vmatprep.subr.mxu0 0.0
      %1034 = vmatpush1.msra.mxu0 0.0
      %1035 = vmatprep.subr.mxu0 0.0
      %1036 = vmatpush1.msra.mxu0 0.0
      %1037 = vmatprep.mubr.f32.mxu0 0.0
      %1038 = vmatmul.mubr.f32.gmra.mrb[0].mxu0 %v971
      %v1039 = vpop.f32.mrb[0].mxu0
      %v1040 = vadd.f32 %v966, %v1039
      %v1041 = vpop.f32.mrb[0].mxu0
      %v1042 = vadd.f32 %v968, %v1041
      %1043 = vdwg.mxu0
      %s1044 = scalar_lea.vmem %s3, 32
      %v1045 = vld [vmem:[%s1044] sm:$0xf]
      %v1047 = vsel %vm418, %v1045, 0
      %1049 = vmatprep.subr.mxu0 %v587
      %1050 = vmatpush1.msra.mxu0 %v584
      %1051 = vmatprep.subr.mxu0 0.0
      %1052 = vmatpush1.msra.mxu0 0.0
      %1053 = vmatprep.subr.mxu0 0.0
      %1054 = vmatpush1.msra.mxu0 0.0
      %1055 = vmatprep.subr.mxu0 0.0
      %1056 = vmatpush1.msra.mxu0 0.0
      %1057 = vmatprep.subr.mxu0 0.0
      %1058 = vmatpush1.msra.mxu0 0.0
      %1059 = vmatprep.subr.mxu0 0.0
      %1060 = vmatpush1.msra.mxu0 0.0
      %1061 = vmatprep.subr.mxu0 0.0
      %1062 = vmatpush1.msra.mxu0 0.0
      %1063 = vmatprep.subr.mxu0 0.0
      %1064 = vmatpush1.msra.mxu0 0.0
      %1065 = vmatprep.subr.mxu0 0.0
      %1066 = vmatpush1.msra.mxu0 0.0
      %1067 = vmatprep.subr.mxu0 0.0
      %1068 = vmatpush1.msra.mxu0 0.0
      %1069 = vmatprep.subr.mxu0 0.0
      %1070 = vmatpush1.msra.mxu0 0.0
      %1071 = vmatprep.subr.mxu0 0.0
      %1072 = vmatpush1.msra.mxu0 0.0
      %1073 = vmatprep.subr.mxu0 0.0
      %1074 = vmatpush1.msra.mxu0 0.0
      %1075 = vmatprep.subr.mxu0 0.0
      %1076 = vmatpush1.msra.mxu0 0.0
      %1077 = vmatprep.subr.mxu0 0.0
      %1078 = vmatpush1.msra.mxu0 0.0
      %1079 = vmatprep.subr.mxu0 0.0
      %1080 = vmatpush1.msra.mxu0 0.0
      %1081 = vmatprep.subr.mxu0 0.0
      %1082 = vmatpush1.msra.mxu0 0.0
      %1083 = vmatprep.subr.mxu0 0.0
      %1084 = vmatpush1.msra.mxu0 0.0
      %1085 = vmatprep.subr.mxu0 0.0
      %1086 = vmatpush1.msra.mxu0 0.0
      %1087 = vmatprep.subr.mxu0 0.0
      %1088 = vmatpush1.msra.mxu0 0.0
      %1089 = vmatprep.subr.mxu0 0.0
      %1090 = vmatpush1.msra.mxu0 0.0
      %1091 = vmatprep.subr.mxu0 0.0
      %1092 = vmatpush1.msra.mxu0 0.0
      %1093 = vmatprep.subr.mxu0 0.0
      %1094 = vmatpush1.msra.mxu0 0.0
      %1095 = vmatprep.subr.mxu0 0.0
      %1096 = vmatpush1.msra.mxu0 0.0
      %1097 = vmatprep.subr.mxu0 0.0
      %1098 = vmatpush1.msra.mxu0 0.0
      %1099 = vmatprep.subr.mxu0 0.0
      %1100 = vmatpush1.msra.mxu0 0.0
      %1101 = vmatprep.subr.mxu0 0.0
      %1102 = vmatpush1.msra.mxu0 0.0
      %1103 = vmatprep.subr.mxu0 0.0
      %1104 = vmatpush1.msra.mxu0 0.0
      %1105 = vmatprep.subr.mxu0 0.0
      %1106 = vmatpush1.msra.mxu0 0.0
      %1107 = vmatprep.subr.mxu0 0.0
      %1108 = vmatpush1.msra.mxu0 0.0
      %1109 = vmatprep.subr.mxu0 0.0
      %1110 = vmatpush1.msra.mxu0 0.0
      %1111 = vmatprep.subr.mxu0 0.0
      %1112 = vmatpush1.msra.mxu0 0.0
      %1113 = vmatprep.mubr.f32.mxu0 0.0
      %1114 = vmatmul.mubr.f32.gmra.mrb[0].mxu0 %v1047
      %v1115 = vpop.f32.mrb[0].mxu0
      %v1116 = vadd.f32 0.0, %v1115
      %v1117 = vpop.f32.mrb[0].mxu0
      %v1118 = vadd.f32 0.0, %v1117
      %1119 = vdwg.mxu0
      %v1120 = vadd.f32 %v1040, %v1116
      %v1121 = vadd.f32 %v1042, %v1118
      %vm1122 = vcmp.lt.s32.totalorder %v364, 16
      %vm1123 = vcmp.lt.s32.totalorder %v365, 16
      %vm1124 = vcmp.ge.s32.totalorder %v364, 240
      %vm1125 = vcmp.ge.s32.totalorder %v365, 240
      %1126 = vrot.lane.b32.xlu0 %v660, 16
      %v1127 = vpop.permute.xlu0 %1126
      %1128 = vrot.lane.b32.xlu0 %v661, 16
      %v1129 = vpop.permute.xlu0 %1128
      %v1130 = vsel %vm1122, %v1127, %v1129
      %v1131 = vsel %vm1122, %v1129, %v1127
      %v1132 = vsel %vm1122, %v660, %v1131
      %v1133 = vsel %vm1123, %v661, %v1130
      %v1134 = vadd.f32 %v890, %v1132
      %v1135 = vadd.f32 %v891, %v1133
      %1136 = vrot.lane.b32.xlu0 %v1120, 112
      %v1137 = vpop.permute.xlu0 %1136
      %1138 = vrot.lane.b32.xlu0 %v1121, 112
      %v1139 = vpop.permute.xlu0 %1138
      %vm1140 = vcmp.lt.s32.totalorder %v364, 112
      %v1141 = vsel %vm1140, %v1137, %v1139
      %v1142 = vsel %vm1140, %v1139, %v1137
      %v1143 = vsel %vm1124, %v1120, %v1141
      %v1144 = vsel %vm1125, %v1121, %v1142
      %v1145 = vadd.f32 %v1134, %v1143
      %v1146 = vadd.f32 %v1135, %v1144
      %1148 = vset.pattern.permute.xlu0 0
      %1149 = vperm.xlu0 %1148, %v362
      %v1150 = vpop.permute.xlu0 %1149
      %v1152 = vadd.f32 %v1145, %v1150
      %v1153 = vadd.f32 %v1146, %v1150
      %v1156 = vcombine.low %v1152, %v1153
      %1158 = vst [vmem:[%s323] sm:$0xff] %v1156
      %v1159 = vsel %vm422, %v1152, 0.0
      %v1160 = vsel %vm422, %v1153, 0.0
      %v1161 = vadd.f32 %v1159, %v1160
      %1162 = vadd.xlane.f32.xlu0 %v1161
      %v1163 = vpop.xlane.xlu0 %1162
      %v1165 = vlaneseq
      %v1166 = vshrl.u32 %v1165, 7
      %v1167 = vsub.s32 %v364, %v1166
      %v1168 = vrot.slane %v1163, %v1167
      %vm1170 = vcmask 24576
      %1171 = vst.msk [vmem:[%s326] sm:$0x1] %vm1170, %v1168
      %v1172 = vmul.f32 %v1152, %v1152
      %v1173 = vmul.f32 %v1153, %v1153
      %v1174 = vsel %vm422, %v1172, 0.0
      %v1175 = vsel %vm422, %v1173, 0.0
      %v1176 = vadd.f32 %v1174, %v1175
      %1177 = vadd.xlane.f32.xlu0 %v1176
      %v1178 = vpop.xlane.xlu0 %1177
      %v1180 = vlaneseq
      %v1181 = vshrl.u32 %v1180, 7
      %v1182 = vsub.s32 %v364, %v1181
      %v1183 = vrot.slane %v1178, %v1182
      %1185 = vst.msk [vmem:[%s329] sm:$0x1] %vm1170, %v1183
      %p1186 = scmp.lt.s32.totalorder %s19, 1
      %s1187 = scalar_select %p1186, %s19, 1
      %s1188 = smul.addr %s1187, 2
      %s1189 = smul.addr %s1188, 4
      %s1190 = scalar_lea.vmem %s5, %s1189
      %p1191 = scmp.lt.s32.totalorder %s19, 1
      %s1192 = scalar_select %p1191, %s19, 1
      %s1193 = scalar_lea.vmem %s6, %s1192
      %p1194 = scmp.lt.s32.totalorder %s19, 1
      %s1195 = scalar_select %p1194, %s19, 1
      %s1196 = scalar_lea.vmem %s7, %s1195
      // Predicated region
      $region41: #{residual_block_with_switchnorm.8} parent=39 // pred_check
        %p1197 = pneg %p157
      $region42: #{residual_block_with_switchnorm.8} parent=39 // pred_check_branch
        %1199 = sbr.rel (%p1197) target = $region44
      $region43: #{residual_block_with_switchnorm.8} parent=39 // pred_region
        _
      $region44: #{residual_block_with_switchnorm.8} parent=39 // pred_fallthru
        _
      // Predicated region
      $region45: #{residual_block_with_switchnorm.8} parent=39 // pred_check
        %p1200 = pneg %p183
      $region46: #{residual_block_with_switchnorm.8} parent=39 // pred_check_branch
        %1202 = sbr.rel (%p1200) target = $region48
      $region47: #{residual_block_with_switchnorm.8} parent=39 // pred_region
        _
      $region48: #{residual_block_with_switchnorm.8} parent=39 // pred_fallthru
        _
      // Predicated region
      $region49: #{residual_block_with_switchnorm.8} parent=39 // pred_check
        %p1203 = pneg %p209
      $region50: #{residual_block_with_switchnorm.8} parent=39 // pred_check_branch
        %1205 = sbr.rel (%p1203) target = $region52
      $region51: #{residual_block_with_switchnorm.8} parent=39 // pred_region
        _
      $region52: #{residual_block_with_switchnorm.8} parent=39 // pred_fallthru
        _
    $region40: #{residual_block_with_switchnorm.8} parent=5 // pred_fallthru
      _
    %p1206 = scmp.le.s32.totalorder 2, %s14
    // Predicated region
    $region53: #{residual_block_with_switchnorm.8} parent=5 // pred_check
      %p1207 = pneg %p1206
    $region54: #{residual_block_with_switchnorm.8} parent=5 // pred_check_branch
      %1209 = sbr.rel (%p1207) target = $region56
    $region55: #{residual_block_with_switchnorm.8} parent=5 // pred_region
      %s1210 = ssub.s32 %s14, 2
      // Predicated region
      $region57: #{residual_block_with_switchnorm.8} parent=55 // pred_check
        %p1211 = pneg %p163
      $region58: #{residual_block_with_switchnorm.8} parent=55 // pred_check_branch
        %1213 = sbr.rel (%p1211) target = $region60
      $region59: #{residual_block_with_switchnorm.8} parent=55 // pred_region
        %p1214 = scmp.lt.s32.totalorder %s20, 1
        %s1215 = scalar_select %p1214, %s20, 1
        %s1216 = smul.addr %s1215, 2
        %s1217 = smul.addr %s1216, 4
        %s1218 = scalar_lea.vmem %s5, %s1217
      $region60: #{residual_block_with_switchnorm.8} parent=55 // pred_fallthru
        _
      // Predicated region
      $region61: #{residual_block_with_switchnorm.8} parent=55 // pred_check
        %p1219 = pneg %p189
      $region62: #{residual_block_with_switchnorm.8} parent=55 // pred_check_branch
        %1221 = sbr.rel (%p1219) target = $region64
      $region63: #{residual_block_with_switchnorm.8} parent=55 // pred_region
        %p1222 = scmp.lt.s32.totalorder %s20, 1
        %s1223 = scalar_select %p1222, %s20, 1
        %s1224 = scalar_lea.vmem %s6, %s1223
      $region64: #{residual_block_with_switchnorm.8} parent=55 // pred_fallthru
        _
      // Predicated region
      $region65: #{residual_block_with_switchnorm.8} parent=55 // pred_check
        %p1225 = pneg %p215
      $region66: #{residual_block_with_switchnorm.8} parent=55 // pred_check_branch
        %1227 = sbr.rel (%p1225) target = $region68
      $region67: #{residual_block_with_switchnorm.8} parent=55 // pred_region
        %p1228 = scmp.lt.s32.totalorder %s20, 1
        %s1229 = scalar_select %p1228, %s20, 1
        %s1230 = scalar_lea.vmem %s7, %s1229
      $region68: #{residual_block_with_switchnorm.8} parent=55 // pred_fallthru
        _
    $region56: #{residual_block_with_switchnorm.8} parent=5 // pred_fallthru
      _
  $region6: #{residual_block_with_switchnorm.8} parent=0 // loop_footer
    %s18 = sadd.s32 1, %s14
  $region7: #{residual_block_with_switchnorm.8} parent=0 // loop_footer_branch
    %13 = sbr.rel target = $region3
  $region8: #{residual_block_with_switchnorm.8} parent=0 // loop_exit
    _

// kernel: residual_block_with_switchnorm.6
$region0: #{residual_block_with_switchnorm.6}
  #allocation0 [shape = 'u32[]', space=smem, size = 0x4, offset = 0x4, fixed_abs, tag = 'smem constant byte address 0x4 - core index']
  #allocation1 [shape = 'u32[144,128]{1,0:T(1,128)}', space=vmem, size = 0x12000, scoped, tag = 'internal scratch']
  %s0 = inlined_call_operand.vmem [shape: f32[2,8,128], index: 0, kind: input, shape index: {}]
  %s1 = inlined_call_operand.vmem [shape: f32[16,8], index: 1, kind: input, shape index: {}]
  %s2 = inlined_call_operand.vmem [shape: f32[16,1], index: 2, kind: input, shape index: {}]
  %s3 = inlined_call_operand.vmem [shape: f32[2,16,128], index: 3, kind: output, shape index: {}]
  %s4 = sld [smem:[#allocation0]]
  $region45: #{residual_block_with_switchnorm.6} parent=0
    _
  %s6 = ssub.s32 1, %s4
  %s7 = scalar_select 0, %s6, %s4
  loop: start=0, step=1, limit=4
  $region2: #{residual_block_with_switchnorm.6} parent=0 // loop_pre_header
    _
  $region3: #{residual_block_with_switchnorm.6} parent=0 // loop_header
    %s9 = sphi 0, %s13
    %p10 = scmp.ge.s32.totalorder %s9, 4
    %s16 = sphi 0, %s28
    %s17 = sphi 0, %s24
    %s18 = sphi 0, %s16
    %s19 = sphi 0, %s17
    %s20 = sphi 0, %s18
    %s21 = sphi 0, %s19
    %s33 = sphi 0, %s35
    %s36 = sphi 0, %s33
    %s37 = sphi 0, %s36
    %s53 = sphi 0, %s37
    %s57 = sphi 0, %s57
    %s59 = sphi 0, %s57
    %s60 = sphi 0, %s59
    %s74 = sphi 0, %s60
    %s78 = sphi 0, %s78
    %s80 = sphi 0, %s78
    %s81 = sphi 0, %s80
    %s95 = sphi 0, %s81
    %s103 = sphi 0, %s105
    %s106 = sphi 0, %s103
    %s107 = sphi 0, %s106
    %s123 = sphi 0, %s107
  $region4: #{residual_block_with_switchnorm.6} parent=0 // loop_header_branch
    %12 = sbr.rel (%p10) target = $region8
  $region5: #{residual_block_with_switchnorm.6} parent=0 // loop_body
    %s14 = ssub.s32 %s9, 1
    %s15 = ssub.s32 %s9, 2
    %s22 = sadd.s32 1, %s17
    %p23 = scmp.ge.s32.totalorder %s22, 1
    %s24 = scalar_select %p23, 0, %s22
    %s25 = sadd.s32 1, %s16
    %s26 = scalar_select %p23, %s25, %s16
    %p27 = scmp.ge.s32.totalorder %s26, 2
    %s28 = scalar_select %p27, 0, %s26
    %s29 = ssub.s32 %s16, %s28
    %s30 = ssub.s32 %s17, %s24
    %s31 = sor.u32 %s29, %s30
    %p32 = scmp.eq.s32.totalorder %s31, 0
    %s34 = sadd.s32 %s33, 1
    %s35 = scalar_select %p32, %s33, %s34
    %p38 = pneg %p32
    %p39 = scmp.eq.s32.totalorder %s9, 1
    %p40 = por %p38, %p39
    %p41 = scmp.ne.s32.totalorder %s33, %s36
    %p42 = scmp.eq.s32.totalorder %s9, 0
    %p43 = por %p41, %p42
    %p44 = scmp.ne.s32.totalorder %s33, %s36
    %p45 = scmp.eq.s32.totalorder %s14, 1
    %p46 = por %p44, %p45
    %p47 = scmp.ne.s32.totalorder %s36, %s37
    %p48 = scmp.eq.s32.totalorder %s14, 0
    %p49 = por %p47, %p48
    %p50 = scmp.ne.s32.totalorder %s36, %s37
    %p51 = scmp.eq.s32.totalorder %s15, 1
    %p52 = por %p50, %p51
    %p54 = scmp.ne.s32.totalorder %s37, %s53
    %p55 = scmp.eq.s32.totalorder %s15, 0
    %p56 = por %p54, %p55
    %s58 = sadd.s32 %s57, 1
    %p61 = scmp.eq.s32.totalorder %s9, 1
    %p62 = scmp.ne.s32.totalorder %s57, %s59
    %p63 = scmp.eq.s32.totalorder %s9, 0
    %p64 = por %p62, %p63
    %p65 = scmp.ne.s32.totalorder %s57, %s59
    %p66 = scmp.eq.s32.totalorder %s14, 1
    %p67 = por %p65, %p66
    %p68 = scmp.ne.s32.totalorder %s59, %s60
    %p69 = scmp.eq.s32.totalorder %s14, 0
    %p70 = por %p68, %p69
    %p71 = scmp.ne.s32.totalorder %s59, %s60
    %p72 = scmp.eq.s32.totalorder %s15, 1
    %p73 = por %p71, %p72
    %p75 = scmp.ne.s32.totalorder %s60, %s74
    %p76 = scmp.eq.s32.totalorder %s15, 0
    %p77 = por %p75, %p76
    %s79 = sadd.s32 %s78, 1
    %p82 = scmp.eq.s32.totalorder %s9, 1
    %p83 = scmp.ne.s32.totalorder %s78, %s80
    %p84 = scmp.eq.s32.totalorder %s9, 0
    %p85 = por %p83, %p84
    %p86 = scmp.ne.s32.totalorder %s78, %s80
    %p87 = scmp.eq.s32.totalorder %s14, 1
    %p88 = por %p86, %p87
    %p89 = scmp.ne.s32.totalorder %s80, %s81
    %p90 = scmp.eq.s32.totalorder %s14, 0
    %p91 = por %p89, %p90
    %p92 = scmp.ne.s32.totalorder %s80, %s81
    %p93 = scmp.eq.s32.totalorder %s15, 1
    %p94 = por %p92, %p93
    %p96 = scmp.ne.s32.totalorder %s81, %s95
    %p97 = scmp.eq.s32.totalorder %s15, 0
    %p98 = por %p96, %p97
    %s99 = ssub.s32 %s16, %s28
    %s100 = ssub.s32 %s17, %s24
    %s101 = sor.u32 %s99, %s100
    %p102 = scmp.eq.s32.totalorder %s101, 0
    %s104 = sadd.s32 %s103, 1
    %s105 = scalar_select %p102, %s103, %s104
    %p108 = pneg %p102
    %p109 = scmp.eq.s32.totalorder %s9, 1
    %p110 = por %p108, %p109
    %p111 = scmp.ne.s32.totalorder %s103, %s106
    %p112 = scmp.eq.s32.totalorder %s9, 0
    %p113 = por %p111, %p112
    %p114 = scmp.ne.s32.totalorder %s103, %s106
    %p115 = scmp.eq.s32.totalorder %s14, 1
    %p116 = por %p114, %p115
    %p117 = scmp.ne.s32.totalorder %s106, %s107
    %p118 = scmp.eq.s32.totalorder %s14, 0
    %p119 = por %p117, %p118
    %p120 = scmp.ne.s32.totalorder %s106, %s107
    %p121 = scmp.eq.s32.totalorder %s15, 1
    %p122 = por %p120, %p121
    %p124 = scmp.ne.s32.totalorder %s107, %s123
    %p125 = scmp.eq.s32.totalorder %s15, 0
    %p126 = por %p124, %p125
    %p127 = scmp.le.s32.totalorder 1, %s9
    %p128 = scmp.lt.s32.totalorder %s9, 3
    %p129 = pnand %p127, %p128
    %p130 = pneg %p129
    // Predicated region
    $region9: #{residual_block_with_switchnorm.6} parent=5 // pred_check
      _
    $region10: #{residual_block_with_switchnorm.6} parent=5 // pred_check_branch
      %132 = sbr.rel (%p129) target = $region12
    $region11: #{residual_block_with_switchnorm.6} parent=5 // pred_region
      %s133 = ssub.s32 %s9, 1
      // Predicated region
      $region13: #{residual_block_with_switchnorm.6} parent=11 // pred_check
        %p134 = pneg %p70
      $region14: #{residual_block_with_switchnorm.6} parent=11 // pred_check_branch
        %136 = sbr.rel (%p134) target = $region16
      $region15: #{residual_block_with_switchnorm.6} parent=11 // pred_region
        _
      $region16: #{residual_block_with_switchnorm.6} parent=11 // pred_fallthru
        _
      // Predicated region
      $region17: #{residual_block_with_switchnorm.6} parent=11 // pred_check
        %p137 = pneg %p91
      $region18: #{residual_block_with_switchnorm.6} parent=11 // pred_check_branch
        %139 = sbr.rel (%p137) target = $region20
      $region19: #{residual_block_with_switchnorm.6} parent=11 // pred_region
        _
      $region20: #{residual_block_with_switchnorm.6} parent=11 // pred_fallthru
        _
    $region12: #{residual_block_with_switchnorm.6} parent=5 // pred_fallthru
      _
    %p140 = scmp.lt.s32.totalorder %s9, 2
    // Predicated region
    $region21: #{residual_block_with_switchnorm.6} parent=5 // pred_check
      %p141 = pneg %p140
    $region22: #{residual_block_with_switchnorm.6} parent=5 // pred_check_branch
      %143 = sbr.rel (%p141) target = $region24
    $region23: #{residual_block_with_switchnorm.6} parent=5 // pred_region
      // Predicated region
      $region25: #{residual_block_with_switchnorm.6} parent=23 // pred_check
        %p144 = pneg %p43
      $region26: #{residual_block_with_switchnorm.6} parent=23 // pred_check_branch
        %146 = sbr.rel (%p144) target = $region28
      $region27: #{residual_block_with_switchnorm.6} parent=23 // pred_region
        %p147 = scmp.lt.s32.totalorder %s16, 1
        %s148 = scalar_select %p147, %s16, 1
        %p149 = scmp.lt.s32.totalorder %s17, 0
        %s150 = scalar_select %p149, %s17, 0
        %s151 = sadd.s32 %s150, %s148
        %s152 = smul.addr %s151, 8
        %s153 = scalar_lea.vmem %s0, %s152
      $region28: #{residual_block_with_switchnorm.6} parent=23 // pred_fallthru
        _
    $region24: #{residual_block_with_switchnorm.6} parent=5 // pred_fallthru
      _
    %p154 = scmp.le.s32.totalorder 1, %s9
    %p155 = scmp.lt.s32.totalorder %s9, 3
    %p156 = pnand %p154, %p155
    %p157 = pneg %p156
    // Predicated region
    $region29: #{residual_block_with_switchnorm.6} parent=5 // pred_check
      _
    $region30: #{residual_block_with_switchnorm.6} parent=5 // pred_check_branch
      %159 = sbr.rel (%p156) target = $region32
    $region31: #{residual_block_with_switchnorm.6} parent=5 // pred_region
      %s160 = ssub.s32 %s9, 1
      %p161 = scmp.lt.s32.totalorder %s18, 1
      %s162 = scalar_select %p161, %s18, 1
      %p163 = scmp.lt.s32.totalorder %s19, 0
      %s164 = scalar_select %p163, %s19, 0
      %s165 = sadd.s32 %s164, %s162
      %s166 = smul.addr %s165, 8
      %s167 = scalar_lea.vmem %s0, %s166
      %p168 = pneg %p49
      %p169 = pneg %p46
      %p170 = pneg %p70
      %p171 = pneg %p67
      %p172 = pneg %p91
      %p173 = pneg %p88
      %p174 = pneg %p119
      %p175 = pneg %p116
      %p176 = scmp.lt.s32.totalorder %s18, 1
      %s177 = scalar_select %p176, %s18, 1
      %p178 = scmp.lt.s32.totalorder %s19, 0
      %s179 = scalar_select %p178, %s19, 0
      %s180 = smul.addr %s177, 2
      %s181 = sadd.s32 %s179, %s180
      %s182 = smul.addr %s181, 8
      %s183 = scalar_lea.vmem %s3, %s182
      %p184 = scmp.lt.s32.totalorder %s18, 1
      %s185 = scalar_select %p184, %s18, 1
      %p186 = scmp.lt.s32.totalorder %s19, 0
      %s187 = scalar_select %p186, %s19, 0
      %s188 = sadd.s32 %s187, %s185
      %s189 = smul.addr %s188, 8
      %s190 = scalar_lea.vmem %s0, %s189
      %p191 = scmp.lt.s32.totalorder %s18, 1
      %s192 = scalar_select %p191, %s18, 1
      %p193 = scmp.lt.s32.totalorder %s19, 0
      %s194 = scalar_select %p193, %s19, 0
      %s195 = smul.addr %s192, 2
      %s196 = sadd.s32 %s194, %s195
      %s197 = smul.addr %s196, 8
      %s198 = scalar_lea.vmem %s3, %s197
      %v199 = vld [vmem:[%s1] sm:$0xff]
      %v200 = vld [vmem:[%s1 + $0x8] sm:$0xff]
      %v201 = vld [vmem:[%s190] sm:$0xff]
      %v202 = vld [vmem:[%s2] sm:$0xff]
      %v203 = vld [vmem:[%s2 + $0x8] sm:$0xff]
      %205 = vset.pattern.permute.xlu0 0
      %206 = vperm.xlu0 %205, %v202
      %v207 = vpop.permute.xlu0 %206
      %210 = vset.pattern.permute.xlu0 0
      %211 = vperm.xlu0 %210, %v203
      %v212 = vpop.permute.xlu0 %211
      %vm214 = vcmask 64512
      %v216 = vsel %vm214, %v199, 0
      %v219 = vsel %vm214, %v200, 0
      %221 = vmatprep.subr.mxu0 0.0
      %222 = vmatpush1.msra.mxu0 %v201
      %223 = vmatprep.subr.mxu0 0.0
      %224 = vmatpush1.msra.mxu0 0.0
      %225 = vmatprep.subr.mxu0 0.0
      %226 = vmatpush1.msra.mxu0 0.0
      %227 = vmatprep.subr.mxu0 0.0
      %228 = vmatpush1.msra.mxu0 0.0
      %229 = vmatprep.subr.mxu0 0.0
      %230 = vmatpush1.msra.mxu0 0.0
      %231 = vmatprep.subr.mxu0 0.0
      %232 = vmatpush1.msra.mxu0 0.0
      %233 = vmatprep.subr.mxu0 0.0
      %234 = vmatpush1.msra.mxu0 0.0
      %235 = vmatprep.subr.mxu0 0.0
      %236 = vmatpush1.msra.mxu0 0.0
      %237 = vmatprep.subr.mxu0 0.0
      %238 = vmatpush1.msra.mxu0 0.0
      %239 = vmatprep.subr.mxu0 0.0
      %240 = vmatpush1.msra.mxu0 0.0
      %241 = vmatprep.subr.mxu0 0.0
      %242 = vmatpush1.msra.mxu0 0.0
      %243 = vmatprep.subr.mxu0 0.0
      %244 = vmatpush1.msra.mxu0 0.0
      %245 = vmatprep.subr.mxu0 0.0
      %246 = vmatpush1.msra.mxu0 0.0
      %247 = vmatprep.subr.mxu0 0.0
      %248 = vmatpush1.msra.mxu0 0.0
      %249 = vmatprep.subr.mxu0 0.0
      %250 = vmatpush1.msra.mxu0 0.0
      %251 = vmatprep.subr.mxu0 0.0
      %252 = vmatpush1.msra.mxu0 0.0
      %253 = vmatprep.subr.mxu0 0.0
      %254 = vmatpush1.msra.mxu0 0.0
      %255 = vmatprep.subr.mxu0 0.0
      %256 = vmatpush1.msra.mxu0 0.0
      %257 = vmatprep.subr.mxu0 0.0
      %258 = vmatpush1.msra.mxu0 0.0
      %259 = vmatprep.subr.mxu0 0.0
      %260 = vmatpush1.msra.mxu0 0.0
      %261 = vmatprep.subr.mxu0 0.0
      %262 = vmatpush1.msra.mxu0 0.0
      %263 = vmatprep.subr.mxu0 0.0
      %264 = vmatpush1.msra.mxu0 0.0
      %265 = vmatprep.subr.mxu0 0.0
      %266 = vmatpush1.msra.mxu0 0.0
      %267 = vmatprep.subr.mxu0 0.0
      %268 = vmatpush1.msra.mxu0 0.0
      %269 = vmatprep.subr.mxu0 0.0
      %270 = vmatpush1.msra.mxu0 0.0
      %271 = vmatprep.subr.mxu0 0.0
      %272 = vmatpush1.msra.mxu0 0.0
      %273 = vmatprep.subr.mxu0 0.0
      %274 = vmatpush1.msra.mxu0 0.0
      %275 = vmatprep.subr.mxu0 0.0
      %276 = vmatpush1.msra.mxu0 0.0
      %277 = vmatprep.subr.mxu0 0.0
      %278 = vmatpush1.msra.mxu0 0.0
      %279 = vmatprep.subr.mxu0 0.0
      %280 = vmatpush1.msra.mxu0 0.0
      %281 = vmatprep.subr.mxu0 0.0
      %282 = vmatpush1.msra.mxu0 0.0
      %283 = vmatprep.subr.mxu0 0.0
      %284 = vmatpush1.msra.mxu0 0.0
      %285 = vmatprep.mubr.f32.mxu0 0.0
      %286 = vmatmul.mubr.f32.gmra.mrb[0].mxu0 %v216
      %v287 = vpop.f32.mrb[0].mxu0
      %v288 = vadd.f32 %v207, %v287
      %v289 = vpop.f32.mrb[0].mxu0
      %290 = vmatprep.mubr.f32.mxu0 0.0
      %291 = vmatmul.mubr.f32.gmra.mrb[0].mxu0 %v219
      %v292 = vpop.f32.mrb[0].mxu0
      %v293 = vadd.f32 %v212, %v292
      %v294 = vpop.f32.mrb[0].mxu0
      %295 = vdwg.mxu0
      %vm296 = vcmp.gt.f32.partialorder %v288, 0.0
      %vm297 = vcmp.gt.f32.partialorder %v293, 0.0
      %v298 = vmul.f32 %v288, 0.01
      %v299 = vmul.f32 %v293, 0.01
      %v300 = vsel %vm296, %v288, %v298
      %v301 = vsel %vm297, %v293, %v299
      %302 = vst [vmem:[%s198] sm:$0xff] %v300
      %303 = vst [vmem:[%s198 + $0x8] sm:$0xff] %v301
      %p304 = scmp.lt.s32.totalorder %s18, 1
      %s305 = scalar_select %p304, %s18, 1
      %p306 = scmp.lt.s32.totalorder %s19, 0
      %s307 = scalar_select %p306, %s19, 0
      %s308 = smul.addr %s305, 2
      %s309 = sadd.s32 %s307, %s308
      %s310 = smul.addr %s309, 8
      %s311 = scalar_lea.vmem %s3, %s310
      // Predicated region
      $region33: #{residual_block_with_switchnorm.6} parent=31 // pred_check
        %p312 = pneg %p116
      $region34: #{residual_block_with_switchnorm.6} parent=31 // pred_check_branch
        %314 = sbr.rel (%p312) target = $region36
      $region35: #{residual_block_with_switchnorm.6} parent=31 // pred_region
        _
      $region36: #{residual_block_with_switchnorm.6} parent=31 // pred_fallthru
        _
    $region32: #{residual_block_with_switchnorm.6} parent=5 // pred_fallthru
      _
    %p315 = scmp.le.s32.totalorder 2, %s9
    // Predicated region
    $region37: #{residual_block_with_switchnorm.6} parent=5 // pred_check
      %p316 = pneg %p315
    $region38: #{residual_block_with_switchnorm.6} parent=5 // pred_check_branch
      %318 = sbr.rel (%p316) target = $region40
    $region39: #{residual_block_with_switchnorm.6} parent=5 // pred_region
      %s319 = ssub.s32 %s9, 2
      // Predicated region
      $region41: #{residual_block_with_switchnorm.6} parent=39 // pred_check
        %p320 = pneg %p122
      $region42: #{residual_block_with_switchnorm.6} parent=39 // pred_check_branch
        %322 = sbr.rel (%p320) target = $region44
      $region43: #{residual_block_with_switchnorm.6} parent=39 // pred_region
        %p323 = scmp.lt.s32.totalorder %s20, 1
        %s324 = scalar_select %p323, %s20, 1
        %p325 = scmp.lt.s32.totalorder %s21, 0
        %s326 = scalar_select %p325, %s21, 0
        %s327 = smul.addr %s324, 2
        %s328 = sadd.s32 %s326, %s327
        %s329 = smul.addr %s328, 8
        %s330 = scalar_lea.vmem %s3, %s329
      $region44: #{residual_block_with_switchnorm.6} parent=39 // pred_fallthru
        _
    $region40: #{residual_block_with_switchnorm.6} parent=5 // pred_fallthru
      _
  $region6: #{residual_block_with_switchnorm.6} parent=0 // loop_footer
    %s13 = sadd.s32 1, %s9
  $region7: #{residual_block_with_switchnorm.6} parent=0 // loop_footer_branch
    %8 = sbr.rel target = $region3
  $region8: #{residual_block_with_switchnorm.6} parent=0 // loop_exit
    _

// kernel: residual_block_with_switchnorm.9
$region0: #{residual_block_with_switchnorm.9}
  #allocation0 [shape = 'u32[]', space=smem, size = 0x4, offset = 0x4, fixed_abs, tag = 'smem constant byte address 0x4 - core index']
  #allocation1 [shape = 'u32[144,128]{1,0:T(1,128)}', space=vmem, size = 0x12000, scoped, tag = 'internal scratch']
  %s0 = inlined_call_operand.vmem [shape: f32[2,8,128], index: 0, kind: input, shape index: {}]
  %s1 = inlined_call_operand.vmem [shape: f32[2,8,1], index: 1, kind: input, shape index: {}]
  %s2 = inlined_call_operand.vmem [shape: f32[2,8,1], index: 2, kind: input, shape index: {}]
  %s3 = inlined_call_operand.vmem [shape: f32[16,8], index: 3, kind: input, shape index: {}]
  %s4 = inlined_call_operand.vmem [shape: f32[16,1], index: 4, kind: input, shape index: {}]
  %s5 = inlined_call_operand.vmem [shape: f32[2,16,128], index: 5, kind: input, shape index: {}]
  %s6 = inlined_call_operand.vmem [shape: f32[2,16,128], index: 6, kind: output, shape index: {}]
  %s7 = sld [smem:[#allocation0]]
  $region57: #{residual_block_with_switchnorm.9} parent=0
    _
  %s9 = ssub.s32 1, %s7
  %s10 = scalar_select 0, %s9, %s7
  loop: start=0, step=1, limit=4
  $region2: #{residual_block_with_switchnorm.9} parent=0 // loop_pre_header
    _
  $region3: #{residual_block_with_switchnorm.9} parent=0 // loop_header
    %s12 = sphi 0, %s16
    %p13 = scmp.ge.s32.totalorder %s12, 4
    %s19 = sphi 0, %s31
    %s20 = sphi 0, %s27
    %s21 = sphi 0, %s19
    %s22 = sphi 0, %s20
    %s23 = sphi 0, %s21
    %s24 = sphi 0, %s22
    %s36 = sphi 0, %s38
    %s39 = sphi 0, %s36
    %s40 = sphi 0, %s39
    %s56 = sphi 0, %s40
    %s62 = sphi 0, %s64
    %s65 = sphi 0, %s62
    %s66 = sphi 0, %s65
    %s82 = sphi 0, %s66
    %s88 = sphi 0, %s90
    %s91 = sphi 0, %s88
    %s92 = sphi 0, %s91
    %s108 = sphi 0, %s92
    %s112 = sphi 0, %s112
    %s114 = sphi 0, %s112
    %s115 = sphi 0, %s114
    %s129 = sphi 0, %s115
    %s133 = sphi 0, %s133
    %s135 = sphi 0, %s133
    %s136 = sphi 0, %s135
    %s150 = sphi 0, %s136
    %s158 = sphi 0, %s160
    %s161 = sphi 0, %s158
    %s162 = sphi 0, %s161
    %s178 = sphi 0, %s162
    %s186 = sphi 0, %s188
    %s189 = sphi 0, %s186
    %s190 = sphi 0, %s189
    %s206 = sphi 0, %s190
  $region4: #{residual_block_with_switchnorm.9} parent=0 // loop_header_branch
    %15 = sbr.rel (%p13) target = $region8
  $region5: #{residual_block_with_switchnorm.9} parent=0 // loop_body
    %s17 = ssub.s32 %s12, 1
    %s18 = ssub.s32 %s12, 2
    %s25 = sadd.s32 1, %s20
    %p26 = scmp.ge.s32.totalorder %s25, 1
    %s27 = scalar_select %p26, 0, %s25
    %s28 = sadd.s32 1, %s19
    %s29 = scalar_select %p26, %s28, %s19
    %p30 = scmp.ge.s32.totalorder %s29, 2
    %s31 = scalar_select %p30, 0, %s29
    %s32 = ssub.s32 %s19, %s31
    %s33 = ssub.s32 %s20, %s27
    %s34 = sor.u32 %s32, %s33
    %p35 = scmp.eq.s32.totalorder %s34, 0
    %s37 = sadd.s32 %s36, 1
    %s38 = scalar_select %p35, %s36, %s37
    %p41 = pneg %p35
    %p42 = scmp.eq.s32.totalorder %s12, 1
    %p43 = por %p41, %p42
    %p44 = scmp.ne.s32.totalorder %s36, %s39
    %p45 = scmp.eq.s32.totalorder %s12, 0
    %p46 = por %p44, %p45
    %p47 = scmp.ne.s32.totalorder %s36, %s39
    %p48 = scmp.eq.s32.totalorder %s17, 1
    %p49 = por %p47, %p48
    %p50 = scmp.ne.s32.totalorder %s39, %s40
    %p51 = scmp.eq.s32.totalorder %s17, 0
    %p52 = por %p50, %p51
    %p53 = scmp.ne.s32.totalorder %s39, %s40
    %p54 = scmp.eq.s32.totalorder %s18, 1
    %p55 = por %p53, %p54
    %p57 = scmp.ne.s32.totalorder %s40, %s56
    %p58 = scmp.eq.s32.totalorder %s18, 0
    %p59 = por %p57, %p58
    %s60 = ssub.s32 %s19, %s31
    %p61 = scmp.eq.s32.totalorder %s60, 0
    %s63 = sadd.s32 %s62, 1
    %s64 = scalar_select %p61, %s62, %s63
    %p67 = pneg %p61
    %p68 = scmp.eq.s32.totalorder %s12, 1
    %p69 = por %p67, %p68
    %p70 = scmp.ne.s32.totalorder %s62, %s65
    %p71 = scmp.eq.s32.totalorder %s12, 0
    %p72 = por %p70, %p71
    %p73 = scmp.ne.s32.totalorder %s62, %s65
    %p74 = scmp.eq.s32.totalorder %s17, 1
    %p75 = por %p73, %p74
    %p76 = scmp.ne.s32.totalorder %s65, %s66
    %p77 = scmp.eq.s32.totalorder %s17, 0
    %p78 = por %p76, %p77
    %p79 = scmp.ne.s32.totalorder %s65, %s66
    %p80 = scmp.eq.s32.totalorder %s18, 1
    %p81 = por %p79, %p80
    %p83 = scmp.ne.s32.totalorder %s66, %s82
    %p84 = scmp.eq.s32.totalorder %s18, 0
    %p85 = por %p83, %p84
    %s86 = ssub.s32 %s19, %s31
    %p87 = scmp.eq.s32.totalorder %s86, 0
    %s89 = sadd.s32 %s88, 1
    %s90 = scalar_select %p87, %s88, %s89
    %p93 = pneg %p87
    %p94 = scmp.eq.s32.totalorder %s12, 1
    %p95 = por %p93, %p94
    %p96 = scmp.ne.s32.totalorder %s88, %s91
    %p97 = scmp.eq.s32.totalorder %s12, 0
    %p98 = por %p96, %p97
    %p99 = scmp.ne.s32.totalorder %s88, %s91
    %p100 = scmp.eq.s32.totalorder %s17, 1
    %p101 = por %p99, %p100
    %p102 = scmp.ne.s32.totalorder %s91, %s92
    %p103 = scmp.eq.s32.totalorder %s17, 0
    %p104 = por %p102, %p103
    %p105 = scmp.ne.s32.totalorder %s91, %s92
    %p106 = scmp.eq.s32.totalorder %s18, 1
    %p107 = por %p105, %p106
    %p109 = scmp.ne.s32.totalorder %s92, %s108
    %p110 = scmp.eq.s32.totalorder %s18, 0
    %p111 = por %p109, %p110
    %s113 = sadd.s32 %s112, 1
    %p116 = scmp.eq.s32.totalorder %s12, 1
    %p117 = scmp.ne.s32.totalorder %s112, %s114
    %p118 = scmp.eq.s32.totalorder %s12, 0
    %p119 = por %p117, %p118
    %p120 = scmp.ne.s32.totalorder %s112, %s114
    %p121 = scmp.eq.s32.totalorder %s17, 1
    %p122 = por %p120, %p121
    %p123 = scmp.ne.s32.totalorder %s114, %s115
    %p124 = scmp.eq.s32.totalorder %s17, 0
    %p125 = por %p123, %p124
    %p126 = scmp.ne.s32.totalorder %s114, %s115
    %p127 = scmp.eq.s32.totalorder %s18, 1
    %p128 = por %p126, %p127
    %p130 = scmp.ne.s32.totalorder %s115, %s129
    %p131 = scmp.eq.s32.totalorder %s18, 0
    %p132 = por %p130, %p131
    %s134 = sadd.s32 %s133, 1
    %p137 = scmp.eq.s32.totalorder %s12, 1
    %p138 = scmp.ne.s32.totalorder %s133, %s135
    %p139 = scmp.eq.s32.totalorder %s12, 0
    %p140 = por %p138, %p139
    %p141 = scmp.ne.s32.totalorder %s133, %s135
    %p142 = scmp.eq.s32.totalorder %s17, 1
    %p143 = por %p141, %p142
    %p144 = scmp.ne.s32.totalorder %s135, %s136
    %p145 = scmp.eq.s32.totalorder %s17, 0
    %p146 = por %p144, %p145
    %p147 = scmp.ne.s32.totalorder %s135, %s136
    %p148 = scmp.eq.s32.totalorder %s18, 1
    %p149 = por %p147, %p148
    %p151 = scmp.ne.s32.totalorder %s136, %s150
    %p152 = scmp.eq.s32.totalorder %s18, 0
    %p153 = por %p151, %p152
    %s154 = ssub.s32 %s19, %s31
    %s155 = ssub.s32 %s20, %s27
    %s156 = sor.u32 %s154, %s155
    %p157 = scmp.eq.s32.totalorder %s156, 0
    %s159 = sadd.s32 %s158, 1
    %s160 = scalar_select %p157, %s158, %s159
    %p163 = pneg %p157
    %p164 = scmp.eq.s32.totalorder %s12, 1
    %p165 = por %p163, %p164
    %p166 = scmp.ne.s32.totalorder %s158, %s161
    %p167 = scmp.eq.s32.totalorder %s12, 0
    %p168 = por %p166, %p167
    %p169 = scmp.ne.s32.totalorder %s158, %s161
    %p170 = scmp.eq.s32.totalorder %s17, 1
    %p171 = por %p169, %p170
    %p172 = scmp.ne.s32.totalorder %s161, %s162
    %p173 = scmp.eq.s32.totalorder %s17, 0
    %p174 = por %p172, %p173
    %p175 = scmp.ne.s32.totalorder %s161, %s162
    %p176 = scmp.eq.s32.totalorder %s18, 1
    %p177 = por %p175, %p176
    %p179 = scmp.ne.s32.totalorder %s162, %s178
    %p180 = scmp.eq.s32.totalorder %s18, 0
    %p181 = por %p179, %p180
    %s182 = ssub.s32 %s19, %s31
    %s183 = ssub.s32 %s20, %s27
    %s184 = sor.u32 %s182, %s183
    %p185 = scmp.eq.s32.totalorder %s184, 0
    %s187 = sadd.s32 %s186, 1
    %s188 = scalar_select %p185, %s186, %s187
    %p191 = pneg %p185
    %p192 = scmp.eq.s32.totalorder %s12, 1
    %p193 = por %p191, %p192
    %p194 = scmp.ne.s32.totalorder %s186, %s189
    %p195 = scmp.eq.s32.totalorder %s12, 0
    %p196 = por %p194, %p195
    %p197 = scmp.ne.s32.totalorder %s186, %s189
    %p198 = scmp.eq.s32.totalorder %s17, 1
    %p199 = por %p197, %p198
    %p200 = scmp.ne.s32.totalorder %s189, %s190
    %p201 = scmp.eq.s32.totalorder %s17, 0
    %p202 = por %p200, %p201
    %p203 = scmp.ne.s32.totalorder %s189, %s190
    %p204 = scmp.eq.s32.totalorder %s18, 1
    %p205 = por %p203, %p204
    %p207 = scmp.ne.s32.totalorder %s190, %s206
    %p208 = scmp.eq.s32.totalorder %s18, 0
    %p209 = por %p207, %p208
    %p210 = scmp.le.s32.totalorder 1, %s12
    %p211 = scmp.lt.s32.totalorder %s12, 3
    %p212 = pnand %p210, %p211
    %p213 = pneg %p212
    // Predicated region
    $region9: #{residual_block_with_switchnorm.9} parent=5 // pred_check
      _
    $region10: #{residual_block_with_switchnorm.9} parent=5 // pred_check_branch
      %215 = sbr.rel (%p212) target = $region12
    $region11: #{residual_block_with_switchnorm.9} parent=5 // pred_region
      %s216 = ssub.s32 %s12, 1
      // Predicated region
      $region13: #{residual_block_with_switchnorm.9} parent=11 // pred_check
        %p217 = pneg %p125
      $region14: #{residual_block_with_switchnorm.9} parent=11 // pred_check_branch
        %219 = sbr.rel (%p217) target = $region16
      $region15: #{residual_block_with_switchnorm.9} parent=11 // pred_region
        _
      $region16: #{residual_block_with_switchnorm.9} parent=11 // pred_fallthru
        _
      // Predicated region
      $region17: #{residual_block_with_switchnorm.9} parent=11 // pred_check
        %p220 = pneg %p146
      $region18: #{residual_block_with_switchnorm.9} parent=11 // pred_check_branch
        %222 = sbr.rel (%p220) target = $region20
      $region19: #{residual_block_with_switchnorm.9} parent=11 // pred_region
        _
      $region20: #{residual_block_with_switchnorm.9} parent=11 // pred_fallthru
        _
    $region12: #{residual_block_with_switchnorm.9} parent=5 // pred_fallthru
      _
    %p223 = scmp.lt.s32.totalorder %s12, 2
    // Predicated region
    $region21: #{residual_block_with_switchnorm.9} parent=5 // pred_check
      %p224 = pneg %p223
    $region22: #{residual_block_with_switchnorm.9} parent=5 // pred_check_branch
      %226 = sbr.rel (%p224) target = $region24
    $region23: #{residual_block_with_switchnorm.9} parent=5 // pred_region
      // Predicated region
      $region25: #{residual_block_with_switchnorm.9} parent=23 // pred_check
        %p227 = pneg %p46
      $region26: #{residual_block_with_switchnorm.9} parent=23 // pred_check_branch
        %229 = sbr.rel (%p227) target = $region28
      $region27: #{residual_block_with_switchnorm.9} parent=23 // pred_region
        %p230 = scmp.lt.s32.totalorder %s19, 1
        %s231 = scalar_select %p230, %s19, 1
        %p232 = scmp.lt.s32.totalorder %s20, 0
        %s233 = scalar_select %p232, %s20, 0
        %s234 = sadd.s32 %s233, %s231
        %s235 = smul.addr %s234, 8
        %s236 = scalar_lea.vmem %s0, %s235
      $region28: #{residual_block_with_switchnorm.9} parent=23 // pred_fallthru
        _
      // Predicated region
      $region29: #{residual_block_with_switchnorm.9} parent=23 // pred_check
        %p237 = pneg %p72
      $region30: #{residual_block_with_switchnorm.9} parent=23 // pred_check_branch
        %239 = sbr.rel (%p237) target = $region32
      $region31: #{residual_block_with_switchnorm.9} parent=23 // pred_region
        %p240 = scmp.lt.s32.totalorder %s19, 1
        %s241 = scalar_select %p240, %s19, 1
        %s242 = smul.addr %s241, 8
        %s243 = scalar_lea.vmem %s1, %s242
      $region32: #{residual_block_with_switchnorm.9} parent=23 // pred_fallthru
        _
      // Predicated region
      $region33: #{residual_block_with_switchnorm.9} parent=23 // pred_check
        %p244 = pneg %p98
      $region34: #{residual_block_with_switchnorm.9} parent=23 // pred_check_branch
        %246 = sbr.rel (%p244) target = $region36
      $region35: #{residual_block_with_switchnorm.9} parent=23 // pred_region
        %p247 = scmp.lt.s32.totalorder %s19, 1
        %s248 = scalar_select %p247, %s19, 1
        %s249 = smul.addr %s248, 8
        %s250 = scalar_lea.vmem %s2, %s249
      $region36: #{residual_block_with_switchnorm.9} parent=23 // pred_fallthru
        _
      // Predicated region
      $region37: #{residual_block_with_switchnorm.9} parent=23 // pred_check
        %p251 = pneg %p168
      $region38: #{residual_block_with_switchnorm.9} parent=23 // pred_check_branch
        %253 = sbr.rel (%p251) target = $region40
      $region39: #{residual_block_with_switchnorm.9} parent=23 // pred_region
        %p254 = scmp.lt.s32.totalorder %s19, 1
        %s255 = scalar_select %p254, %s19, 1
        %p256 = scmp.lt.s32.totalorder %s20, 0
        %s257 = scalar_select %p256, %s20, 0
        %s258 = smul.addr %s255, 2
        %s259 = sadd.s32 %s257, %s258
        %s260 = smul.addr %s259, 8
        %s261 = scalar_lea.vmem %s5, %s260
      $region40: #{residual_block_with_switchnorm.9} parent=23 // pred_fallthru
        _
    $region24: #{residual_block_with_switchnorm.9} parent=5 // pred_fallthru
      _
    %p262 = scmp.le.s32.totalorder 1, %s12
    %p263 = scmp.lt.s32.totalorder %s12, 3
    %p264 = pnand %p262, %p263
    %p265 = pneg %p264
    // Predicated region
    $region41: #{residual_block_with_switchnorm.9} parent=5 // pred_check
      _
    $region42: #{residual_block_with_switchnorm.9} parent=5 // pred_check_branch
      %267 = sbr.rel (%p264) target = $region44
    $region43: #{residual_block_with_switchnorm.9} parent=5 // pred_region
      %s268 = ssub.s32 %s12, 1
      %p269 = scmp.lt.s32.totalorder %s21, 1
      %s270 = scalar_select %p269, %s21, 1
      %p271 = scmp.lt.s32.totalorder %s22, 0
      %s272 = scalar_select %p271, %s22, 0
      %s273 = sadd.s32 %s272, %s270
      %s274 = smul.addr %s273, 8
      %s275 = scalar_lea.vmem %s0, %s274
      %p276 = pneg %p52
      %p277 = pneg %p49
      %p278 = scmp.lt.s32.totalorder %s21, 1
      %s279 = scalar_select %p278, %s21, 1
      %s280 = smul.addr %s279, 8
      %s281 = scalar_lea.vmem %s1, %s280
      %p282 = pneg %p78
      %p283 = pneg %p75
      %p284 = scmp.lt.s32.totalorder %s21, 1
      %s285 = scalar_select %p284, %s21, 1
      %s286 = smul.addr %s285, 8
      %s287 = scalar_lea.vmem %s2, %s286
      %p288 = pneg %p104
      %p289 = pneg %p101
      %p290 = pneg %p125
      %p291 = pneg %p122
      %p292 = pneg %p146
      %p293 = pneg %p143
      %p294 = scmp.lt.s32.totalorder %s21, 1
      %s295 = scalar_select %p294, %s21, 1
      %p296 = scmp.lt.s32.totalorder %s22, 0
      %s297 = scalar_select %p296, %s22, 0
      %s298 = smul.addr %s295, 2
      %s299 = sadd.s32 %s297, %s298
      %s300 = smul.addr %s299, 8
      %s301 = scalar_lea.vmem %s5, %s300
      %p302 = pneg %p174
      %p303 = pneg %p171
      %p304 = pneg %p202
      %p305 = pneg %p199
      %p306 = scmp.lt.s32.totalorder %s21, 1
      %s307 = scalar_select %p306, %s21, 1
      %p308 = scmp.lt.s32.totalorder %s22, 0
      %s309 = scalar_select %p308, %s22, 0
      %s310 = smul.addr %s307, 2
      %s311 = sadd.s32 %s309, %s310
      %s312 = smul.addr %s311, 8
      %s313 = scalar_lea.vmem %s6, %s312
      %p314 = scmp.lt.s32.totalorder %s21, 1
      %s315 = scalar_select %p314, %s21, 1
      %p316 = scmp.lt.s32.totalorder %s22, 0
      %s317 = scalar_select %p316, %s22, 0
      %s318 = sadd.s32 %s317, %s315
      %s319 = smul.addr %s318, 8
      %s320 = scalar_lea.vmem %s0, %s319
      %p321 = scmp.lt.s32.totalorder %s21, 1
      %s322 = scalar_select %p321, %s21, 1
      %s323 = smul.addr %s322, 8
      %s324 = scalar_lea.vmem %s1, %s323
      %p325 = scmp.lt.s32.totalorder %s21, 1
      %s326 = scalar_select %p325, %s21, 1
      %s327 = smul.addr %s326, 8
      %s328 = scalar_lea.vmem %s2, %s327
      %p329 = scmp.lt.s32.totalorder %s21, 1
      %s330 = scalar_select %p329, %s21, 1
      %p331 = scmp.lt.s32.totalorder %s22, 0
      %s332 = scalar_select %p331, %s22, 0
      %s333 = smul.addr %s330, 2
      %s334 = sadd.s32 %s332, %s333
      %s335 = smul.addr %s334, 8
      %s336 = scalar_lea.vmem %s5, %s335
      %p337 = scmp.lt.s32.totalorder %s21, 1
      %s338 = scalar_select %p337, %s21, 1
      %p339 = scmp.lt.s32.totalorder %s22, 0
      %s340 = scalar_select %p339, %s22, 0
      %s341 = smul.addr %s338, 2
      %s342 = sadd.s32 %s340, %s341
      %s343 = smul.addr %s342, 8
      %s344 = scalar_lea.vmem %s6, %s343
      %v345 = vld [vmem:[%s320] sm:$0xff]
      %v346 = vld [vmem:[%s324] sm:$0xff]
      %348 = vset.pattern.permute.xlu0 0
      %349 = vperm.xlu0 %348, %v346
      %v350 = vpop.permute.xlu0 %349
      %v352 = vmul.f32 %v345, %v350
      %v353 = vld [vmem:[%s328] sm:$0xff]
      %355 = vset.pattern.permute.xlu0 0
      %356 = vperm.xlu0 %355, %v353
      %v357 = vpop.permute.xlu0 %356
      %v359 = vadd.f32 %v352, %v357
      %vm360 = vcmp.gt.f32.partialorder %v359, 0.0
      %v361 = vmul.f32 %v359, 0.01
      %v362 = vsel %vm360, %v359, %v361
      %v363 = vld [vmem:[%s3] sm:$0xff]
      %v364 = vld [vmem:[%s3 + $0x8] sm:$0xff]
      %v365 = vld [vmem:[%s4] sm:$0xff]
      %v366 = vld [vmem:[%s4 + $0x8] sm:$0xff]
      %368 = vset.pattern.permute.xlu0 0
      %369 = vperm.xlu0 %368, %v365
      %v370 = vpop.permute.xlu0 %369
      %373 = vset.pattern.permute.xlu0 0
      %374 = vperm.xlu0 %373, %v366
      %v375 = vpop.permute.xlu0 %374
      %vm377 = vcmask 64512
      %v379 = vsel %vm377, %v363, 0
      %v382 = vsel %vm377, %v364, 0
      %384 = vmatprep.subr.mxu0 0.0
      %385 = vmatpush1.msra.mxu0 %v362
      %386 = vmatprep.subr.mxu0 0.0
      %387 = vmatpush1.msra.mxu0 0.0
      %388 = vmatprep.subr.mxu0 0.0
      %389 = vmatpush1.msra.mxu0 0.0
      %390 = vmatprep.subr.mxu0 0.0
      %391 = vmatpush1.msra.mxu0 0.0
      %392 = vmatprep.subr.mxu0 0.0
      %393 = vmatpush1.msra.mxu0 0.0
      %394 = vmatprep.subr.mxu0 0.0
      %395 = vmatpush1.msra.mxu0 0.0
      %396 = vmatprep.subr.mxu0 0.0
      %397 = vmatpush1.msra.mxu0 0.0
      %398 = vmatprep.subr.mxu0 0.0
      %399 = vmatpush1.msra.mxu0 0.0
      %400 = vmatprep.subr.mxu0 0.0
      %401 = vmatpush1.msra.mxu0 0.0
      %402 = vmatprep.subr.mxu0 0.0
      %403 = vmatpush1.msra.mxu0 0.0
      %404 = vmatprep.subr.mxu0 0.0
      %405 = vmatpush1.msra.mxu0 0.0
      %406 = vmatprep.subr.mxu0 0.0
      %407 = vmatpush1.msra.mxu0 0.0
      %408 = vmatprep.subr.mxu0 0.0
      %409 = vmatpush1.msra.mxu0 0.0
      %410 = vmatprep.subr.mxu0 0.0
      %411 = vmatpush1.msra.mxu0 0.0
      %412 = vmatprep.subr.mxu0 0.0
      %413 = vmatpush1.msra.mxu0 0.0
      %414 = vmatprep.subr.mxu0 0.0
      %415 = vmatpush1.msra.mxu0 0.0
      %416 = vmatprep.subr.mxu0 0.0
      %417 = vmatpush1.msra.mxu0 0.0
      %418 = vmatprep.subr.mxu0 0.0
      %419 = vmatpush1.msra.mxu0 0.0
      %420 = vmatprep.subr.mxu0 0.0
      %421 = vmatpush1.msra.mxu0 0.0
      %422 = vmatprep.subr.mxu0 0.0
      %423 = vmatpush1.msra.mxu0 0.0
      %424 = vmatprep.subr.mxu0 0.0
      %425 = vmatpush1.msra.mxu0 0.0
      %426 = vmatprep.subr.mxu0 0.0
      %427 = vmatpush1.msra.mxu0 0.0
      %428 = vmatprep.subr.mxu0 0.0
      %429 = vmatpush1.msra.mxu0 0.0
      %430 = vmatprep.subr.mxu0 0.0
      %431 = vmatpush1.msra.mxu0 0.0
      %432 = vmatprep.subr.mxu0 0.0
      %433 = vmatpush1.msra.mxu0 0.0
      %434 = vmatprep.subr.mxu0 0.0
      %435 = vmatpush1.msra.mxu0 0.0
      %436 = vmatprep.subr.mxu0 0.0
      %437 = vmatpush1.msra.mxu0 0.0
      %438 = vmatprep.subr.mxu0 0.0
      %439 = vmatpush1.msra.mxu0 0.0
      %440 = vmatprep.subr.mxu0 0.0
      %441 = vmatpush1.msra.mxu0 0.0
      %442 = vmatprep.subr.mxu0 0.0
      %443 = vmatpush1.msra.mxu0 0.0
      %444 = vmatprep.subr.mxu0 0.0
      %445 = vmatpush1.msra.mxu0 0.0
      %446 = vmatprep.subr.mxu0 0.0
      %447 = vmatpush1.msra.mxu0 0.0
      %448 = vmatprep.mubr.f32.mxu0 0.0
      %449 = vmatmul.mubr.f32.gmra.mrb[0].mxu0 %v379
      %v450 = vpop.f32.mrb[0].mxu0
      %v451 = vadd.f32 %v370, %v450
      %v452 = vpop.f32.mrb[0].mxu0
      %453 = vmatprep.mubr.f32.mxu0 0.0
      %454 = vmatmul.mubr.f32.gmra.mrb[0].mxu0 %v382
      %v455 = vpop.f32.mrb[0].mxu0
      %v456 = vadd.f32 %v375, %v455
      %v457 = vpop.f32.mrb[0].mxu0
      %458 = vdwg.mxu0
      %v459 = vld [vmem:[%s336] sm:$0xff]
      %v460 = vld [vmem:[%s336 + $0x8] sm:$0xff]
      %v461 = vadd.f32 %v451, %v459
      %v462 = vadd.f32 %v456, %v460
      %463 = vst [vmem:[%s344] sm:$0xff] %v461
      %464 = vst [vmem:[%s344 + $0x8] sm:$0xff] %v462
      %p465 = scmp.lt.s32.totalorder %s21, 1
      %s466 = scalar_select %p465, %s21, 1
      %p467 = scmp.lt.s32.totalorder %s22, 0
      %s468 = scalar_select %p467, %s22, 0
      %s469 = smul.addr %s466, 2
      %s470 = sadd.s32 %s468, %s469
      %s471 = smul.addr %s470, 8
      %s472 = scalar_lea.vmem %s6, %s471
      // Predicated region
      $region45: #{residual_block_with_switchnorm.9} parent=43 // pred_check
        %p473 = pneg %p199
      $region46: #{residual_block_with_switchnorm.9} parent=43 // pred_check_branch
        %475 = sbr.rel (%p473) target = $region48
      $region47: #{residual_block_with_switchnorm.9} parent=43 // pred_region
        _
      $region48: #{residual_block_with_switchnorm.9} parent=43 // pred_fallthru
        _
    $region44: #{residual_block_with_switchnorm.9} parent=5 // pred_fallthru
      _
    %p476 = scmp.le.s32.totalorder 2, %s12
    // Predicated region
    $region49: #{residual_block_with_switchnorm.9} parent=5 // pred_check
      %p477 = pneg %p476
    $region50: #{residual_block_with_switchnorm.9} parent=5 // pred_check_branch
      %479 = sbr.rel (%p477) target = $region52
    $region51: #{residual_block_with_switchnorm.9} parent=5 // pred_region
      %s480 = ssub.s32 %s12, 2
      // Predicated region
      $region53: #{residual_block_with_switchnorm.9} parent=51 // pred_check
        %p481 = pneg %p205
      $region54: #{residual_block_with_switchnorm.9} parent=51 // pred_check_branch
        %483 = sbr.rel (%p481) target = $region56
      $region55: #{residual_block_with_switchnorm.9} parent=51 // pred_region
        %p484 = scmp.lt.s32.totalorder %s23, 1
        %s485 = scalar_select %p484, %s23, 1
        %p486 = scmp.lt.s32.totalorder %s24, 0
        %s487 = scalar_select %p486, %s24, 0
        %s488 = smul.addr %s485, 2
        %s489 = sadd.s32 %s487, %s488
        %s490 = smul.addr %s489, 8
        %s491 = scalar_lea.vmem %s6, %s490
      $region56: #{residual_block_with_switchnorm.9} parent=51 // pred_fallthru
        _
    $region52: #{residual_block_with_switchnorm.9} parent=5 // pred_fallthru
      _
  $region6: #{residual_block_with_switchnorm.9} parent=0 // loop_footer
    %s16 = sadd.s32 1, %s12
  $region7: #{residual_block_with_switchnorm.9} parent=0 // loop_footer_branch
    %11 = sbr.rel target = $region3
  $region8: #{residual_block_with_switchnorm.9} parent=0 // loop_exit
    _

</llo_original>
